<compile_context>
chip_gen: v6e
topology: v6e:2x2x1
jax: 0.10.0
libtpu: 0.0.40
codegen_flags: <defaults>
</compile_context>

<pallas_src>
import functools
import math

import jax
import jax.numpy as jnp
from jax import lax
from jax.experimental import pallas as pl
from jax.experimental.pallas import tpu as pltpu

NO_TOKEN_ID = 3919
YES_TOKEN_ID = 8505
NEG_BIG = -1000000000.0


# ----------------------------------------------------------------------------- fused kernel

def _layernorm(x, g, b):
    # x: (R, D) f32, g/b: (1, D) f32
    mu = jnp.mean(x, axis=-1, keepdims=True)
    var = jnp.mean(jnp.square(x - mu), axis=-1, keepdims=True)
    return (x - mu) * lax.rsqrt(var + 1e-5) * g + b


def fused_gpt_kernel(x_ref, bias_ref, vec_ref, qkv_w_ref, proj_w_ref, fc_w_ref, out_w_ref,
                     o_ref, *, num_layers, num_heads):
    R = x_ref.shape[1]              # stacked rows per grid step = (B/groups) * S
    D = x_ref.shape[2]
    Dh = D // num_heads
    bf = jnp.bfloat16

    x = x_ref[0]                    # (R, D)   f32 residual stream (batch on sublanes)
    bias = bias_ref[0]              # (H*R, H*R) f32 block-diagonal causal+padding bias

    for l in range(num_layers):
        vl = vec_ref[l]             # (8, 4D) f32 packed per-layer vectors
        ln1_g, ln1_b = vl[0:1, :D], vl[1:2, :D]
        ln2_g, ln2_b = vl[2:3, :D], vl[3:4, :D]
        proj_b, out_b = vl[4:5, :D], vl[5:6, :D]
        qkv_b = vl[6:7, :3 * D]
        fc_b = vl[7:8, :]

        # ---- attention sub-block -------------------------------------------------
        a = _layernorm(x, ln1_g, ln1_b)
        qkv = jnp.dot(a.astype(bf), qkv_w_ref[l],
                      preferred_element_type=jnp.float32) + qkv_b              # (R, 3D)

        # Stack heads on the sublane axis -> (H*R, Dh); 1/sqrt(Dh) already folded into W_q.
        q_s = jnp.concatenate([qkv[:, h * Dh:(h + 1) * Dh]
                               for h in range(num_heads)], axis=0)
        k_s = jnp.concatenate([qkv[:, D + h * Dh:D + (h + 1) * Dh]
                               for h in range(num_heads)], axis=0)
        v_s = jnp.concatenate([qkv[:, 2 * D + h * Dh:2 * D + (h + 1) * Dh]
                               for h in range(num_heads)], axis=0)

        s = lax.dot_general(q_s.astype(bf), k_s.astype(bf), (((1,), (1,)), ((), ())),
                            preferred_element_type=jnp.float32) + bias          # (HR, HR)
        s = s - jnp.max(s, axis=-1, keepdims=True)
        p = jnp.exp(s)
        p = p * pl.reciprocal(jnp.sum(p, axis=-1, keepdims=True), approx=True)
        pv = jnp.dot(p.astype(bf), v_s.astype(bf),
                     preferred_element_type=jnp.float32)                         # (HR, Dh)

        # Un-stack heads back onto lanes -> (R, D), then output projection.
        attn = jnp.concatenate([pv[h * R:(h + 1) * R, :]
                                for h in range(num_heads)], axis=1)
        attn = jnp.dot(attn.astype(bf), proj_w_ref[l],
                       preferred_element_type=jnp.float32) + proj_b
        x = x + attn

        # ---- MLP sub-block ---------------------------------------------------------
        m = _layernorm(x, ln2_g, ln2_b)
        m = jnp.dot(m.astype(bf), fc_w_ref[l],
                    preferred_element_type=jnp.float32) + fc_b                   # (R, 4D)
        m = jax.nn.gelu(m, approximate=True)        # GPT-2 gelu_new (tanh approximation)
        m = jnp.dot(m.astype(bf), out_w_ref[l],
                    preferred_element_type=jnp.float32) + out_b                  # (R, D)
        x = x + m

    # ---- final LN + padded 2-way head (proj_w_ref[L], lanes 0/1 real) -----------------
    vf = vec_ref[num_layers]
    h_fin = _layernorm(x, vf[0:1, :D], vf[1:2, :D])
    logits = jnp.dot(h_fin.astype(bf), proj_w_ref[num_layers],
                     preferred_element_type=jnp.float32) + vf[2:3, :D]           # (R, D)
    o_ref[0] = logits


# ----------------------------------------------------------------------------- parameters

def init_params(key, vocab=50257, d=128, l=2, num_heads=2, max_pos=64):
    # TODO(synk): GPT2Model.from_pretrained weights are not available in-script; random init.
    ks = jax.random.split(key, 20)

    def norm(k, shape, scale=0.02):
        return (scale * jax.random.normal(k, shape)).astype(jnp.float32)

    return {
        "wte": norm(ks[0], (vocab, d)),
        "wpe": norm(ks[1], (max_pos, d)),
        "ln1_g": 1.0 + norm(ks[2], (l, 1, d)),  "ln1_b": norm(ks[3], (l, 1, d)),
        "qkv_w": norm(ks[4], (l, d, 3 * d)),    "qkv_b": norm(ks[5], (l, 1, 3 * d)),
        "proj_w": norm(ks[6], (l, d, d)),       "proj_b": norm(ks[7], (l, 1, d)),
        "ln2_g": 1.0 + norm(ks[8], (l, 1, d)),  "ln2_b": norm(ks[9], (l, 1, d)),
        "fc_w": norm(ks[10], (l, d, 4 * d)),    "fc_b": norm(ks[11], (l, 1, 4 * d)),
        "out_w": norm(ks[12], (l, 4 * d, d)),   "out_b": norm(ks[13], (l, 1, d)),
        "ln_f_g": 1.0 + norm(ks[14], (1, d)),   "ln_f_b": norm(ks[15], (1, d)),
        "head_w": norm(ks[16], (d, 2)),         "head_b": norm(ks[17], (2,)),
    }


def pack_params(params, num_heads):
    """One-time (outside jit) packing of natural GPT-2 params into kernel operands."""
    L, D, _ = params["qkv_w"].shape
    scale = 1.0 / math.sqrt(D // num_heads)

    # Fold the 1/sqrt(Dh) attention scale into the Q projection weights + bias.
    qkv_w = params["qkv_w"].at[:, :, :D].multiply(scale)
    qkv_b = params["qkv_b"].at[:, :, :D].multiply(scale)

    # One lane-dense f32 slab for every small per-layer vector; final LN + head bias are
    # pseudo-layer L (rows 0..2).
    vec = jnp.zeros((L + 1, 8, 4 * D), jnp.float32)
    vec = vec.at[:L, 0, :D].set(params["ln1_g"][:, 0, :])
    vec = vec.at[:L, 1, :D].set(params["ln1_b"][:, 0, :])
    vec = vec.at[:L, 2, :D].set(params["ln2_g"][:, 0, :])
    vec = vec.at[:L, 3, :D].set(params["ln2_b"][:, 0, :])
    vec = vec.at[:L, 4, :D].set(params["proj_b"][:, 0, :])
    vec = vec.at[:L, 5, :D].set(params["out_b"][:, 0, :])
    vec = vec.at[:L, 6, :3 * D].set(qkv_b[:, 0, :])
    vec = vec.at[:L, 7, :].set(params["fc_b"][:, 0, :])
    vec = vec.at[L, 0, :D].set(params["ln_f_g"][0])
    vec = vec.at[L, 1, :D].set(params["ln_f_b"][0])
    vec = vec.at[L, 2, :2].set(params["head_b"])

    # The 2-wide paraphrase head rides along as pseudo-layer L of the (D, D) proj slab.
    head_w = jnp.zeros((1, D, D), jnp.float32).at[0, :, :2].set(params["head_w"])
    proj_head_w = jnp.concatenate([params["proj_w"], head_w], axis=0)

    return {
        "wte": params["wte"], "wpe": params["wpe"],
        "vec": vec,
        "qkv_w": qkv_w.astype(jnp.bfloat16),
        "proj_head_w": proj_head_w.astype(jnp.bfloat16),
        "fc_w": params["fc_w"].astype(jnp.bfloat16),
        "out_w": params["out_w"].astype(jnp.bfloat16),
    }


# ----------------------------------------------------------------------------- forward

def _const_spec(a):
    n = a.ndim
    return pl.BlockSpec(a.shape, lambda g, _n=n: (0,) * _n)


def _build_stacked_bias(attention_mask, groups, num_heads):
    """Block-diagonal causal + key-padding additive bias at the stacked (H*BG*S,)^2 shape."""
    B, S = attention_mask.shape
    BG = B // groups
    key_ok = (attention_mask > 0.5).reshape(groups, BG, S)
    causal = jnp.tril(jnp.ones((S, S), dtype=bool))
    allowed = causal[None, None, :, :] & key_ok[:, :, None, :]             # (G, BG, Sq, Sk)
    eye_b = jnp.eye(BG, dtype=bool)
    blk = eye_b[None, :, None, :, None] & allowed[:, :, :, None, :]        # (G,BG,Sq,BG,Sk)
    blk = blk.reshape(groups, BG * S, BG * S)
    eye_h = jnp.eye(num_heads, dtype=bool)
    blk = eye_h[None, :, None, :, None] & blk[:, None, :, None, :]         # (G,H,R,H,R)
    blk = blk.reshape(groups, num_heads * BG * S, num_heads * BG * S)
    return jnp.where(blk, 0.0, NEG_BIG).astype(jnp.float32)


def paraphrase_gpt_forward(kparams, input_ids, attention_mask, *, num_heads, num_layers,
                           groups=1, vocab_size=50257):
    B, S = input_ids.shape
    assert B % groups == 0
    D = kparams["qkv_w"].shape[1]
    BG = B // groups
    R = BG * S                       # stacked rows per grid step
    RH = num_heads * R

    # ---- glue (plain JAX): embedding gather + stacked block-diagonal bias -----------
    x = kparams["wte"][input_ids] + kparams["wpe"][:S][None, :, :]          # (B, S, D) f32
    x = x.reshape(groups, R, D)
    bias = _build_stacked_bias(attention_mask, groups, num_heads)           # (G, RH, RH)

    kernel = functools.partial(fused_gpt_kernel,
                               num_layers=num_layers, num_heads=num_heads)
    out = pl.pallas_call(
        kernel,
        out_shape=jax.ShapeDtypeStruct((groups, R, D), jnp.float32),
        grid=(groups,),
        in_specs=[
            pl.BlockSpec((1, R, D), lambda g: (g, 0, 0)),       # stacked activations
            pl.BlockSpec((1, RH, RH), lambda g: (g, 0, 0)),     # stacked attention bias
            _const_spec(kparams["vec"]),                        # packed small vectors
            _const_spec(kparams["qkv_w"]),
            _const_spec(kparams["proj_head_w"]),
            _const_spec(kparams["fc_w"]),
            _const_spec(kparams["out_w"]),
        ],
        out_specs=pl.BlockSpec((1, R, D), lambda g: (g, 0, 0)),
        compiler_params=pltpu.CompilerParams(dimension_semantics=("parallel",)),
    )(x, bias, kparams["vec"], kparams["qkv_w"], kparams["proj_head_w"],
      kparams["fc_w"], kparams["out_w"])

    binary = out.reshape(B, S, D)[:, S - 1, :2]                             # (B, 2)

    # Single fused write of the full vocab row (no separate -1e9 fill + scatter).
    cols = lax.broadcasted_iota(jnp.int32, (1, vocab_size), 1)
    full = jnp.where(cols == NO_TOKEN_ID, binary[:, 0:1],
                     jnp.where(cols == YES_TOKEN_ID, binary[:, 1:2], NEG_BIG))
    return full


# ----------------------------------------------------------------------------- reference

def reference_forward(params, input_ids, attention_mask, *, num_heads, num_layers):
    """Pure-JAX (non-Pallas) forward mirroring the kernel math, for validation."""
    B, S = input_ids.shape
    D = params["qkv_w"].shape[1]
    Dh = D // num_heads
    scale = 1.0 / math.sqrt(Dh)
    bf = jnp.bfloat16

    def ln(v, g, b):
        mu = jnp.mean(v, axis=-1, keepdims=True)
        var = jnp.mean(jnp.square(v - mu), axis=-1, keepdims=True)
        return (v - mu) * lax.rsqrt(var + 1e-5) * g + b

    x = params["wte"][input_ids] + params["wpe"][:S][None]
    key_ok = attention_mask > 0.5
    causal = jnp.tril(jnp.ones((S, S), dtype=bool))
    bias = jnp.where(causal[None] & key_ok[:, None, :], 0.0, NEG_BIG)       # (B, Sq, Sk)

    for l in range(num_layers):
        a = ln(x, params["ln1_g"][l], params["ln1_b"][l])
        qkv = jnp.einsum("bsd,de->bse", a.astype(bf), params["qkv_w"][l].astype(bf),
                         preferred_element_type=jnp.float32) + params["qkv_b"][l]
        q, k, v = qkv[..., :D], qkv[..., D:2 * D], qkv[..., 2 * D:]
        q = q.reshape(B, S, num_heads, Dh).transpose(0, 2, 1, 3)
        k = k.reshape(B, S, num_heads, Dh).transpose(0, 2, 1, 3)
        v = v.reshape(B, S, num_heads, Dh).transpose(0, 2, 1, 3)
        s = jnp.einsum("bhqd,bhkd->bhqk", q.astype(bf), k.astype(bf),
                       preferred_element_type=jnp.float32) * scale + bias[:, None]
        p = jax.nn.softmax(s, axis=-1)
        o = jnp.einsum("bhqk,bhkd->bhqd", p.astype(bf), v.astype(bf),
                       preferred_element_type=jnp.float32)
        o = o.transpose(0, 2, 1, 3).reshape(B, S, D)
        attn = jnp.einsum("bsd,de->bse", o.astype(bf), params["proj_w"][l].astype(bf),
                          preferred_element_type=jnp.float32) + params["proj_b"][l]
        x = x + attn
        m = ln(x, params["ln2_g"][l], params["ln2_b"][l])
        m = jnp.einsum("bsd,de->bse", m.astype(bf), params["fc_w"][l].astype(bf),
                       preferred_element_type=jnp.float32) + params["fc_b"][l]
        m = jax.nn.gelu(m, approximate=True)
        m = jnp.einsum("bsd,de->bse", m.astype(bf), params["out_w"][l].astype(bf),
                       preferred_element_type=jnp.float32) + params["out_b"][l]
        x = x + m

    h = ln(x, params["ln_f_g"], params["ln_f_b"])
    return h[:, -1, :] @ params["head_w"] + params["head_b"]                # (B, 2)


# ----------------------------------------------------------------------------- main

if __name__ == "__main__":
    B, S, D, H, L, V = 2, 16, 128, 2, 2, 50257

    key = jax.random.PRNGKey(0)
    pkey, ikey = jax.random.split(key)
    params = init_params(pkey, vocab=V, d=D, l=L, num_heads=H, max_pos=64)
    kparams = pack_params(params, num_heads=H)   # fold scale, pack slabs (once, outside jit)

    input_ids = jax.random.randint(ikey, (B, S), 0, V, dtype=jnp.int32)
    # Padding in the middle so the last-token hidden state is well-defined for comparison.
    attention_mask = jnp.ones((B, S), jnp.float32).at[1, 6:10].set(0.0)

    fwd = jax.jit(functools.partial(paraphrase_gpt_forward, num_heads=H, num_layers=L,
                                    groups=1, vocab_size=V))
    logits = jax.block_until_ready(fwd(kparams, input_ids, attention_mask))

    assert logits.shape == (B, V) and logits.dtype == jnp.float32

    ref_fn = jax.jit(functools.partial(reference_forward, num_heads=H, num_layers=L))
    ref_binary = jax.block_until_ready(ref_fn(params, input_ids, attention_mask))
    got_binary = jnp.stack([logits[:, NO_TOKEN_ID], logits[:, YES_TOKEN_ID]], axis=1)

    assert bool(jnp.isfinite(got_binary).all())
    assert bool(jnp.allclose(got_binary, ref_binary, atol=5e-2, rtol=5e-2))
    assert bool(jnp.all(logits[:, 0] == NEG_BIG))
    print("KERNEL_OK")
</pallas_src>

<mosaic_0001>
module attributes {stable_mosaic.version = 11 : i64} {
  func.func @fused_gpt_kernel(%arg0: i32, %arg1: memref<1x32x128xf32, #tpu.memory_space<vmem>>, %arg2: memref<1x64x64xf32, #tpu.memory_space<vmem>>, %arg3: memref<3x8x512xf32, #tpu.memory_space<vmem>>, %arg4: memref<2x128x384xbf16, #tpu.memory_space<vmem>>, %arg5: memref<3x128x128xbf16, #tpu.memory_space<vmem>>, %arg6: memref<2x128x512xbf16, #tpu.memory_space<vmem>>, %arg7: memref<2x512x128xbf16, #tpu.memory_space<vmem>>, %arg8: memref<1x32x128xf32, #tpu.memory_space<vmem>>) attributes {dimension_semantics = [#tpu.dimension_semantics<parallel>], iteration_bounds = array<i64: 1>, scalar_prefetch = 0 : i64, scratch_operands = 0 : i64, tpu.core_type = #tpu.core_type<tc>, window_params = [{transform_indices = @transform_0, window_bounds = array<i64: 1, 32, 128>}, {transform_indices = @transform_1, window_bounds = array<i64: 1, 64, 64>}, {pipeline_mode = #tpu.pipeline_mode<synchronous>, transform_indices = @transform_2, window_bounds = array<i64: 3, 8, 512>}, {pipeline_mode = #tpu.pipeline_mode<synchronous>, transform_indices = @transform_3, window_bounds = array<i64: 2, 128, 384>}, {pipeline_mode = #tpu.pipeline_mode<synchronous>, transform_indices = @transform_4, window_bounds = array<i64: 3, 128, 128>}, {pipeline_mode = #tpu.pipeline_mode<synchronous>, transform_indices = @transform_5, window_bounds = array<i64: 2, 128, 512>}, {pipeline_mode = #tpu.pipeline_mode<synchronous>, transform_indices = @transform_6, window_bounds = array<i64: 2, 512, 128>}, {transform_indices = @transform_7, window_bounds = array<i64: 1, 32, 128>}]} {
    %c0 = arith.constant 0 : index
    %c0_0 = arith.constant 0 : index
    %c0_1 = arith.constant 0 : index
    %0 = vector.load %arg1[%c0, %c0_0, %c0_1] : memref<1x32x128xf32, #tpu.memory_space<vmem>>, vector<1x32x128xf32>
    %1 = vector.shape_cast %0 : vector<1x32x128xf32> to vector<32x128xf32>
    %c0_2 = arith.constant 0 : index
    %c0_3 = arith.constant 0 : index
    %c0_4 = arith.constant 0 : index
    %2 = vector.load %arg2[%c0_2, %c0_3, %c0_4] : memref<1x64x64xf32, #tpu.memory_space<vmem>>, vector<1x64x64xf32>
    %3 = vector.shape_cast %2 : vector<1x64x64xf32> to vector<64x64xf32>
    %c0_5 = arith.constant 0 : index
    %c0_6 = arith.constant 0 : index
    %c0_7 = arith.constant 0 : index
    %4 = vector.load %arg3[%c0_5, %c0_6, %c0_7] : memref<3x8x512xf32, #tpu.memory_space<vmem>>, vector<1x8x512xf32>
    %5 = vector.shape_cast %4 : vector<1x8x512xf32> to vector<8x512xf32>
    %6 = vector.extract_strided_slice %5 {offsets = [0, 0], sizes = [1, 128], strides = [1, 1]} : vector<8x512xf32> to vector<1x128xf32>
    %7 = vector.extract_strided_slice %5 {offsets = [1, 0], sizes = [1, 128], strides = [1, 1]} : vector<8x512xf32> to vector<1x128xf32>
    %8 = vector.extract_strided_slice %5 {offsets = [2, 0], sizes = [1, 128], strides = [1, 1]} : vector<8x512xf32> to vector<1x128xf32>
    %9 = vector.extract_strided_slice %5 {offsets = [3, 0], sizes = [1, 128], strides = [1, 1]} : vector<8x512xf32> to vector<1x128xf32>
    %10 = vector.extract_strided_slice %5 {offsets = [4, 0], sizes = [1, 128], strides = [1, 1]} : vector<8x512xf32> to vector<1x128xf32>
    %11 = vector.extract_strided_slice %5 {offsets = [5, 0], sizes = [1, 128], strides = [1, 1]} : vector<8x512xf32> to vector<1x128xf32>
    %12 = vector.extract_strided_slice %5 {offsets = [6, 0], sizes = [1, 384], strides = [1, 1]} : vector<8x512xf32> to vector<1x384xf32>
    %13 = vector.extract_strided_slice %5 {offsets = [7, 0], sizes = [1, 512], strides = [1, 1]} : vector<8x512xf32> to vector<1x512xf32>
    %cst = arith.constant dense<0.000000e+00> : vector<32xf32>
    %14 = vector.multi_reduction <add>, %1, %cst [1] : vector<32x128xf32> to vector<32xf32>
    %15 = vector.shape_cast %14 : vector<32xf32> to vector<32x1xf32>
    %cst_8 = arith.constant 1.280000e+02 : f32
    %16 = vector.broadcast %cst_8 : f32 to vector<32x1xf32>
    %17 = arith.divf %15, %16 : vector<32x1xf32>
    %18 = vector.broadcast %17 : vector<32x1xf32> to vector<32x128xf32>
    %19 = arith.subf %1, %18 : vector<32x128xf32>
    %20 = arith.mulf %19, %19 : vector<32x128xf32>
    %cst_9 = arith.constant dense<0.000000e+00> : vector<32xf32>
    %21 = vector.multi_reduction <add>, %20, %cst_9 [1] : vector<32x128xf32> to vector<32xf32>
    %22 = vector.shape_cast %21 : vector<32xf32> to vector<32x1xf32>
    %cst_10 = arith.constant 1.280000e+02 : f32
    %23 = vector.broadcast %cst_10 : f32 to vector<32x1xf32>
    %24 = arith.divf %22, %23 : vector<32x1xf32>
    %25 = vector.broadcast %17 : vector<32x1xf32> to vector<32x128xf32>
    %26 = arith.subf %1, %25 : vector<32x128xf32>
    %cst_11 = arith.constant 9.99999974E-6 : f32
    %27 = vector.broadcast %cst_11 : f32 to vector<32x1xf32>
    %28 = arith.addf %24, %27 : vector<32x1xf32>
    %29 = math.rsqrt %28 : vector<32x1xf32>
    %30 = vector.broadcast %29 : vector<32x1xf32> to vector<32x128xf32>
    %31 = arith.mulf %26, %30 : vector<32x128xf32>
    %32 = vector.broadcast %6 : vector<1x128xf32> to vector<32x128xf32>
    %33 = arith.mulf %31, %32 : vector<32x128xf32>
    %34 = vector.broadcast %7 : vector<1x128xf32> to vector<32x128xf32>
    %35 = arith.addf %33, %34 : vector<32x128xf32>
    %36 = arith.truncf %35 : vector<32x128xf32> to vector<32x128xbf16>
    %c0_12 = arith.constant 0 : index
    %c0_13 = arith.constant 0 : index
    %c0_14 = arith.constant 0 : index
    %37 = vector.load %arg4[%c0_12, %c0_13, %c0_14] : memref<2x128x384xbf16, #tpu.memory_space<vmem>>, vector<1x128x384xbf16>
    %38 = vector.shape_cast %37 : vector<1x128x384xbf16> to vector<128x384xbf16>
    %cst_15 = arith.constant dense<0.000000e+00> : vector<32x384xf32>
    %39 = tpu.matmul %36, %38, %cst_15 {dimension_numbers = #tpu.dot_dimension_numbers<[1], [0], [0], [1], [0, 0, 1, 1], [], []>} : vector<32x128xbf16>, vector<128x384xbf16>, vector<32x384xf32> -> vector<32x384xf32>
    %40 = vector.broadcast %12 : vector<1x384xf32> to vector<32x384xf32>
    %41 = arith.addf %39, %40 : vector<32x384xf32>
    %42 = vector.extract_strided_slice %41 {offsets = [0, 0], sizes = [32, 64], strides = [1, 1]} : vector<32x384xf32> to vector<32x64xf32>
    %43 = vector.extract_strided_slice %41 {offsets = [0, 64], sizes = [32, 64], strides = [1, 1]} : vector<32x384xf32> to vector<32x64xf32>
    %44 = tpu.concatenate %42, %43 in 0 : vector<32x64xf32>, vector<32x64xf32> -> vector<64x64xf32>
    %45 = vector.extract_strided_slice %41 {offsets = [0, 128], sizes = [32, 64], strides = [1, 1]} : vector<32x384xf32> to vector<32x64xf32>
    %46 = vector.extract_strided_slice %41 {offsets = [0, 192], sizes = [32, 64], strides = [1, 1]} : vector<32x384xf32> to vector<32x64xf32>
    %47 = tpu.concatenate %45, %46 in 0 : vector<32x64xf32>, vector<32x64xf32> -> vector<64x64xf32>
    %48 = vector.extract_strided_slice %41 {offsets = [0, 256], sizes = [32, 64], strides = [1, 1]} : vector<32x384xf32> to vector<32x64xf32>
    %49 = vector.extract_strided_slice %41 {offsets = [0, 320], sizes = [32, 64], strides = [1, 1]} : vector<32x384xf32> to vector<32x64xf32>
    %50 = tpu.concatenate %48, %49 in 0 : vector<32x64xf32>, vector<32x64xf32> -> vector<64x64xf32>
    %51 = arith.truncf %44 : vector<64x64xf32> to vector<64x64xbf16>
    %52 = arith.truncf %47 : vector<64x64xf32> to vector<64x64xbf16>
    %cst_16 = arith.constant dense<0.000000e+00> : vector<64x64xf32>
    %53 = tpu.matmul %51, %52, %cst_16 {dimension_numbers = #tpu.dot_dimension_numbers<[1], [1], [0], [0], [0, 0, 1, 0], [], []>} : vector<64x64xbf16>, vector<64x64xbf16>, vector<64x64xf32> -> vector<64x64xf32>
    %54 = arith.addf %53, %3 : vector<64x64xf32>
    %cst_17 = arith.constant dense<0xFF800000> : vector<64xf32>
    %55 = vector.multi_reduction <maximumf>, %54, %cst_17 [1] : vector<64x64xf32> to vector<64xf32>
    %56 = vector.shape_cast %55 : vector<64xf32> to vector<64x1xf32>
    %57 = vector.broadcast %56 : vector<64x1xf32> to vector<64x64xf32>
    %58 = arith.subf %54, %57 : vector<64x64xf32>
    %59 = math.exp %58 : vector<64x64xf32>
    %cst_18 = arith.constant dense<0.000000e+00> : vector<64xf32>
    %60 = vector.multi_reduction <add>, %59, %cst_18 [1] : vector<64x64xf32> to vector<64xf32>
    %61 = vector.shape_cast %60 : vector<64xf32> to vector<64x1xf32>
    %62 = tpu.reciprocal %61 {approx = true} : vector<64x1xf32> -> vector<64x1xf32>
    %63 = vector.broadcast %62 : vector<64x1xf32> to vector<64x64xf32>
    %64 = arith.mulf %59, %63 : vector<64x64xf32>
    %65 = arith.truncf %64 : vector<64x64xf32> to vector<64x64xbf16>
    %66 = arith.truncf %50 : vector<64x64xf32> to vector<64x64xbf16>
    %cst_19 = arith.constant dense<0.000000e+00> : vector<64x64xf32>
    %67 = tpu.matmul %65, %66, %cst_19 {dimension_numbers = #tpu.dot_dimension_numbers<[1], [0], [0], [1], [0, 0, 1, 1], [], []>} : vector<64x64xbf16>, vector<64x64xbf16>, vector<64x64xf32> -> vector<64x64xf32>
    %68 = vector.extract_strided_slice %67 {offsets = [0, 0], sizes = [32, 64], strides = [1, 1]} : vector<64x64xf32> to vector<32x64xf32>
    %69 = vector.extract_strided_slice %67 {offsets = [32, 0], sizes = [32, 64], strides = [1, 1]} : vector<64x64xf32> to vector<32x64xf32>
    %70 = tpu.concatenate %68, %69 in 1 : vector<32x64xf32>, vector<32x64xf32> -> vector<32x128xf32>
    %71 = arith.truncf %70 : vector<32x128xf32> to vector<32x128xbf16>
    %c0_20 = arith.constant 0 : index
    %c0_21 = arith.constant 0 : index
    %c0_22 = arith.constant 0 : index
    %72 = vector.load %arg5[%c0_20, %c0_21, %c0_22] : memref<3x128x128xbf16, #tpu.memory_space<vmem>>, vector<1x128x128xbf16>
    %73 = vector.shape_cast %72 : vector<1x128x128xbf16> to vector<128x128xbf16>
    %cst_23 = arith.constant dense<0.000000e+00> : vector<32x128xf32>
    %74 = tpu.matmul %71, %73, %cst_23 {dimension_numbers = #tpu.dot_dimension_numbers<[1], [0], [0], [1], [0, 0, 1, 1], [], []>} : vector<32x128xbf16>, vector<128x128xbf16>, vector<32x128xf32> -> vector<32x128xf32>
    %75 = vector.broadcast %10 : vector<1x128xf32> to vector<32x128xf32>
    %76 = arith.addf %74, %75 : vector<32x128xf32>
    %77 = arith.addf %1, %76 : vector<32x128xf32>
    %cst_24 = arith.constant dense<0.000000e+00> : vector<32xf32>
    %78 = vector.multi_reduction <add>, %77, %cst_24 [1] : vector<32x128xf32> to vector<32xf32>
    %79 = vector.shape_cast %78 : vector<32xf32> to vector<32x1xf32>
    %cst_25 = arith.constant 1.280000e+02 : f32
    %80 = vector.broadcast %cst_25 : f32 to vector<32x1xf32>
    %81 = arith.divf %79, %80 : vector<32x1xf32>
    %82 = vector.broadcast %81 : vector<32x1xf32> to vector<32x128xf32>
    %83 = arith.subf %77, %82 : vector<32x128xf32>
    %84 = arith.mulf %83, %83 : vector<32x128xf32>
    %cst_26 = arith.constant dense<0.000000e+00> : vector<32xf32>
    %85 = vector.multi_reduction <add>, %84, %cst_26 [1] : vector<32x128xf32> to vector<32xf32>
    %86 = vector.shape_cast %85 : vector<32xf32> to vector<32x1xf32>
    %cst_27 = arith.constant 1.280000e+02 : f32
    %87 = vector.broadcast %cst_27 : f32 to vector<32x1xf32>
    %88 = arith.divf %86, %87 : vector<32x1xf32>
    %89 = vector.broadcast %81 : vector<32x1xf32> to vector<32x128xf32>
    %90 = arith.subf %77, %89 : vector<32x128xf32>
    %cst_28 = arith.constant 9.99999974E-6 : f32
    %91 = vector.broadcast %cst_28 : f32 to vector<32x1xf32>
    %92 = arith.addf %88, %91 : vector<32x1xf32>
    %93 = math.rsqrt %92 : vector<32x1xf32>
    %94 = vector.broadcast %93 : vector<32x1xf32> to vector<32x128xf32>
    %95 = arith.mulf %90, %94 : vector<32x128xf32>
    %96 = vector.broadcast %8 : vector<1x128xf32> to vector<32x128xf32>
    %97 = arith.mulf %95, %96 : vector<32x128xf32>
    %98 = vector.broadcast %9 : vector<1x128xf32> to vector<32x128xf32>
    %99 = arith.addf %97, %98 : vector<32x128xf32>
    %100 = arith.truncf %99 : vector<32x128xf32> to vector<32x128xbf16>
    %c0_29 = arith.constant 0 : index
    %c0_30 = arith.constant 0 : index
    %c0_31 = arith.constant 0 : index
    %101 = vector.load %arg6[%c0_29, %c0_30, %c0_31] : memref<2x128x512xbf16, #tpu.memory_space<vmem>>, vector<1x128x512xbf16>
    %102 = vector.shape_cast %101 : vector<1x128x512xbf16> to vector<128x512xbf16>
    %cst_32 = arith.constant dense<0.000000e+00> : vector<32x512xf32>
    %103 = tpu.matmul %100, %102, %cst_32 {dimension_numbers = #tpu.dot_dimension_numbers<[1], [0], [0], [1], [0, 0, 1, 1], [], []>} : vector<32x128xbf16>, vector<128x512xbf16>, vector<32x512xf32> -> vector<32x512xf32>
    %104 = vector.broadcast %13 : vector<1x512xf32> to vector<32x512xf32>
    %105 = arith.addf %103, %104 : vector<32x512xf32>
    %106 = arith.mulf %105, %105 : vector<32x512xf32>
    %107 = arith.mulf %105, %106 : vector<32x512xf32>
    %cst_33 = arith.constant 4.471500e-02 : f32
    %108 = vector.broadcast %cst_33 : f32 to vector<32x512xf32>
    %109 = arith.mulf %108, %107 : vector<32x512xf32>
    %110 = arith.addf %105, %109 : vector<32x512xf32>
    %cst_34 = arith.constant 0.797884583 : f32
    %111 = vector.broadcast %cst_34 : f32 to vector<32x512xf32>
    %112 = arith.mulf %111, %110 : vector<32x512xf32>
    %113 = math.tanh %112 : vector<32x512xf32>
    %cst_35 = arith.constant 1.000000e+00 : f32
    %114 = vector.broadcast %cst_35 : f32 to vector<32x512xf32>
    %115 = arith.addf %114, %113 : vector<32x512xf32>
    %cst_36 = arith.constant 5.000000e-01 : f32
    %116 = vector.broadcast %cst_36 : f32 to vector<32x512xf32>
    %117 = arith.mulf %116, %115 : vector<32x512xf32>
    %118 = arith.mulf %105, %117 : vector<32x512xf32>
    %119 = arith.truncf %118 : vector<32x512xf32> to vector<32x512xbf16>
    %c0_37 = arith.constant 0 : index
    %c0_38 = arith.constant 0 : index
    %c0_39 = arith.constant 0 : index
    %120 = vector.load %arg7[%c0_37, %c0_38, %c0_39] : memref<2x512x128xbf16, #tpu.memory_space<vmem>>, vector<1x512x128xbf16>
    %121 = vector.shape_cast %120 : vector<1x512x128xbf16> to vector<512x128xbf16>
    %cst_40 = arith.constant dense<0.000000e+00> : vector<32x128xf32>
    %122 = tpu.matmul %119, %121, %cst_40 {dimension_numbers = #tpu.dot_dimension_numbers<[1], [0], [0], [1], [0, 0, 1, 1], [], []>} : vector<32x512xbf16>, vector<512x128xbf16>, vector<32x128xf32> -> vector<32x128xf32>
    %123 = vector.broadcast %11 : vector<1x128xf32> to vector<32x128xf32>
    %124 = arith.addf %122, %123 : vector<32x128xf32>
    %125 = arith.addf %77, %124 : vector<32x128xf32>
    %c1 = arith.constant 1 : index
    %c0_41 = arith.constant 0 : index
    %c0_42 = arith.constant 0 : index
    %126 = vector.load %arg3[%c1, %c0_41, %c0_42] : memref<3x8x512xf32, #tpu.memory_space<vmem>>, vector<1x8x512xf32>
    %127 = vector.shape_cast %126 : vector<1x8x512xf32> to vector<8x512xf32>
    %128 = vector.extract_strided_slice %127 {offsets = [0, 0], sizes = [1, 128], strides = [1, 1]} : vector<8x512xf32> to vector<1x128xf32>
    %129 = vector.extract_strided_slice %127 {offsets = [1, 0], sizes = [1, 128], strides = [1, 1]} : vector<8x512xf32> to vector<1x128xf32>
    %130 = vector.extract_strided_slice %127 {offsets = [2, 0], sizes = [1, 128], strides = [1, 1]} : vector<8x512xf32> to vector<1x128xf32>
    %131 = vector.extract_strided_slice %127 {offsets = [3, 0], sizes = [1, 128], strides = [1, 1]} : vector<8x512xf32> to vector<1x128xf32>
    %132 = vector.extract_strided_slice %127 {offsets = [4, 0], sizes = [1, 128], strides = [1, 1]} : vector<8x512xf32> to vector<1x128xf32>
    %133 = vector.extract_strided_slice %127 {offsets = [5, 0], sizes = [1, 128], strides = [1, 1]} : vector<8x512xf32> to vector<1x128xf32>
    %134 = vector.extract_strided_slice %127 {offsets = [6, 0], sizes = [1, 384], strides = [1, 1]} : vector<8x512xf32> to vector<1x384xf32>
    %135 = vector.extract_strided_slice %127 {offsets = [7, 0], sizes = [1, 512], strides = [1, 1]} : vector<8x512xf32> to vector<1x512xf32>
    %cst_43 = arith.constant dense<0.000000e+00> : vector<32xf32>
    %136 = vector.multi_reduction <add>, %125, %cst_43 [1] : vector<32x128xf32> to vector<32xf32>
    %137 = vector.shape_cast %136 : vector<32xf32> to vector<32x1xf32>
    %cst_44 = arith.constant 1.280000e+02 : f32
    %138 = vector.broadcast %cst_44 : f32 to vector<32x1xf32>
    %139 = arith.divf %137, %138 : vector<32x1xf32>
    %140 = vector.broadcast %139 : vector<32x1xf32> to vector<32x128xf32>
    %141 = arith.subf %125, %140 : vector<32x128xf32>
    %142 = arith.mulf %141, %141 : vector<32x128xf32>
    %cst_45 = arith.constant dense<0.000000e+00> : vector<32xf32>
    %143 = vector.multi_reduction <add>, %142, %cst_45 [1] : vector<32x128xf32> to vector<32xf32>
    %144 = vector.shape_cast %143 : vector<32xf32> to vector<32x1xf32>
    %cst_46 = arith.constant 1.280000e+02 : f32
    %145 = vector.broadcast %cst_46 : f32 to vector<32x1xf32>
    %146 = arith.divf %144, %145 : vector<32x1xf32>
    %147 = vector.broadcast %139 : vector<32x1xf32> to vector<32x128xf32>
    %148 = arith.subf %125, %147 : vector<32x128xf32>
    %cst_47 = arith.constant 9.99999974E-6 : f32
    %149 = vector.broadcast %cst_47 : f32 to vector<32x1xf32>
    %150 = arith.addf %146, %149 : vector<32x1xf32>
    %151 = math.rsqrt %150 : vector<32x1xf32>
    %152 = vector.broadcast %151 : vector<32x1xf32> to vector<32x128xf32>
    %153 = arith.mulf %148, %152 : vector<32x128xf32>
    %154 = vector.broadcast %128 : vector<1x128xf32> to vector<32x128xf32>
    %155 = arith.mulf %153, %154 : vector<32x128xf32>
    %156 = vector.broadcast %129 : vector<1x128xf32> to vector<32x128xf32>
    %157 = arith.addf %155, %156 : vector<32x128xf32>
    %158 = arith.truncf %157 : vector<32x128xf32> to vector<32x128xbf16>
    %c1_48 = arith.constant 1 : index
    %c0_49 = arith.constant 0 : index
    %c0_50 = arith.constant 0 : index
    %159 = vector.load %arg4[%c1_48, %c0_49, %c0_50] : memref<2x128x384xbf16, #tpu.memory_space<vmem>>, vector<1x128x384xbf16>
    %160 = vector.shape_cast %159 : vector<1x128x384xbf16> to vector<128x384xbf16>
    %cst_51 = arith.constant dense<0.000000e+00> : vector<32x384xf32>
    %161 = tpu.matmul %158, %160, %cst_51 {dimension_numbers = #tpu.dot_dimension_numbers<[1], [0], [0], [1], [0, 0, 1, 1], [], []>} : vector<32x128xbf16>, vector<128x384xbf16>, vector<32x384xf32> -> vector<32x384xf32>
    %162 = vector.broadcast %134 : vector<1x384xf32> to vector<32x384xf32>
    %163 = arith.addf %161, %162 : vector<32x384xf32>
    %164 = vector.extract_strided_slice %163 {offsets = [0, 0], sizes = [32, 64], strides = [1, 1]} : vector<32x384xf32> to vector<32x64xf32>
    %165 = vector.extract_strided_slice %163 {offsets = [0, 64], sizes = [32, 64], strides = [1, 1]} : vector<32x384xf32> to vector<32x64xf32>
    %166 = tpu.concatenate %164, %165 in 0 : vector<32x64xf32>, vector<32x64xf32> -> vector<64x64xf32>
    %167 = vector.extract_strided_slice %163 {offsets = [0, 128], sizes = [32, 64], strides = [1, 1]} : vector<32x384xf32> to vector<32x64xf32>
    %168 = vector.extract_strided_slice %163 {offsets = [0, 192], sizes = [32, 64], strides = [1, 1]} : vector<32x384xf32> to vector<32x64xf32>
    %169 = tpu.concatenate %167, %168 in 0 : vector<32x64xf32>, vector<32x64xf32> -> vector<64x64xf32>
    %170 = vector.extract_strided_slice %163 {offsets = [0, 256], sizes = [32, 64], strides = [1, 1]} : vector<32x384xf32> to vector<32x64xf32>
    %171 = vector.extract_strided_slice %163 {offsets = [0, 320], sizes = [32, 64], strides = [1, 1]} : vector<32x384xf32> to vector<32x64xf32>
    %172 = tpu.concatenate %170, %171 in 0 : vector<32x64xf32>, vector<32x64xf32> -> vector<64x64xf32>
    %173 = arith.truncf %166 : vector<64x64xf32> to vector<64x64xbf16>
    %174 = arith.truncf %169 : vector<64x64xf32> to vector<64x64xbf16>
    %cst_52 = arith.constant dense<0.000000e+00> : vector<64x64xf32>
    %175 = tpu.matmul %173, %174, %cst_52 {dimension_numbers = #tpu.dot_dimension_numbers<[1], [1], [0], [0], [0, 0, 1, 0], [], []>} : vector<64x64xbf16>, vector<64x64xbf16>, vector<64x64xf32> -> vector<64x64xf32>
    %176 = arith.addf %175, %3 : vector<64x64xf32>
    %cst_53 = arith.constant dense<0xFF800000> : vector<64xf32>
    %177 = vector.multi_reduction <maximumf>, %176, %cst_53 [1] : vector<64x64xf32> to vector<64xf32>
    %178 = vector.shape_cast %177 : vector<64xf32> to vector<64x1xf32>
    %179 = vector.broadcast %178 : vector<64x1xf32> to vector<64x64xf32>
    %180 = arith.subf %176, %179 : vector<64x64xf32>
    %181 = math.exp %180 : vector<64x64xf32>
    %cst_54 = arith.constant dense<0.000000e+00> : vector<64xf32>
    %182 = vector.multi_reduction <add>, %181, %cst_54 [1] : vector<64x64xf32> to vector<64xf32>
    %183 = vector.shape_cast %182 : vector<64xf32> to vector<64x1xf32>
    %184 = tpu.reciprocal %183 {approx = true} : vector<64x1xf32> -> vector<64x1xf32>
    %185 = vector.broadcast %184 : vector<64x1xf32> to vector<64x64xf32>
    %186 = arith.mulf %181, %185 : vector<64x64xf32>
    %187 = arith.truncf %186 : vector<64x64xf32> to vector<64x64xbf16>
    %188 = arith.truncf %172 : vector<64x64xf32> to vector<64x64xbf16>
    %cst_55 = arith.constant dense<0.000000e+00> : vector<64x64xf32>
    %189 = tpu.matmul %187, %188, %cst_55 {dimension_numbers = #tpu.dot_dimension_numbers<[1], [0], [0], [1], [0, 0, 1, 1], [], []>} : vector<64x64xbf16>, vector<64x64xbf16>, vector<64x64xf32> -> vector<64x64xf32>
    %190 = vector.extract_strided_slice %189 {offsets = [0, 0], sizes = [32, 64], strides = [1, 1]} : vector<64x64xf32> to vector<32x64xf32>
    %191 = vector.extract_strided_slice %189 {offsets = [32, 0], sizes = [32, 64], strides = [1, 1]} : vector<64x64xf32> to vector<32x64xf32>
    %192 = tpu.concatenate %190, %191 in 1 : vector<32x64xf32>, vector<32x64xf32> -> vector<32x128xf32>
    %193 = arith.truncf %192 : vector<32x128xf32> to vector<32x128xbf16>
    %c1_56 = arith.constant 1 : index
    %c0_57 = arith.constant 0 : index
    %c0_58 = arith.constant 0 : index
    %194 = vector.load %arg5[%c1_56, %c0_57, %c0_58] : memref<3x128x128xbf16, #tpu.memory_space<vmem>>, vector<1x128x128xbf16>
    %195 = vector.shape_cast %194 : vector<1x128x128xbf16> to vector<128x128xbf16>
    %cst_59 = arith.constant dense<0.000000e+00> : vector<32x128xf32>
    %196 = tpu.matmul %193, %195, %cst_59 {dimension_numbers = #tpu.dot_dimension_numbers<[1], [0], [0], [1], [0, 0, 1, 1], [], []>} : vector<32x128xbf16>, vector<128x128xbf16>, vector<32x128xf32> -> vector<32x128xf32>
    %197 = vector.broadcast %132 : vector<1x128xf32> to vector<32x128xf32>
    %198 = arith.addf %196, %197 : vector<32x128xf32>
    %199 = arith.addf %125, %198 : vector<32x128xf32>
    %cst_60 = arith.constant dense<0.000000e+00> : vector<32xf32>
    %200 = vector.multi_reduction <add>, %199, %cst_60 [1] : vector<32x128xf32> to vector<32xf32>
    %201 = vector.shape_cast %200 : vector<32xf32> to vector<32x1xf32>
    %cst_61 = arith.constant 1.280000e+02 : f32
    %202 = vector.broadcast %cst_61 : f32 to vector<32x1xf32>
    %203 = arith.divf %201, %202 : vector<32x1xf32>
    %204 = vector.broadcast %203 : vector<32x1xf32> to vector<32x128xf32>
    %205 = arith.subf %199, %204 : vector<32x128xf32>
    %206 = arith.mulf %205, %205 : vector<32x128xf32>
    %cst_62 = arith.constant dense<0.000000e+00> : vector<32xf32>
    %207 = vector.multi_reduction <add>, %206, %cst_62 [1] : vector<32x128xf32> to vector<32xf32>
    %208 = vector.shape_cast %207 : vector<32xf32> to vector<32x1xf32>
    %cst_63 = arith.constant 1.280000e+02 : f32
    %209 = vector.broadcast %cst_63 : f32 to vector<32x1xf32>
    %210 = arith.divf %208, %209 : vector<32x1xf32>
    %211 = vector.broadcast %203 : vector<32x1xf32> to vector<32x128xf32>
    %212 = arith.subf %199, %211 : vector<32x128xf32>
    %cst_64 = arith.constant 9.99999974E-6 : f32
    %213 = vector.broadcast %cst_64 : f32 to vector<32x1xf32>
    %214 = arith.addf %210, %213 : vector<32x1xf32>
    %215 = math.rsqrt %214 : vector<32x1xf32>
    %216 = vector.broadcast %215 : vector<32x1xf32> to vector<32x128xf32>
    %217 = arith.mulf %212, %216 : vector<32x128xf32>
    %218 = vector.broadcast %130 : vector<1x128xf32> to vector<32x128xf32>
    %219 = arith.mulf %217, %218 : vector<32x128xf32>
    %220 = vector.broadcast %131 : vector<1x128xf32> to vector<32x128xf32>
    %221 = arith.addf %219, %220 : vector<32x128xf32>
    %222 = arith.truncf %221 : vector<32x128xf32> to vector<32x128xbf16>
    %c1_65 = arith.constant 1 : index
    %c0_66 = arith.constant 0 : index
    %c0_67 = arith.constant 0 : index
    %223 = vector.load %arg6[%c1_65, %c0_66, %c0_67] : memref<2x128x512xbf16, #tpu.memory_space<vmem>>, vector<1x128x512xbf16>
    %224 = vector.shape_cast %223 : vector<1x128x512xbf16> to vector<128x512xbf16>
    %cst_68 = arith.constant dense<0.000000e+00> : vector<32x512xf32>
    %225 = tpu.matmul %222, %224, %cst_68 {dimension_numbers = #tpu.dot_dimension_numbers<[1], [0], [0], [1], [0, 0, 1, 1], [], []>} : vector<32x128xbf16>, vector<128x512xbf16>, vector<32x512xf32> -> vector<32x512xf32>
    %226 = vector.broadcast %135 : vector<1x512xf32> to vector<32x512xf32>
    %227 = arith.addf %225, %226 : vector<32x512xf32>
    %228 = arith.mulf %227, %227 : vector<32x512xf32>
    %229 = arith.mulf %227, %228 : vector<32x512xf32>
    %cst_69 = arith.constant 4.471500e-02 : f32
    %230 = vector.broadcast %cst_69 : f32 to vector<32x512xf32>
    %231 = arith.mulf %230, %229 : vector<32x512xf32>
    %232 = arith.addf %227, %231 : vector<32x512xf32>
    %cst_70 = arith.constant 0.797884583 : f32
    %233 = vector.broadcast %cst_70 : f32 to vector<32x512xf32>
    %234 = arith.mulf %233, %232 : vector<32x512xf32>
    %235 = math.tanh %234 : vector<32x512xf32>
    %cst_71 = arith.constant 1.000000e+00 : f32
    %236 = vector.broadcast %cst_71 : f32 to vector<32x512xf32>
    %237 = arith.addf %236, %235 : vector<32x512xf32>
    %cst_72 = arith.constant 5.000000e-01 : f32
    %238 = vector.broadcast %cst_72 : f32 to vector<32x512xf32>
    %239 = arith.mulf %238, %237 : vector<32x512xf32>
    %240 = arith.mulf %227, %239 : vector<32x512xf32>
    %241 = arith.truncf %240 : vector<32x512xf32> to vector<32x512xbf16>
    %c1_73 = arith.constant 1 : index
    %c0_74 = arith.constant 0 : index
    %c0_75 = arith.constant 0 : index
    %242 = vector.load %arg7[%c1_73, %c0_74, %c0_75] : memref<2x512x128xbf16, #tpu.memory_space<vmem>>, vector<1x512x128xbf16>
    %243 = vector.shape_cast %242 : vector<1x512x128xbf16> to vector<512x128xbf16>
    %cst_76 = arith.constant dense<0.000000e+00> : vector<32x128xf32>
    %244 = tpu.matmul %241, %243, %cst_76 {dimension_numbers = #tpu.dot_dimension_numbers<[1], [0], [0], [1], [0, 0, 1, 1], [], []>} : vector<32x512xbf16>, vector<512x128xbf16>, vector<32x128xf32> -> vector<32x128xf32>
    %245 = vector.broadcast %133 : vector<1x128xf32> to vector<32x128xf32>
    %246 = arith.addf %244, %245 : vector<32x128xf32>
    %247 = arith.addf %199, %246 : vector<32x128xf32>
    %c2 = arith.constant 2 : index
    %c0_77 = arith.constant 0 : index
    %c0_78 = arith.constant 0 : index
    %248 = vector.load %arg3[%c2, %c0_77, %c0_78] : memref<3x8x512xf32, #tpu.memory_space<vmem>>, vector<1x8x512xf32>
    %249 = vector.shape_cast %248 : vector<1x8x512xf32> to vector<8x512xf32>
    %250 = vector.extract_strided_slice %249 {offsets = [0, 0], sizes = [1, 128], strides = [1, 1]} : vector<8x512xf32> to vector<1x128xf32>
    %251 = vector.extract_strided_slice %249 {offsets = [1, 0], sizes = [1, 128], strides = [1, 1]} : vector<8x512xf32> to vector<1x128xf32>
    %cst_79 = arith.constant dense<0.000000e+00> : vector<32xf32>
    %252 = vector.multi_reduction <add>, %247, %cst_79 [1] : vector<32x128xf32> to vector<32xf32>
    %253 = vector.shape_cast %252 : vector<32xf32> to vector<32x1xf32>
    %cst_80 = arith.constant 1.280000e+02 : f32
    %254 = vector.broadcast %cst_80 : f32 to vector<32x1xf32>
    %255 = arith.divf %253, %254 : vector<32x1xf32>
    %256 = vector.broadcast %255 : vector<32x1xf32> to vector<32x128xf32>
    %257 = arith.subf %247, %256 : vector<32x128xf32>
    %258 = arith.mulf %257, %257 : vector<32x128xf32>
    %cst_81 = arith.constant dense<0.000000e+00> : vector<32xf32>
    %259 = vector.multi_reduction <add>, %258, %cst_81 [1] : vector<32x128xf32> to vector<32xf32>
    %260 = vector.shape_cast %259 : vector<32xf32> to vector<32x1xf32>
    %cst_82 = arith.constant 1.280000e+02 : f32
    %261 = vector.broadcast %cst_82 : f32 to vector<32x1xf32>
    %262 = arith.divf %260, %261 : vector<32x1xf32>
    %263 = vector.broadcast %255 : vector<32x1xf32> to vector<32x128xf32>
    %264 = arith.subf %247, %263 : vector<32x128xf32>
    %cst_83 = arith.constant 9.99999974E-6 : f32
    %265 = vector.broadcast %cst_83 : f32 to vector<32x1xf32>
    %266 = arith.addf %262, %265 : vector<32x1xf32>
    %267 = math.rsqrt %266 : vector<32x1xf32>
    %268 = vector.broadcast %267 : vector<32x1xf32> to vector<32x128xf32>
    %269 = arith.mulf %264, %268 : vector<32x128xf32>
    %270 = vector.broadcast %250 : vector<1x128xf32> to vector<32x128xf32>
    %271 = arith.mulf %269, %270 : vector<32x128xf32>
    %272 = vector.broadcast %251 : vector<1x128xf32> to vector<32x128xf32>
    %273 = arith.addf %271, %272 : vector<32x128xf32>
    %274 = arith.truncf %273 : vector<32x128xf32> to vector<32x128xbf16>
    %c2_84 = arith.constant 2 : index
    %c0_85 = arith.constant 0 : index
    %c0_86 = arith.constant 0 : index
    %275 = vector.load %arg5[%c2_84, %c0_85, %c0_86] : memref<3x128x128xbf16, #tpu.memory_space<vmem>>, vector<1x128x128xbf16>
    %276 = vector.shape_cast %275 : vector<1x128x128xbf16> to vector<128x128xbf16>
    %cst_87 = arith.constant dense<0.000000e+00> : vector<32x128xf32>
    %277 = tpu.matmul %274, %276, %cst_87 {dimension_numbers = #tpu.dot_dimension_numbers<[1], [0], [0], [1], [0, 0, 1, 1], [], []>} : vector<32x128xbf16>, vector<128x128xbf16>, vector<32x128xf32> -> vector<32x128xf32>
    %278 = vector.extract_strided_slice %249 {offsets = [2, 0], sizes = [1, 128], strides = [1, 1]} : vector<8x512xf32> to vector<1x128xf32>
    %279 = vector.broadcast %278 : vector<1x128xf32> to vector<32x128xf32>
    %280 = arith.addf %277, %279 : vector<32x128xf32>
    %c0_88 = arith.constant 0 : index
    %c0_89 = arith.constant 0 : index
    %c0_90 = arith.constant 0 : index
    %281 = vector.load %arg8[%c0_88, %c0_89, %c0_90] : memref<1x32x128xf32, #tpu.memory_space<vmem>>, vector<1x32x128xf32>
    %282 = vector.shape_cast %281 : vector<1x32x128xf32> to vector<32x128xf32>
    %283 = vector.shape_cast %280 : vector<32x128xf32> to vector<1x32x128xf32>
    tpu.vector_store %arg8[%c0_88, %c0_89, %c0_90], %283 {strides = array<i32>} : memref<1x32x128xf32, #tpu.memory_space<vmem>>, vector<1x32x128xf32>,
    return
  }
  func.func @transform_0(%arg0: i32) -> (i32, i32, i32) {
    %c0_i32 = arith.constant 0 : i32
    %c0_i32_0 = arith.constant 0 : i32
    %c0_i32_1 = arith.constant 0 : i32
    return %arg0, %c0_i32, %c0_i32_0 : i32, i32, i32
  }
  func.func @transform_1(%arg0: i32) -> (i32, i32, i32) {
    %c0_i32 = arith.constant 0 : i32
    %c0_i32_0 = arith.constant 0 : i32
    %c0_i32_1 = arith.constant 0 : i32
    return %arg0, %c0_i32, %c0_i32_0 : i32, i32, i32
  }
  func.func @transform_2(%arg0: i32) -> (i32, i32, i32) {
    %c0_i32 = arith.constant 0 : i32
    %c0_i32_0 = arith.constant 0 : i32
    %c0_i32_1 = arith.constant 0 : i32
    %c0_i32_2 = arith.constant 0 : i32
    return %c0_i32, %c0_i32_0, %c0_i32_1 : i32, i32, i32
  }
  func.func @transform_3(%arg0: i32) -> (i32, i32, i32) {
    %c0_i32 = arith.constant 0 : i32
    %c0_i32_0 = arith.constant 0 : i32
    %c0_i32_1 = arith.constant 0 : i32
    %c0_i32_2 = arith.constant 0 : i32
    return %c0_i32, %c0_i32_0, %c0_i32_1 : i32, i32, i32
  }
  func.func @transform_4(%arg0: i32) -> (i32, i32, i32) {
    %c0_i32 = arith.constant 0 : i32
    %c0_i32_0 = arith.constant 0 : i32
    %c0_i32_1 = arith.constant 0 : i32
    %c0_i32_2 = arith.constant 0 : i32
    return %c0_i32, %c0_i32_0, %c0_i32_1 : i32, i32, i32
  }
  func.func @transform_5(%arg0: i32) -> (i32, i32, i32) {
    %c0_i32 = arith.constant 0 : i32
    %c0_i32_0 = arith.constant 0 : i32
    %c0_i32_1 = arith.constant 0 : i32
    %c0_i32_2 = arith.constant 0 : i32
    return %c0_i32, %c0_i32_0, %c0_i32_1 : i32, i32, i32
  }
  func.func @transform_6(%arg0: i32) -> (i32, i32, i32) {
    %c0_i32 = arith.constant 0 : i32
    %c0_i32_0 = arith.constant 0 : i32
    %c0_i32_1 = arith.constant 0 : i32
    %c0_i32_2 = arith.constant 0 : i32
    return %c0_i32, %c0_i32_0, %c0_i32_1 : i32, i32, i32
  }
  func.func @transform_7(%arg0: i32) -> (i32, i32, i32) {
    %c0_i32 = arith.constant 0 : i32
    %c0_i32_0 = arith.constant 0 : i32
    %c0_i32_1 = arith.constant 0 : i32
    return %arg0, %c0_i32, %c0_i32_0 : i32, i32, i32
  }
}

</mosaic_0001>

<llo_original>
// kernel: paraphrase_gpt_forward.1
$region0: #{paraphrase_gpt_forward.1}
  #allocation0 [shape = 'u32[]', space=smem, size = 0x4, offset = 0x4, fixed_abs, tag = 'smem constant byte address 0x4 - core index']
  #allocation1 [shape = 'u32[144,128]{1,0:T(1,128)}', space=vmem, size = 0x12000, scoped, tag = 'internal scratch']
  %s0 = inlined_call_operand.vmem [shape: f32[1,32,128], index: 0, kind: input, shape index: {}]
  %s1 = inlined_call_operand.vmem [shape: f32[1,64,64], index: 1, kind: input, shape index: {}]
  %s2 = inlined_call_operand.hbm [shape: f32[3,8,512], index: 2, kind: input, shape index: {}]
  %s3 = inlined_call_operand.hbm [shape: bf16[2,128,384], index: 3, kind: input, shape index: {}]
  %s4 = inlined_call_operand.hbm [shape: bf16[3,128,128], index: 4, kind: input, shape index: {}]
  %s5 = inlined_call_operand.hbm [shape: bf16[2,128,512], index: 5, kind: input, shape index: {}]
  %s6 = inlined_call_operand.hbm [shape: bf16[2,512,128], index: 6, kind: input, shape index: {}]
  %s7 = inlined_call_operand.vmem [shape: f32[1,32,128], index: 7, kind: output, shape index: {}]
  %s8 = sld [smem:[#allocation0]]
  $region58: #{paraphrase_gpt_forward.1} parent=0
    _
  %s10 = ssub.s32 1, %s8
  %s11 = scalar_select 0, %s10, %s8
  $region1: #{paraphrase_gpt_forward.1} parent=0
    #allocation2 [shape = 'u8[49152]{0}', space=vmem, size = 0xc000, scoped, tag = 'input window, operand 2, single buffered']
    #allocation3 [shape = 's32[1]{0}', space=sflag, size = 0x4, scoped, tag = 'scoped memory for paraphrase_gpt_forward.1']
    #allocation4 [shape = 'u8[196608]{0}', space=vmem, size = 0x30000, scoped, tag = 'input window, operand 3, single buffered']
    #allocation5 [shape = 's32[1]{0}', space=sflag, size = 0x4, scoped, tag = 'scoped memory for paraphrase_gpt_forward.1']
    #allocation6 [shape = 'u8[98304]{0}', space=vmem, size = 0x18000, scoped, tag = 'input window, operand 4, single buffered']
    #allocation7 [shape = 'u8[262144]{0}', space=vmem, size = 0x40000, scoped, tag = 'input window, operand 5, single buffered']
    #allocation8 [shape = 's32[1]{0}', space=sflag, size = 0x4, scoped, tag = 'scoped memory for paraphrase_gpt_forward.1']
    #allocation9 [shape = 'u8[262144]{0}', space=vmem, size = 0x40000, scoped, tag = 'input window, operand 6, single buffered']
    %12 = vsyncpa [#allocation3], 0
    %13 = vsyncpa [#allocation5], 0
    %14 = vsyncpa [#allocation8], 0
    // Predicated region
    $region2: #{paraphrase_gpt_forward.1} parent=1 // pred_check
      _
    $region3: #{paraphrase_gpt_forward.1} parent=1 // pred_check_branch
      %16 = sbr.rel (0) target = $region5
    $region4: #{paraphrase_gpt_forward.1} parent=1 // pred_region
      _
    $region5: #{paraphrase_gpt_forward.1} parent=1 // pred_fallthru
      _
    // Predicated region
    $region6: #{paraphrase_gpt_forward.1} parent=1 // pred_check
      _
    $region7: #{paraphrase_gpt_forward.1} parent=1 // pred_check_branch
      %18 = sbr.rel (0) target = $region9
    $region8: #{paraphrase_gpt_forward.1} parent=1 // pred_region
      _
    $region9: #{paraphrase_gpt_forward.1} parent=1 // pred_fallthru
      _
    // Predicated region
    $region10: #{paraphrase_gpt_forward.1} parent=1 // pred_check
      _
    $region11: #{paraphrase_gpt_forward.1} parent=1 // pred_check_branch
      %20 = sbr.rel (0) target = $region13
    $region12: #{paraphrase_gpt_forward.1} parent=1 // pred_region
      %s22 = ssub.s32 1536, 1536
      %23 = vsyncadd [#allocation3], %s22
      %s24 = sshll.u32 [#allocation2], 4
      %s25 = int_to_ptr.vmem [resolvable:$true] %s24
      %30 = dma.hbm_to_vmem [thread:$0]  %s2, 1536, %s25, [#allocation3], 512, 512, 32
    $region13: #{paraphrase_gpt_forward.1} parent=1 // pred_fallthru
      _
    // Predicated region
    $region14: #{paraphrase_gpt_forward.1} parent=1 // pred_check
      _
    $region15: #{paraphrase_gpt_forward.1} parent=1 // pred_check_branch
      %32 = sbr.rel (0) target = $region17
    $region16: #{paraphrase_gpt_forward.1} parent=1 // pred_region
      %s34 = ssub.s32 6144, 6144
      %35 = vsyncadd [#allocation5], %s34
      %s36 = sshll.u32 [#allocation4], 4
      %s37 = int_to_ptr.vmem [resolvable:$true] %s36
      %42 = dma.hbm_to_vmem [thread:$0]  %s3, 6144, %s37, [#allocation5], 192, 192, 12
    $region17: #{paraphrase_gpt_forward.1} parent=1 // pred_fallthru
      _
    // Predicated region
    $region18: #{paraphrase_gpt_forward.1} parent=1 // pred_check
      _
    $region19: #{paraphrase_gpt_forward.1} parent=1 // pred_check_branch
      %44 = sbr.rel (0) target = $region21
    $region20: #{paraphrase_gpt_forward.1} parent=1 // pred_region
      %s46 = ssub.s32 3072, 3072
      %47 = vsyncadd [#allocation5], %s46
      %s48 = sshll.u32 [#allocation6], 4
      %s49 = int_to_ptr.vmem [resolvable:$true] %s48
      %54 = dma.hbm_to_vmem [thread:$0]  %s4, 3072, %s49, [#allocation5], 64, 64, 4
    $region21: #{paraphrase_gpt_forward.1} parent=1 // pred_fallthru
      _
    // Predicated region
    $region22: #{paraphrase_gpt_forward.1} parent=1 // pred_check
      _
    $region23: #{paraphrase_gpt_forward.1} parent=1 // pred_check_branch
      %56 = sbr.rel (0) target = $region25
    $region24: #{paraphrase_gpt_forward.1} parent=1 // pred_region
      %s58 = ssub.s32 8192, 8192
      %59 = vsyncadd [#allocation8], %s58
      %s60 = sshll.u32 [#allocation7], 4
      %s61 = int_to_ptr.vmem [resolvable:$true] %s60
      %66 = dma.hbm_to_vmem [thread:$0]  %s5, 8192, %s61, [#allocation8], 256, 256, 16
    $region25: #{paraphrase_gpt_forward.1} parent=1 // pred_fallthru
      _
    // Predicated region
    $region26: #{paraphrase_gpt_forward.1} parent=1 // pred_check
      _
    $region27: #{paraphrase_gpt_forward.1} parent=1 // pred_check_branch
      %68 = sbr.rel (0) target = $region29
    $region28: #{paraphrase_gpt_forward.1} parent=1 // pred_region
      %s70 = ssub.s32 8192, 8192
      %71 = vsyncadd [#allocation8], %s70
      %s72 = sshll.u32 [#allocation9], 4
      %s73 = int_to_ptr.vmem [resolvable:$true] %s72
      %78 = dma.hbm_to_vmem [thread:$0]  %s6, 8192, %s73, [#allocation8], 64, 64, 4
    $region29: #{paraphrase_gpt_forward.1} parent=1 // pred_fallthru
      _
    // Predicated region
    $region30: #{paraphrase_gpt_forward.1} parent=1 // pred_check
      _
    $region31: #{paraphrase_gpt_forward.1} parent=1 // pred_check_branch
      %80 = sbr.rel (0) target = $region33
    $region32: #{paraphrase_gpt_forward.1} parent=1 // pred_region
      %81 = dma.done [#allocation3], 1536
    $region33: #{paraphrase_gpt_forward.1} parent=1 // pred_fallthru
      _
    // Predicated region
    $region34: #{paraphrase_gpt_forward.1} parent=1 // pred_check
      _
    $region35: #{paraphrase_gpt_forward.1} parent=1 // pred_check_branch
      %83 = sbr.rel (0) target = $region37
    $region36: #{paraphrase_gpt_forward.1} parent=1 // pred_region
      %84 = dma.done [#allocation5], 6144
    $region37: #{paraphrase_gpt_forward.1} parent=1 // pred_fallthru
      _
    // Predicated region
    $region38: #{paraphrase_gpt_forward.1} parent=1 // pred_check
      _
    $region39: #{paraphrase_gpt_forward.1} parent=1 // pred_check_branch
      %86 = sbr.rel (0) target = $region41
    $region40: #{paraphrase_gpt_forward.1} parent=1 // pred_region
      %87 = dma.done [#allocation5], 3072
    $region41: #{paraphrase_gpt_forward.1} parent=1 // pred_fallthru
      _
    // Predicated region
    $region42: #{paraphrase_gpt_forward.1} parent=1 // pred_check
      _
    $region43: #{paraphrase_gpt_forward.1} parent=1 // pred_check_branch
      %89 = sbr.rel (0) target = $region45
    $region44: #{paraphrase_gpt_forward.1} parent=1 // pred_region
      %90 = dma.done [#allocation8], 8192
    $region45: #{paraphrase_gpt_forward.1} parent=1 // pred_fallthru
      _
    // Predicated region
    $region46: #{paraphrase_gpt_forward.1} parent=1 // pred_check
      _
    $region47: #{paraphrase_gpt_forward.1} parent=1 // pred_check_branch
      %92 = sbr.rel (0) target = $region49
    $region48: #{paraphrase_gpt_forward.1} parent=1 // pred_region
      %93 = dma.done [#allocation8], 8192
    $region49: #{paraphrase_gpt_forward.1} parent=1 // pred_fallthru
      _
    %v95 = vld [vmem:[%s0] sm:$0xff]
    %v96 = vld [vmem:[%s0 + $0x8] sm:$0xff]
    %v97 = vld [vmem:[%s0 + $0x10] sm:$0xff]
    %v98 = vld [vmem:[%s0 + $0x18] sm:$0xff]
    %v99 = vld [vmem:[%s1] sm:$0xff]
    %v100 = vld [vmem:[%s1 + $0x8] sm:$0xff]
    %v101 = vld [vmem:[%s1 + $0x10] sm:$0xff]
    %v102 = vld [vmem:[%s1 + $0x18] sm:$0xff]
    %v103 = vld [vmem:[%s1 + $0x20] sm:$0xff]
    %v104 = vld [vmem:[%s1 + $0x28] sm:$0xff]
    %v105 = vld [vmem:[%s1 + $0x30] sm:$0xff]
    %v106 = vld [vmem:[%s1 + $0x38] sm:$0xff]
    %v107 = vld [vmem:[#allocation2] sm:$0xff]
    %v108 = vld [vmem:[#allocation2 + $0x8] sm:$0xff]
    %v109 = vld [vmem:[#allocation2 + $0x10] sm:$0xff]
    %v110 = vld [vmem:[#allocation2 + $0x18] sm:$0xff]
    %111 = vadd.xlane.f32.xlu0 %v95
    %v112 = vpop.xlane.xlu0 %111
    %113 = vadd.xlane.f32.xlu0 %v96
    %v114 = vpop.xlane.xlu0 %113
    %115 = vadd.xlane.f32.xlu0 %v97
    %v116 = vpop.xlane.xlu0 %115
    %117 = vadd.xlane.f32.xlu0 %v98
    %v118 = vpop.xlane.xlu0 %117
    %v119 = vrcp.pop 128.0
    %v120 = vmul.f32 %v112, %v119
    %v121 = vmul.f32 %v114, %v119
    %v122 = vmul.f32 %v116, %v119
    %v123 = vmul.f32 %v118, %v119
    %v124 = vsub.f32 %v95, %v120
    %v125 = vsub.f32 %v96, %v121
    %v126 = vsub.f32 %v97, %v122
    %v127 = vsub.f32 %v98, %v123
    %v128 = vmul.f32 %v124, %v124
    %v129 = vmul.f32 %v125, %v125
    %v130 = vmul.f32 %v126, %v126
    %v131 = vmul.f32 %v127, %v127
    %132 = vadd.xlane.f32.xlu0 %v128
    %v133 = vpop.xlane.xlu0 %132
    %134 = vadd.xlane.f32.xlu0 %v129
    %v135 = vpop.xlane.xlu0 %134
    %136 = vadd.xlane.f32.xlu0 %v130
    %v137 = vpop.xlane.xlu0 %136
    %138 = vadd.xlane.f32.xlu0 %v131
    %v139 = vpop.xlane.xlu0 %138
    %v140 = vmul.f32 %v133, %v119
    %v141 = vmul.f32 %v135, %v119
    %v142 = vmul.f32 %v137, %v119
    %v143 = vmul.f32 %v139, %v119
    %v144 = vadd.f32 %v140, 1e-05
    %v145 = vadd.f32 %v141, 1e-05
    %v146 = vadd.f32 %v142, 1e-05
    %v147 = vadd.f32 %v143, 1e-05
    %v148 = vrsqrt.pop %v144
    %v149 = vrsqrt.pop %v145
    %v150 = vrsqrt.pop %v146
    %v151 = vrsqrt.pop %v147
    %v152 = vmul.f32 %v124, %v148
    %v153 = vmul.f32 %v125, %v149
    %v154 = vmul.f32 %v126, %v150
    %v155 = vmul.f32 %v127, %v151
    %v156 = vlaneseq
    %v157 = vshrl.u32 %v156, 7
    %v158 = vsub.s32 0, %v157
    %v159 = vrot.slane %v107, %v158
    %v160 = vmul.f32 %v152, %v159
    %v161 = vmul.f32 %v153, %v159
    %v162 = vmul.f32 %v154, %v159
    %v163 = vmul.f32 %v155, %v159
    %v164 = vlaneseq
    %v165 = vshrl.u32 %v164, 7
    %v166 = vsub.s32 1, %v165
    %v167 = vrot.slane %v107, %v166
    %v168 = vadd.f32 %v160, %v167
    %v169 = vadd.f32 %v161, %v167
    %v170 = vadd.f32 %v162, %v167
    %v171 = vadd.f32 %v163, %v167
    %v172 = vpack.c.bf16 %v169, %v168
    %v173 = vpack.c.bf16 %v171, %v170
    %v174 = vld [vmem:[#allocation4] sm:$0xff]
    %v175 = vld [vmem:[#allocation4 + $0x8] sm:$0xf]
    %v176 = vld [vmem:[#allocation4 + $0xc] sm:$0xff]
    %v177 = vld [vmem:[#allocation4 + $0x14] sm:$0xf]
    %v178 = vld [vmem:[#allocation4 + $0x18] sm:$0xff]
    %v179 = vld [vmem:[#allocation4 + $0x20] sm:$0xf]
    %v180 = vld [vmem:[#allocation4 + $0x24] sm:$0xff]
    %v181 = vld [vmem:[#allocation4 + $0x2c] sm:$0xf]
    %v182 = vld [vmem:[#allocation4 + $0x30] sm:$0xff]
    %v183 = vld [vmem:[#allocation4 + $0x38] sm:$0xf]
    %v184 = vld [vmem:[#allocation4 + $0x3c] sm:$0xff]
    %v185 = vld [vmem:[#allocation4 + $0x44] sm:$0xf]
    %v186 = vld [vmem:[#allocation4 + $0x48] sm:$0xff]
    %v187 = vld [vmem:[#allocation4 + $0x50] sm:$0xf]
    %v188 = vld [vmem:[#allocation4 + $0x54] sm:$0xff]
    %v189 = vld [vmem:[#allocation4 + $0x5c] sm:$0xf]
    %v190 = vld [vmem:[#allocation4 + $0x60] sm:$0xff]
    %v191 = vld [vmem:[#allocation4 + $0x68] sm:$0xf]
    %v192 = vld [vmem:[#allocation4 + $0x6c] sm:$0xff]
    %v193 = vld [vmem:[#allocation4 + $0x74] sm:$0xf]
    %v194 = vld [vmem:[#allocation4 + $0x78] sm:$0xff]
    %v195 = vld [vmem:[#allocation4 + $0x80] sm:$0xf]
    %v196 = vld [vmem:[#allocation4 + $0x84] sm:$0xff]
    %v197 = vld [vmem:[#allocation4 + $0x8c] sm:$0xf]
    %v198 = vld [vmem:[#allocation4 + $0x90] sm:$0xff]
    %v199 = vld [vmem:[#allocation4 + $0x98] sm:$0xf]
    %v200 = vld [vmem:[#allocation4 + $0x9c] sm:$0xff]
    %v201 = vld [vmem:[#allocation4 + $0xa4] sm:$0xf]
    %v202 = vld [vmem:[#allocation4 + $0xa8] sm:$0xff]
    %v203 = vld [vmem:[#allocation4 + $0xb0] sm:$0xf]
    %v204 = vld [vmem:[#allocation4 + $0xb4] sm:$0xff]
    %v205 = vld [vmem:[#allocation4 + $0xbc] sm:$0xf]
    %v206 = vlaneseq
    %v207 = vshrl.u32 %v206, 7
    %v208 = vsub.s32 6, %v207
    %v209 = vrot.slane %v107, %v208
    %v210 = vlaneseq
    %v211 = vshrl.u32 %v210, 7
    %v212 = vsub.s32 6, %v211
    %v213 = vrot.slane %v108, %v212
    %v214 = vlaneseq
    %v215 = vshrl.u32 %v214, 7
    %v216 = vsub.s32 6, %v215
    %v217 = vrot.slane %v109, %v216
    %v250 = vunpack.c.l.b16 %v174
    %v251 = vunpack.c.h.b16 %v174
    %v252 = vunpack.c.l.b16 %v175
    %v253 = vunpack.c.l.b16 %v176
    %v254 = vunpack.c.h.b16 %v176
    %v255 = vunpack.c.l.b16 %v177
    %v256 = vunpack.c.l.b16 %v178
    %v257 = vunpack.c.h.b16 %v178
    %v258 = vunpack.c.l.b16 %v179
    %v259 = vunpack.c.l.b16 %v180
    %v260 = vunpack.c.h.b16 %v180
    %v261 = vunpack.c.l.b16 %v181
    %v262 = vunpack.c.l.b16 %v182
    %v263 = vunpack.c.h.b16 %v182
    %v264 = vunpack.c.l.b16 %v183
    %v265 = vunpack.c.l.b16 %v184
    %v266 = vunpack.c.h.b16 %v184
    %v267 = vunpack.c.l.b16 %v185
    %v268 = vunpack.c.l.b16 %v186
    %v269 = vunpack.c.h.b16 %v186
    %v270 = vunpack.c.l.b16 %v187
    %v271 = vunpack.c.l.b16 %v188
    %v272 = vunpack.c.h.b16 %v188
    %v273 = vunpack.c.l.b16 %v189
    %v274 = vunpack.c.l.b16 %v190
    %v275 = vunpack.c.h.b16 %v190
    %v276 = vunpack.c.l.b16 %v191
    %v277 = vunpack.c.l.b16 %v192
    %v278 = vunpack.c.h.b16 %v192
    %v279 = vunpack.c.l.b16 %v193
    %v280 = vunpack.c.l.b16 %v194
    %v281 = vunpack.c.h.b16 %v194
    %v282 = vunpack.c.l.b16 %v195
    %v283 = vunpack.c.l.b16 %v196
    %v284 = vunpack.c.h.b16 %v196
    %v285 = vunpack.c.l.b16 %v197
    %v286 = vunpack.c.l.b16 %v198
    %v287 = vunpack.c.h.b16 %v198
    %v288 = vunpack.c.l.b16 %v199
    %v289 = vunpack.c.l.b16 %v200
    %v290 = vunpack.c.h.b16 %v200
    %v291 = vunpack.c.l.b16 %v201
    %v292 = vunpack.c.l.b16 %v202
    %v293 = vunpack.c.h.b16 %v202
    %v294 = vunpack.c.l.b16 %v203
    %v295 = vunpack.c.l.b16 %v204
    %v296 = vunpack.c.h.b16 %v204
    %v297 = vunpack.c.l.b16 %v205
    %v298 = vpack.c.b16 %v253, %v250
    %v299 = vpack.c.b16 %v254, %v251
    %v300 = vpack.c.b16 %v255, %v252
    %v301 = vpack.c.b16 %v259, %v256
    %v302 = vpack.c.b16 %v260, %v257
    %v303 = vpack.c.b16 %v261, %v258
    %v304 = vpack.c.b16 %v265, %v262
    %v305 = vpack.c.b16 %v266, %v263
    %v306 = vpack.c.b16 %v267, %v264
    %v307 = vpack.c.b16 %v271, %v268
    %v308 = vpack.c.b16 %v272, %v269
    %v309 = vpack.c.b16 %v273, %v270
    %v310 = vpack.c.b16 %v277, %v274
    %v311 = vpack.c.b16 %v278, %v275
    %v312 = vpack.c.b16 %v279, %v276
    %v313 = vpack.c.b16 %v283, %v280
    %v314 = vpack.c.b16 %v284, %v281
    %v315 = vpack.c.b16 %v285, %v282
    %v316 = vpack.c.b16 %v289, %v286
    %v317 = vpack.c.b16 %v290, %v287
    %v318 = vpack.c.b16 %v291, %v288
    %v319 = vpack.c.b16 %v295, %v292
    %v320 = vpack.c.b16 %v296, %v293
    %v321 = vpack.c.b16 %v297, %v294
    %346 = vmatprep.subr.bf16.mxu0 %v320
    %347 = vmatpush1.bf16.msra.mxu0 %v319
    %348 = vmatprep.subr.bf16.mxu0 %v317
    %349 = vmatpush1.bf16.msra.mxu0 %v316
    %350 = vmatprep.subr.bf16.mxu0 %v314
    %351 = vmatpush1.bf16.msra.mxu0 %v313
    %352 = vmatprep.subr.bf16.mxu0 %v311
    %353 = vmatpush1.bf16.msra.mxu0 %v310
    %354 = vmatprep.subr.bf16.mxu0 %v308
    %355 = vmatpush1.bf16.msra.mxu0 %v307
    %356 = vmatprep.subr.bf16.mxu0 %v305
    %357 = vmatpush1.bf16.msra.mxu0 %v304
    %358 = vmatprep.subr.bf16.mxu0 %v302
    %359 = vmatpush1.bf16.msra.mxu0 %v301
    %360 = vmatprep.subr.bf16.mxu0 %v299
    %361 = vmatpush1.bf16.msra.mxu0 %v298
    %362 = vmatprep.subr.bf16.mxu0 0
    %363 = vmatpush2.bf16.msra.mxu0 0
    %364 = vmatprep.subr.bf16.mxu0 0
    %365 = vmatpush2.bf16.msra.mxu0 0
    %366 = vmatprep.subr.bf16.mxu0 0
    %367 = vmatpush2.bf16.msra.mxu0 0
    %368 = vmatprep.subr.bf16.mxu0 0
    %369 = vmatpush2.bf16.msra.mxu0 0
    %370 = vmatprep.subr.bf16.mxu0 0
    %371 = vmatpush2.bf16.msra.mxu0 0
    %372 = vmatprep.subr.bf16.mxu0 0
    %373 = vmatpush2.bf16.msra.mxu0 0
    %374 = vmatprep.subr.bf16.mxu0 0
    %375 = vmatpush2.bf16.msra.mxu0 0
    %376 = vmatprep.subr.bf16.mxu0 0
    %377 = vmatpush2.bf16.msra.mxu0 0
    %378 = vmatprep.mubr.bf16.mxu0 0
    %379 = vmatmul.mubr.bf16.gmra.mxu0 %v172
    %v380 = vpop.f32.mrf.mxu0
    %v381 = vadd.f32 %v209, %v380
    %v382 = vpop.f32.mrf.mxu0
    %v383 = vadd.f32 %v213, %v382
    %v384 = vpop.f32.mrf.mxu0
    %v385 = vadd.f32 %v209, %v384
    %v386 = vpop.f32.mrf.mxu0
    %v387 = vadd.f32 %v213, %v386
    %388 = vmatprep.mubr.bf16.mxu0 0
    %389 = vmatmul.mubr.bf16.gmra.mxu0 %v173
    %v390 = vpop.f32.mrf.mxu0
    %v391 = vadd.f32 %v209, %v390
    %v392 = vpop.f32.mrf.mxu0
    %v393 = vadd.f32 %v213, %v392
    %v394 = vpop.f32.mrf.mxu0
    %v395 = vadd.f32 %v209, %v394
    %v396 = vpop.f32.mrf.mxu0
    %v397 = vadd.f32 %v213, %v396
    %398 = vdwg.mxu0
    %399 = vmatprep.subr.bf16.mxu0 0
    %400 = vmatpush1.bf16.msra.mxu0 %v321
    %401 = vmatprep.subr.bf16.mxu0 0
    %402 = vmatpush1.bf16.msra.mxu0 %v318
    %403 = vmatprep.subr.bf16.mxu0 0
    %404 = vmatpush1.bf16.msra.mxu0 %v315
    %405 = vmatprep.subr.bf16.mxu0 0
    %406 = vmatpush1.bf16.msra.mxu0 %v312
    %407 = vmatprep.subr.bf16.mxu0 0
    %408 = vmatpush1.bf16.msra.mxu0 %v309
    %409 = vmatprep.subr.bf16.mxu0 0
    %410 = vmatpush1.bf16.msra.mxu0 %v306
    %411 = vmatprep.subr.bf16.mxu0 0
    %412 = vmatpush1.bf16.msra.mxu0 %v303
    %413 = vmatprep.subr.bf16.mxu0 0
    %414 = vmatpush1.bf16.msra.mxu0 %v300
    %415 = vmatprep.subr.bf16.mxu0 0
    %416 = vmatpush2.bf16.msra.mxu0 0
    %417 = vmatprep.subr.bf16.mxu0 0
    %418 = vmatpush2.bf16.msra.mxu0 0
    %419 = vmatprep.subr.bf16.mxu0 0
    %420 = vmatpush2.bf16.msra.mxu0 0
    %421 = vmatprep.subr.bf16.mxu0 0
    %422 = vmatpush2.bf16.msra.mxu0 0
    %423 = vmatprep.subr.bf16.mxu0 0
    %424 = vmatpush2.bf16.msra.mxu0 0
    %425 = vmatprep.subr.bf16.mxu0 0
    %426 = vmatpush2.bf16.msra.mxu0 0
    %427 = vmatprep.subr.bf16.mxu0 0
    %428 = vmatpush2.bf16.msra.mxu0 0
    %429 = vmatprep.subr.bf16.mxu0 0
    %430 = vmatpush2.bf16.msra.mxu0 0
    %431 = vmatprep.mubr.bf16.mxu0 0
    %432 = vmatmul.mubr.bf16.gmra.mxu0 %v172
    %v433 = vpop.f32.mrf.mxu0
    %v434 = vadd.f32 %v217, %v433
    %v435 = vpop.f32.mrf.mxu0
    %v436 = vpop.f32.mrf.mxu0
    %v437 = vadd.f32 %v217, %v436
    %v438 = vpop.f32.mrf.mxu0
    %439 = vmatprep.mubr.bf16.mxu0 0
    %440 = vmatmul.mubr.bf16.gmra.mxu0 %v173
    %v441 = vpop.f32.mrf.mxu0
    %v442 = vadd.f32 %v217, %v441
    %v443 = vpop.f32.mrf.mxu0
    %v444 = vpop.f32.mrf.mxu0
    %v445 = vadd.f32 %v217, %v444
    %v446 = vpop.f32.mrf.mxu0
    %447 = vdwg.mxu0
    %452 = vrot.lane.b32.xlu0 %v381, 64
    %v453 = vpop.permute.xlu0 %452
    %454 = vrot.lane.b32.xlu0 %v385, 64
    %v455 = vpop.permute.xlu0 %454
    %456 = vrot.lane.b32.xlu0 %v391, 64
    %v457 = vpop.permute.xlu0 %456
    %458 = vrot.lane.b32.xlu0 %v395, 64
    %v459 = vpop.permute.xlu0 %458
    %468 = vrot.lane.b32.xlu0 %v383, 64
    %v469 = vpop.permute.xlu0 %468
    %470 = vrot.lane.b32.xlu0 %v387, 64
    %v471 = vpop.permute.xlu0 %470
    %472 = vrot.lane.b32.xlu0 %v393, 64
    %v473 = vpop.permute.xlu0 %472
    %474 = vrot.lane.b32.xlu0 %v397, 64
    %v475 = vpop.permute.xlu0 %474
    %484 = vrot.lane.b32.xlu0 %v434, 64
    %v485 = vpop.permute.xlu0 %484
    %486 = vrot.lane.b32.xlu0 %v437, 64
    %v487 = vpop.permute.xlu0 %486
    %488 = vrot.lane.b32.xlu0 %v442, 64
    %v489 = vpop.permute.xlu0 %488
    %490 = vrot.lane.b32.xlu0 %v445, 64
    %v491 = vpop.permute.xlu0 %490
    %v496 = vpack.c.bf16 %v385, %v381
    %v497 = vpack.c.bf16 %v395, %v391
    %v498 = vpack.c.bf16 %v455, %v453
    %v499 = vpack.c.bf16 %v459, %v457
    %v500 = vpack.c.bf16 %v387, %v383
    %v501 = vpack.c.bf16 %v397, %v393
    %v502 = vpack.c.bf16 %v471, %v469
    %v503 = vpack.c.bf16 %v475, %v473
    %vm504 = vcmask 523264
    %v506 = vsel %vm504, %v496, 0
    %v509 = vsel %vm504, %v497, 0
    %v512 = vsel %vm504, %v498, 0
    %v515 = vsel %vm504, %v499, 0
    %v518 = vsel %vm504, %v500, 0
    %v521 = vsel %vm504, %v501, 0
    %v524 = vsel %vm504, %v502, 0
    %v527 = vsel %vm504, %v503, 0
    %529 = vmatprep.subr.bf16.mxu0 0
    %530 = vmatpush1.bf16.xpose.msra.mxu0 0
    %531 = vmatprep.subr.bf16.mxu0 0
    %532 = vmatpush1.bf16.xpose.msra.mxu0 0
    %533 = vmatprep.subr.bf16.mxu0 0
    %534 = vmatpush1.bf16.xpose.msra.mxu0 0
    %535 = vmatprep.subr.bf16.mxu0 0
    %536 = vmatpush1.bf16.xpose.msra.mxu0 0
    %537 = vmatprep.subr.bf16.mxu0 0
    %538 = vmatpush1.bf16.xpose.msra.mxu0 %v527
    %539 = vmatprep.subr.bf16.mxu0 0
    %540 = vmatpush1.bf16.xpose.msra.mxu0 %v524
    %541 = vmatprep.subr.bf16.mxu0 0
    %542 = vmatpush1.bf16.xpose.msra.mxu0 %v521
    %543 = vmatprep.subr.bf16.mxu0 0
    %544 = vmatpush1.bf16.xpose.msra.mxu0 %v518
    %545 = vmatprep.subr.bf16.mxu0 0
    %546 = vmatpush2.bf16.xpose.msra.mxu0 0
    %547 = vmatprep.subr.bf16.mxu0 0
    %548 = vmatpush2.bf16.xpose.msra.mxu0 0
    %549 = vmatprep.subr.bf16.mxu0 0
    %550 = vmatpush2.bf16.xpose.msra.mxu0 0
    %551 = vmatprep.subr.bf16.mxu0 0
    %552 = vmatpush2.bf16.xpose.msra.mxu0 0
    %553 = vmatprep.subr.bf16.mxu0 0
    %554 = vmatpush2.bf16.xpose.msra.mxu0 0
    %555 = vmatprep.subr.bf16.mxu0 0
    %556 = vmatpush2.bf16.xpose.msra.mxu0 0
    %557 = vmatprep.subr.bf16.mxu0 0
    %558 = vmatpush2.bf16.xpose.msra.mxu0 0
    %559 = vmatprep.subr.bf16.mxu0 0
    %560 = vmatpush2.bf16.xpose.msra.mxu0 0
    %561 = vmatprep.mubr.bf16.mxu0 0
    %562 = vmatmul.mubr.bf16.gmra.mxu0 %v506
    %v563 = vpop.f32.mrf.mxu0
    %v564 = vadd.f32 %v99, %v563
    %v565 = vpop.f32.mrf.mxu0
    %v566 = vpop.f32.mrf.mxu0
    %v567 = vadd.f32 %v100, %v566
    %v568 = vpop.f32.mrf.mxu0
    %569 = vmatprep.mubr.bf16.mxu0 0
    %570 = vmatmul.mubr.bf16.gmra.mxu0 %v509
    %v571 = vpop.f32.mrf.mxu0
    %v572 = vadd.f32 %v101, %v571
    %v573 = vpop.f32.mrf.mxu0
    %v574 = vpop.f32.mrf.mxu0
    %v575 = vadd.f32 %v102, %v574
    %v576 = vpop.f32.mrf.mxu0
    %577 = vmatprep.mubr.bf16.mxu0 0
    %578 = vmatmul.mubr.bf16.gmra.mxu0 %v512
    %v579 = vpop.f32.mrf.mxu0
    %v580 = vadd.f32 %v103, %v579
    %v581 = vpop.f32.mrf.mxu0
    %v582 = vpop.f32.mrf.mxu0
    %v583 = vadd.f32 %v104, %v582
    %v584 = vpop.f32.mrf.mxu0
    %585 = vmatprep.mubr.bf16.mxu0 0
    %586 = vmatmul.mubr.bf16.gmra.mxu0 %v515
    %v587 = vpop.f32.mrf.mxu0
    %v588 = vadd.f32 %v105, %v587
    %v589 = vpop.f32.mrf.mxu0
    %v590 = vpop.f32.mrf.mxu0
    %v591 = vadd.f32 %v106, %v590
    %v592 = vpop.f32.mrf.mxu0
    %593 = vdwg.mxu0
    %v594 = vsel %vm504, %v564, -inf
    %595 = vmax.xlane.f32.xlu0 %v594
    %v596 = vpop.xlane.xlu0 %595
    %v597 = vsel %vm504, %v567, -inf
    %598 = vmax.xlane.f32.xlu0 %v597
    %v599 = vpop.xlane.xlu0 %598
    %v600 = vsel %vm504, %v572, -inf
    %601 = vmax.xlane.f32.xlu0 %v600
    %v602 = vpop.xlane.xlu0 %601
    %v603 = vsel %vm504, %v575, -inf
    %604 = vmax.xlane.f32.xlu0 %v603
    %v605 = vpop.xlane.xlu0 %604
    %v606 = vsel %vm504, %v580, -inf
    %607 = vmax.xlane.f32.xlu0 %v606
    %v608 = vpop.xlane.xlu0 %607
    %v609 = vsel %vm504, %v583, -inf
    %610 = vmax.xlane.f32.xlu0 %v609
    %v611 = vpop.xlane.xlu0 %610
    %v612 = vsel %vm504, %v588, -inf
    %613 = vmax.xlane.f32.xlu0 %v612
    %v614 = vpop.xlane.xlu0 %613
    %v615 = vsel %vm504, %v591, -inf
    %616 = vmax.xlane.f32.xlu0 %v615
    %v617 = vpop.xlane.xlu0 %616
    %v618 = vsub.f32 %v564, %v596
    %v619 = vsub.f32 %v567, %v599
    %v620 = vsub.f32 %v572, %v602
    %v621 = vsub.f32 %v575, %v605
    %v622 = vsub.f32 %v580, %v608
    %v623 = vsub.f32 %v583, %v611
    %v624 = vsub.f32 %v588, %v614
    %v625 = vsub.f32 %v591, %v617
    %v626 = vmul.f32 %v618, 1.442695
    %v627 = vpow.pop %v626
    %v628 = vmul.f32 %v619, 1.442695
    %v629 = vpow.pop %v628
    %v630 = vmul.f32 %v620, 1.442695
    %v631 = vpow.pop %v630
    %v632 = vmul.f32 %v621, 1.442695
    %v633 = vpow.pop %v632
    %v634 = vmul.f32 %v622, 1.442695
    %v635 = vpow.pop %v634
    %v636 = vmul.f32 %v623, 1.442695
    %v637 = vpow.pop %v636
    %v638 = vmul.f32 %v624, 1.442695
    %v639 = vpow.pop %v638
    %v640 = vmul.f32 %v625, 1.442695
    %v641 = vpow.pop %v640
    %v642 = vsel %vm504, %v627, 0.0
    %643 = vadd.xlane.f32.xlu0 %v642
    %v644 = vpop.xlane.xlu0 %643
    %v645 = vsel %vm504, %v629, 0.0
    %646 = vadd.xlane.f32.xlu0 %v645
    %v647 = vpop.xlane.xlu0 %646
    %v648 = vsel %vm504, %v631, 0.0
    %649 = vadd.xlane.f32.xlu0 %v648
    %v650 = vpop.xlane.xlu0 %649
    %v651 = vsel %vm504, %v633, 0.0
    %652 = vadd.xlane.f32.xlu0 %v651
    %v653 = vpop.xlane.xlu0 %652
    %v654 = vsel %vm504, %v635, 0.0
    %655 = vadd.xlane.f32.xlu0 %v654
    %v656 = vpop.xlane.xlu0 %655
    %v657 = vsel %vm504, %v637, 0.0
    %658 = vadd.xlane.f32.xlu0 %v657
    %v659 = vpop.xlane.xlu0 %658
    %v660 = vsel %vm504, %v639, 0.0
    %661 = vadd.xlane.f32.xlu0 %v660
    %v662 = vpop.xlane.xlu0 %661
    %v663 = vsel %vm504, %v641, 0.0
    %664 = vadd.xlane.f32.xlu0 %v663
    %v665 = vpop.xlane.xlu0 %664
    %v666 = vrcp.pop %v644
    %v667 = vrcp.pop %v647
    %v668 = vrcp.pop %v650
    %v669 = vrcp.pop %v653
    %v670 = vrcp.pop %v656
    %v671 = vrcp.pop %v659
    %v672 = vrcp.pop %v662
    %v673 = vrcp.pop %v665
    %v674 = vmul.f32 %v627, %v666
    %v675 = vmul.f32 %v629, %v667
    %v676 = vmul.f32 %v631, %v668
    %v677 = vmul.f32 %v633, %v669
    %v678 = vmul.f32 %v635, %v670
    %v679 = vmul.f32 %v637, %v671
    %v680 = vmul.f32 %v639, %v672
    %v681 = vmul.f32 %v641, %v673
    %v682 = vpack.c.bf16 %v675, %v674
    %v683 = vpack.c.bf16 %v677, %v676
    %v684 = vpack.c.bf16 %v679, %v678
    %v685 = vpack.c.bf16 %v681, %v680
    %v686 = vpack.c.bf16 %v437, %v434
    %v687 = vpack.c.bf16 %v445, %v442
    %v688 = vpack.c.bf16 %v487, %v485
    %v689 = vpack.c.bf16 %v491, %v489
    %v691 = vsel %vm504, %v682, 0
    %v694 = vsel %vm504, %v683, 0
    %v697 = vsel %vm504, %v684, 0
    %v700 = vsel %vm504, %v685, 0
    %702 = vmatprep.subr.bf16.mxu0 0
    %703 = vmatpush1.bf16.msra.mxu0 0
    %704 = vmatprep.subr.bf16.mxu0 0
    %705 = vmatpush1.bf16.msra.mxu0 0
    %706 = vmatprep.subr.bf16.mxu0 0
    %707 = vmatpush1.bf16.msra.mxu0 0
    %708 = vmatprep.subr.bf16.mxu0 0
    %709 = vmatpush1.bf16.msra.mxu0 0
    %710 = vmatprep.subr.bf16.mxu0 0
    %711 = vmatpush1.bf16.msra.mxu0 %v689
    %712 = vmatprep.subr.bf16.mxu0 0
    %713 = vmatpush1.bf16.msra.mxu0 %v688
    %714 = vmatprep.subr.bf16.mxu0 0
    %715 = vmatpush1.bf16.msra.mxu0 %v687
    %716 = vmatprep.subr.bf16.mxu0 0
    %717 = vmatpush1.bf16.msra.mxu0 %v686
    %718 = vmatprep.subr.bf16.mxu0 0
    %719 = vmatpush2.bf16.msra.mxu0 0
    %720 = vmatprep.subr.bf16.mxu0 0
    %721 = vmatpush2.bf16.msra.mxu0 0
    %722 = vmatprep.subr.bf16.mxu0 0
    %723 = vmatpush2.bf16.msra.mxu0 0
    %724 = vmatprep.subr.bf16.mxu0 0
    %725 = vmatpush2.bf16.msra.mxu0 0
    %726 = vmatprep.subr.bf16.mxu0 0
    %727 = vmatpush2.bf16.msra.mxu0 0
    %728 = vmatprep.subr.bf16.mxu0 0
    %729 = vmatpush2.bf16.msra.mxu0 0
    %730 = vmatprep.subr.bf16.mxu0 0
    %731 = vmatpush2.bf16.msra.mxu0 0
    %732 = vmatprep.subr.bf16.mxu0 0
    %733 = vmatpush2.bf16.msra.mxu0 0
    %734 = vmatprep.mubr.bf16.mxu0 0
    %735 = vmatmul.mubr.bf16.gmra.mxu0 %v691
    %v736 = vpop.f32.mrf.mxu0
    %v737 = vadd.f32 0.0, %v736
    %v738 = vpop.f32.mrf.mxu0
    %v739 = vpop.f32.mrf.mxu0
    %v740 = vadd.f32 0.0, %v739
    %v741 = vpop.f32.mrf.mxu0
    %742 = vmatprep.mubr.bf16.mxu0 0
    %743 = vmatmul.mubr.bf16.gmra.mxu0 %v694
    %v744 = vpop.f32.mrf.mxu0
    %v745 = vadd.f32 0.0, %v744
    %v746 = vpop.f32.mrf.mxu0
    %v747 = vpop.f32.mrf.mxu0
    %v748 = vadd.f32 0.0, %v747
    %v749 = vpop.f32.mrf.mxu0
    %750 = vmatprep.mubr.bf16.mxu0 0
    %751 = vmatmul.mubr.bf16.gmra.mxu0 %v697
    %v752 = vpop.f32.mrf.mxu0
    %v753 = vadd.f32 0.0, %v752
    %v754 = vpop.f32.mrf.mxu0
    %v755 = vpop.f32.mrf.mxu0
    %v756 = vadd.f32 0.0, %v755
    %v757 = vpop.f32.mrf.mxu0
    %758 = vmatprep.mubr.bf16.mxu0 0
    %759 = vmatmul.mubr.bf16.gmra.mxu0 %v700
    %v760 = vpop.f32.mrf.mxu0
    %v761 = vadd.f32 0.0, %v760
    %v762 = vpop.f32.mrf.mxu0
    %v763 = vpop.f32.mrf.mxu0
    %v764 = vadd.f32 0.0, %v763
    %v765 = vpop.f32.mrf.mxu0
    %766 = vdwg.mxu0
    %771 = vrot.lane.b32.xlu0 %v753, 64
    %v772 = vpop.permute.xlu0 %771
    %773 = vrot.lane.b32.xlu0 %v756, 64
    %v774 = vpop.permute.xlu0 %773
    %775 = vrot.lane.b32.xlu0 %v761, 64
    %v776 = vpop.permute.xlu0 %775
    %777 = vrot.lane.b32.xlu0 %v764, 64
    %v778 = vpop.permute.xlu0 %777
    %v783 = vsel %vm504, %v737, %v772
    %v784 = vsel %vm504, %v740, %v774
    %v785 = vsel %vm504, %v745, %v776
    %v786 = vsel %vm504, %v748, %v778
    %v787 = vpack.c.bf16 %v784, %v783
    %v788 = vpack.c.bf16 %v786, %v785
    %v789 = vld [vmem:[#allocation6] sm:$0xf]
    %v790 = vld [vmem:[#allocation6 + $0x4] sm:$0xf]
    %v791 = vld [vmem:[#allocation6 + $0x8] sm:$0xf]
    %v792 = vld [vmem:[#allocation6 + $0xc] sm:$0xf]
    %v793 = vld [vmem:[#allocation6 + $0x10] sm:$0xf]
    %v794 = vld [vmem:[#allocation6 + $0x14] sm:$0xf]
    %v795 = vld [vmem:[#allocation6 + $0x18] sm:$0xf]
    %v796 = vld [vmem:[#allocation6 + $0x1c] sm:$0xf]
    %v797 = vld [vmem:[#allocation6 + $0x20] sm:$0xf]
    %v798 = vld [vmem:[#allocation6 + $0x24] sm:$0xf]
    %v799 = vld [vmem:[#allocation6 + $0x28] sm:$0xf]
    %v800 = vld [vmem:[#allocation6 + $0x2c] sm:$0xf]
    %v801 = vld [vmem:[#allocation6 + $0x30] sm:$0xf]
    %v802 = vld [vmem:[#allocation6 + $0x34] sm:$0xf]
    %v803 = vld [vmem:[#allocation6 + $0x38] sm:$0xf]
    %v804 = vld [vmem:[#allocation6 + $0x3c] sm:$0xf]
    %v805 = vlaneseq
    %v806 = vshrl.u32 %v805, 7
    %v807 = vsub.s32 4, %v806
    %v808 = vrot.slane %v107, %v807
    %v825 = vunpack.c.l.b16 %v789
    %v826 = vunpack.c.l.b16 %v790
    %v827 = vunpack.c.l.b16 %v791
    %v828 = vunpack.c.l.b16 %v792
    %v829 = vunpack.c.l.b16 %v793
    %v830 = vunpack.c.l.b16 %v794
    %v831 = vunpack.c.l.b16 %v795
    %v832 = vunpack.c.l.b16 %v796
    %v833 = vunpack.c.l.b16 %v797
    %v834 = vunpack.c.l.b16 %v798
    %v835 = vunpack.c.l.b16 %v799
    %v836 = vunpack.c.l.b16 %v800
    %v837 = vunpack.c.l.b16 %v801
    %v838 = vunpack.c.l.b16 %v802
    %v839 = vunpack.c.l.b16 %v803
    %v840 = vunpack.c.l.b16 %v804
    %v841 = vpack.c.b16 %v826, %v825
    %v842 = vpack.c.b16 %v828, %v827
    %v843 = vpack.c.b16 %v830, %v829
    %v844 = vpack.c.b16 %v832, %v831
    %v845 = vpack.c.b16 %v834, %v833
    %v846 = vpack.c.b16 %v836, %v835
    %v847 = vpack.c.b16 %v838, %v837
    %v848 = vpack.c.b16 %v840, %v839
    %857 = vmatprep.subr.bf16.mxu0 0
    %858 = vmatpush1.bf16.msra.mxu0 %v848
    %859 = vmatprep.subr.bf16.mxu0 0
    %860 = vmatpush1.bf16.msra.mxu0 %v847
    %861 = vmatprep.subr.bf16.mxu0 0
    %862 = vmatpush1.bf16.msra.mxu0 %v846
    %863 = vmatprep.subr.bf16.mxu0 0
    %864 = vmatpush1.bf16.msra.mxu0 %v845
    %865 = vmatprep.subr.bf16.mxu0 0
    %866 = vmatpush1.bf16.msra.mxu0 %v844
    %867 = vmatprep.subr.bf16.mxu0 0
    %868 = vmatpush1.bf16.msra.mxu0 %v843
    %869 = vmatprep.subr.bf16.mxu0 0
    %870 = vmatpush1.bf16.msra.mxu0 %v842
    %871 = vmatprep.subr.bf16.mxu0 0
    %872 = vmatpush1.bf16.msra.mxu0 %v841
    %873 = vmatprep.subr.bf16.mxu0 0
    %874 = vmatpush2.bf16.msra.mxu0 0
    %875 = vmatprep.subr.bf16.mxu0 0
    %876 = vmatpush2.bf16.msra.mxu0 0
    %877 = vmatprep.subr.bf16.mxu0 0
    %878 = vmatpush2.bf16.msra.mxu0 0
    %879 = vmatprep.subr.bf16.mxu0 0
    %880 = vmatpush2.bf16.msra.mxu0 0
    %881 = vmatprep.subr.bf16.mxu0 0
    %882 = vmatpush2.bf16.msra.mxu0 0
    %883 = vmatprep.subr.bf16.mxu0 0
    %884 = vmatpush2.bf16.msra.mxu0 0
    %885 = vmatprep.subr.bf16.mxu0 0
    %886 = vmatpush2.bf16.msra.mxu0 0
    %887 = vmatprep.subr.bf16.mxu0 0
    %888 = vmatpush2.bf16.msra.mxu0 0
    %889 = vmatprep.mubr.bf16.mxu0 0
    %890 = vmatmul.mubr.bf16.gmra.mxu0 %v787
    %v891 = vpop.f32.mrf.mxu0
    %v892 = vadd.f32 %v808, %v891
    %v893 = vpop.f32.mrf.mxu0
    %v894 = vpop.f32.mrf.mxu0
    %v895 = vadd.f32 %v808, %v894
    %v896 = vpop.f32.mrf.mxu0
    %897 = vmatprep.mubr.bf16.mxu0 0
    %898 = vmatmul.mubr.bf16.gmra.mxu0 %v788
    %v899 = vpop.f32.mrf.mxu0
    %v900 = vadd.f32 %v808, %v899
    %v901 = vpop.f32.mrf.mxu0
    %v902 = vpop.f32.mrf.mxu0
    %v903 = vadd.f32 %v808, %v902
    %v904 = vpop.f32.mrf.mxu0
    %905 = vdwg.mxu0
    %v906 = vadd.f32 %v95, %v892
    %v907 = vadd.f32 %v96, %v895
    %v908 = vadd.f32 %v97, %v900
    %v909 = vadd.f32 %v98, %v903
    %910 = vadd.xlane.f32.xlu0 %v906
    %v911 = vpop.xlane.xlu0 %910
    %912 = vadd.xlane.f32.xlu0 %v907
    %v913 = vpop.xlane.xlu0 %912
    %914 = vadd.xlane.f32.xlu0 %v908
    %v915 = vpop.xlane.xlu0 %914
    %916 = vadd.xlane.f32.xlu0 %v909
    %v917 = vpop.xlane.xlu0 %916
    %v918 = vmul.f32 %v911, %v119
    %v919 = vmul.f32 %v913, %v119
    %v920 = vmul.f32 %v915, %v119
    %v921 = vmul.f32 %v917, %v119
    %v922 = vsub.f32 %v906, %v918
    %v923 = vsub.f32 %v907, %v919
    %v924 = vsub.f32 %v908, %v920
    %v925 = vsub.f32 %v909, %v921
    %v926 = vmul.f32 %v922, %v922
    %v927 = vmul.f32 %v923, %v923
    %v928 = vmul.f32 %v924, %v924
    %v929 = vmul.f32 %v925, %v925
    %930 = vadd.xlane.f32.xlu0 %v926
    %v931 = vpop.xlane.xlu0 %930
    %932 = vadd.xlane.f32.xlu0 %v927
    %v933 = vpop.xlane.xlu0 %932
    %934 = vadd.xlane.f32.xlu0 %v928
    %v935 = vpop.xlane.xlu0 %934
    %936 = vadd.xlane.f32.xlu0 %v929
    %v937 = vpop.xlane.xlu0 %936
    %v938 = vmul.f32 %v931, %v119
    %v939 = vmul.f32 %v933, %v119
    %v940 = vmul.f32 %v935, %v119
    %v941 = vmul.f32 %v937, %v119
    %v942 = vadd.f32 %v938, 1e-05
    %v943 = vadd.f32 %v939, 1e-05
    %v944 = vadd.f32 %v940, 1e-05
    %v945 = vadd.f32 %v941, 1e-05
    %v946 = vrsqrt.pop %v942
    %v947 = vrsqrt.pop %v943
    %v948 = vrsqrt.pop %v944
    %v949 = vrsqrt.pop %v945
    %v950 = vmul.f32 %v922, %v946
    %v951 = vmul.f32 %v923, %v947
    %v952 = vmul.f32 %v924, %v948
    %v953 = vmul.f32 %v925, %v949
    %v954 = vlaneseq
    %v955 = vshrl.u32 %v954, 7
    %v956 = vsub.s32 2, %v955
    %v957 = vrot.slane %v107, %v956
    %v958 = vmul.f32 %v950, %v957
    %v959 = vmul.f32 %v951, %v957
    %v960 = vmul.f32 %v952, %v957
    %v961 = vmul.f32 %v953, %v957
    %v962 = vlaneseq
    %v963 = vshrl.u32 %v962, 7
    %v964 = vsub.s32 3, %v963
    %v965 = vrot.slane %v107, %v964
    %v966 = vadd.f32 %v958, %v965
    %v967 = vadd.f32 %v959, %v965
    %v968 = vadd.f32 %v960, %v965
    %v969 = vadd.f32 %v961, %v965
    %v970 = vpack.c.bf16 %v967, %v966
    %v971 = vpack.c.bf16 %v969, %v968
    %v972 = vld [vmem:[#allocation7] sm:$0xff]
    %v973 = vld [vmem:[#allocation7 + $0x8] sm:$0xff]
    %v974 = vld [vmem:[#allocation7 + $0x10] sm:$0xff]
    %v975 = vld [vmem:[#allocation7 + $0x18] sm:$0xff]
    %v976 = vld [vmem:[#allocation7 + $0x20] sm:$0xff]
    %v977 = vld [vmem:[#allocation7 + $0x28] sm:$0xff]
    %v978 = vld [vmem:[#allocation7 + $0x30] sm:$0xff]
    %v979 = vld [vmem:[#allocation7 + $0x38] sm:$0xff]
    %v980 = vld [vmem:[#allocation7 + $0x40] sm:$0xff]
    %v981 = vld [vmem:[#allocation7 + $0x48] sm:$0xff]
    %v982 = vld [vmem:[#allocation7 + $0x50] sm:$0xff]
    %v983 = vld [vmem:[#allocation7 + $0x58] sm:$0xff]
    %v984 = vld [vmem:[#allocation7 + $0x60] sm:$0xff]
    %v985 = vld [vmem:[#allocation7 + $0x68] sm:$0xff]
    %v986 = vld [vmem:[#allocation7 + $0x70] sm:$0xff]
    %v987 = vld [vmem:[#allocation7 + $0x78] sm:$0xff]
    %v988 = vld [vmem:[#allocation7 + $0x80] sm:$0xff]
    %v989 = vld [vmem:[#allocation7 + $0x88] sm:$0xff]
    %v990 = vld [vmem:[#allocation7 + $0x90] sm:$0xff]
    %v991 = vld [vmem:[#allocation7 + $0x98] sm:$0xff]
    %v992 = vld [vmem:[#allocation7 + $0xa0] sm:$0xff]
    %v993 = vld [vmem:[#allocation7 + $0xa8] sm:$0xff]
    %v994 = vld [vmem:[#allocation7 + $0xb0] sm:$0xff]
    %v995 = vld [vmem:[#allocation7 + $0xb8] sm:$0xff]
    %v996 = vld [vmem:[#allocation7 + $0xc0] sm:$0xff]
    %v997 = vld [vmem:[#allocation7 + $0xc8] sm:$0xff]
    %v998 = vld [vmem:[#allocation7 + $0xd0] sm:$0xff]
    %v999 = vld [vmem:[#allocation7 + $0xd8] sm:$0xff]
    %v1000 = vld [vmem:[#allocation7 + $0xe0] sm:$0xff]
    %v1001 = vld [vmem:[#allocation7 + $0xe8] sm:$0xff]
    %v1002 = vld [vmem:[#allocation7 + $0xf0] sm:$0xff]
    %v1003 = vld [vmem:[#allocation7 + $0xf8] sm:$0xff]
    %v1004 = vlaneseq
    %v1005 = vshrl.u32 %v1004, 7
    %v1006 = vsub.s32 7, %v1005
    %v1007 = vrot.slane %v107, %v1006
    %v1008 = vlaneseq
    %v1009 = vshrl.u32 %v1008, 7
    %v1010 = vsub.s32 7, %v1009
    %v1011 = vrot.slane %v108, %v1010
    %v1012 = vlaneseq
    %v1013 = vshrl.u32 %v1012, 7
    %v1014 = vsub.s32 7, %v1013
    %v1015 = vrot.slane %v109, %v1014
    %v1016 = vlaneseq
    %v1017 = vshrl.u32 %v1016, 7
    %v1018 = vsub.s32 7, %v1017
    %v1019 = vrot.slane %v110, %v1018
    %v1052 = vunpack.c.l.b16 %v972
    %v1053 = vunpack.c.h.b16 %v972
    %v1054 = vunpack.c.l.b16 %v973
    %v1055 = vunpack.c.h.b16 %v973
    %v1056 = vunpack.c.l.b16 %v974
    %v1057 = vunpack.c.h.b16 %v974
    %v1058 = vunpack.c.l.b16 %v975
    %v1059 = vunpack.c.h.b16 %v975
    %v1060 = vunpack.c.l.b16 %v976
    %v1061 = vunpack.c.h.b16 %v976
    %v1062 = vunpack.c.l.b16 %v977
    %v1063 = vunpack.c.h.b16 %v977
    %v1064 = vunpack.c.l.b16 %v978
    %v1065 = vunpack.c.h.b16 %v978
    %v1066 = vunpack.c.l.b16 %v979
    %v1067 = vunpack.c.h.b16 %v979
    %v1068 = vunpack.c.l.b16 %v980
    %v1069 = vunpack.c.h.b16 %v980
    %v1070 = vunpack.c.l.b16 %v981
    %v1071 = vunpack.c.h.b16 %v981
    %v1072 = vunpack.c.l.b16 %v982
    %v1073 = vunpack.c.h.b16 %v982
    %v1074 = vunpack.c.l.b16 %v983
    %v1075 = vunpack.c.h.b16 %v983
    %v1076 = vunpack.c.l.b16 %v984
    %v1077 = vunpack.c.h.b16 %v984
    %v1078 = vunpack.c.l.b16 %v985
    %v1079 = vunpack.c.h.b16 %v985
    %v1080 = vunpack.c.l.b16 %v986
    %v1081 = vunpack.c.h.b16 %v986
    %v1082 = vunpack.c.l.b16 %v987
    %v1083 = vunpack.c.h.b16 %v987
    %v1084 = vunpack.c.l.b16 %v988
    %v1085 = vunpack.c.h.b16 %v988
    %v1086 = vunpack.c.l.b16 %v989
    %v1087 = vunpack.c.h.b16 %v989
    %v1088 = vunpack.c.l.b16 %v990
    %v1089 = vunpack.c.h.b16 %v990
    %v1090 = vunpack.c.l.b16 %v991
    %v1091 = vunpack.c.h.b16 %v991
    %v1092 = vunpack.c.l.b16 %v992
    %v1093 = vunpack.c.h.b16 %v992
    %v1094 = vunpack.c.l.b16 %v993
    %v1095 = vunpack.c.h.b16 %v993
    %v1096 = vunpack.c.l.b16 %v994
    %v1097 = vunpack.c.h.b16 %v994
    %v1098 = vunpack.c.l.b16 %v995
    %v1099 = vunpack.c.h.b16 %v995
    %v1100 = vunpack.c.l.b16 %v996
    %v1101 = vunpack.c.h.b16 %v996
    %v1102 = vunpack.c.l.b16 %v997
    %v1103 = vunpack.c.h.b16 %v997
    %v1104 = vunpack.c.l.b16 %v998
    %v1105 = vunpack.c.h.b16 %v998
    %v1106 = vunpack.c.l.b16 %v999
    %v1107 = vunpack.c.h.b16 %v999
    %v1108 = vunpack.c.l.b16 %v1000
    %v1109 = vunpack.c.h.b16 %v1000
    %v1110 = vunpack.c.l.b16 %v1001
    %v1111 = vunpack.c.h.b16 %v1001
    %v1112 = vunpack.c.l.b16 %v1002
    %v1113 = vunpack.c.h.b16 %v1002
    %v1114 = vunpack.c.l.b16 %v1003
    %v1115 = vunpack.c.h.b16 %v1003
    %v1116 = vpack.c.b16 %v1056, %v1052
    %v1117 = vpack.c.b16 %v1057, %v1053
    %v1118 = vpack.c.b16 %v1058, %v1054
    %v1119 = vpack.c.b16 %v1059, %v1055
    %v1120 = vpack.c.b16 %v1064, %v1060
    %v1121 = vpack.c.b16 %v1065, %v1061
    %v1122 = vpack.c.b16 %v1066, %v1062
    %v1123 = vpack.c.b16 %v1067, %v1063
    %v1124 = vpack.c.b16 %v1072, %v1068
    %v1125 = vpack.c.b16 %v1073, %v1069
    %v1126 = vpack.c.b16 %v1074, %v1070
    %v1127 = vpack.c.b16 %v1075, %v1071
    %v1128 = vpack.c.b16 %v1080, %v1076
    %v1129 = vpack.c.b16 %v1081, %v1077
    %v1130 = vpack.c.b16 %v1082, %v1078
    %v1131 = vpack.c.b16 %v1083, %v1079
    %v1132 = vpack.c.b16 %v1088, %v1084
    %v1133 = vpack.c.b16 %v1089, %v1085
    %v1134 = vpack.c.b16 %v1090, %v1086
    %v1135 = vpack.c.b16 %v1091, %v1087
    %v1136 = vpack.c.b16 %v1096, %v1092
    %v1137 = vpack.c.b16 %v1097, %v1093
    %v1138 = vpack.c.b16 %v1098, %v1094
    %v1139 = vpack.c.b16 %v1099, %v1095
    %v1140 = vpack.c.b16 %v1104, %v1100
    %v1141 = vpack.c.b16 %v1105, %v1101
    %v1142 = vpack.c.b16 %v1106, %v1102
    %v1143 = vpack.c.b16 %v1107, %v1103
    %v1144 = vpack.c.b16 %v1112, %v1108
    %v1145 = vpack.c.b16 %v1113, %v1109
    %v1146 = vpack.c.b16 %v1114, %v1110
    %v1147 = vpack.c.b16 %v1115, %v1111
    %1180 = vmatprep.subr.bf16.mxu0 %v1145
    %1181 = vmatpush1.bf16.msra.mxu0 %v1144
    %1182 = vmatprep.subr.bf16.mxu0 %v1141
    %1183 = vmatpush1.bf16.msra.mxu0 %v1140
    %1184 = vmatprep.subr.bf16.mxu0 %v1137
    %1185 = vmatpush1.bf16.msra.mxu0 %v1136
    %1186 = vmatprep.subr.bf16.mxu0 %v1133
    %1187 = vmatpush1.bf16.msra.mxu0 %v1132
    %1188 = vmatprep.subr.bf16.mxu0 %v1129
    %1189 = vmatpush1.bf16.msra.mxu0 %v1128
    %1190 = vmatprep.subr.bf16.mxu0 %v1125
    %1191 = vmatpush1.bf16.msra.mxu0 %v1124
    %1192 = vmatprep.subr.bf16.mxu0 %v1121
    %1193 = vmatpush1.bf16.msra.mxu0 %v1120
    %1194 = vmatprep.subr.bf16.mxu0 %v1117
    %1195 = vmatpush1.bf16.msra.mxu0 %v1116
    %1196 = vmatprep.subr.bf16.mxu0 0
    %1197 = vmatpush2.bf16.msra.mxu0 0
    %1198 = vmatprep.subr.bf16.mxu0 0
    %1199 = vmatpush2.bf16.msra.mxu0 0
    %1200 = vmatprep.subr.bf16.mxu0 0
    %1201 = vmatpush2.bf16.msra.mxu0 0
    %1202 = vmatprep.subr.bf16.mxu0 0
    %1203 = vmatpush2.bf16.msra.mxu0 0
    %1204 = vmatprep.subr.bf16.mxu0 0
    %1205 = vmatpush2.bf16.msra.mxu0 0
    %1206 = vmatprep.subr.bf16.mxu0 0
    %1207 = vmatpush2.bf16.msra.mxu0 0
    %1208 = vmatprep.subr.bf16.mxu0 0
    %1209 = vmatpush2.bf16.msra.mxu0 0
    %1210 = vmatprep.subr.bf16.mxu0 0
    %1211 = vmatpush2.bf16.msra.mxu0 0
    %1212 = vmatprep.mubr.bf16.mxu0 0
    %1213 = vmatmul.mubr.bf16.gmra.mxu0 %v970
    %v1214 = vpop.f32.mrf.mxu0
    %v1215 = vadd.f32 %v1007, %v1214
    %v1216 = vpop.f32.mrf.mxu0
    %v1217 = vadd.f32 %v1011, %v1216
    %v1218 = vpop.f32.mrf.mxu0
    %v1219 = vadd.f32 %v1007, %v1218
    %v1220 = vpop.f32.mrf.mxu0
    %v1221 = vadd.f32 %v1011, %v1220
    %1222 = vmatprep.mubr.bf16.mxu0 0
    %1223 = vmatmul.mubr.bf16.gmra.mxu0 %v971
    %v1224 = vpop.f32.mrf.mxu0
    %v1225 = vadd.f32 %v1007, %v1224
    %v1226 = vpop.f32.mrf.mxu0
    %v1227 = vadd.f32 %v1011, %v1226
    %v1228 = vpop.f32.mrf.mxu0
    %v1229 = vadd.f32 %v1007, %v1228
    %v1230 = vpop.f32.mrf.mxu0
    %v1231 = vadd.f32 %v1011, %v1230
    %1232 = vdwg.mxu0
    %1233 = vmatprep.subr.bf16.mxu0 %v1147
    %1234 = vmatpush1.bf16.msra.mxu0 %v1146
    %1235 = vmatprep.subr.bf16.mxu0 %v1143
    %1236 = vmatpush1.bf16.msra.mxu0 %v1142
    %1237 = vmatprep.subr.bf16.mxu0 %v1139
    %1238 = vmatpush1.bf16.msra.mxu0 %v1138
    %1239 = vmatprep.subr.bf16.mxu0 %v1135
    %1240 = vmatpush1.bf16.msra.mxu0 %v1134
    %1241 = vmatprep.subr.bf16.mxu0 %v1131
    %1242 = vmatpush1.bf16.msra.mxu0 %v1130
    %1243 = vmatprep.subr.bf16.mxu0 %v1127
    %1244 = vmatpush1.bf16.msra.mxu0 %v1126
    %1245 = vmatprep.subr.bf16.mxu0 %v1123
    %1246 = vmatpush1.bf16.msra.mxu0 %v1122
    %1247 = vmatprep.subr.bf16.mxu0 %v1119
    %1248 = vmatpush1.bf16.msra.mxu0 %v1118
    %1249 = vmatprep.subr.bf16.mxu0 0
    %1250 = vmatpush2.bf16.msra.mxu0 0
    %1251 = vmatprep.subr.bf16.mxu0 0
    %1252 = vmatpush2.bf16.msra.mxu0 0
    %1253 = vmatprep.subr.bf16.mxu0 0
    %1254 = vmatpush2.bf16.msra.mxu0 0
    %1255 = vmatprep.subr.bf16.mxu0 0
    %1256 = vmatpush2.bf16.msra.mxu0 0
    %1257 = vmatprep.subr.bf16.mxu0 0
    %1258 = vmatpush2.bf16.msra.mxu0 0
    %1259 = vmatprep.subr.bf16.mxu0 0
    %1260 = vmatpush2.bf16.msra.mxu0 0
    %1261 = vmatprep.subr.bf16.mxu0 0
    %1262 = vmatpush2.bf16.msra.mxu0 0
    %1263 = vmatprep.subr.bf16.mxu0 0
    %1264 = vmatpush2.bf16.msra.mxu0 0
    %1265 = vmatprep.mubr.bf16.mxu0 0
    %1266 = vmatmul.mubr.bf16.gmra.mxu0 %v970
    %v1267 = vpop.f32.mrf.mxu0
    %v1268 = vadd.f32 %v1015, %v1267
    %v1269 = vpop.f32.mrf.mxu0
    %v1270 = vadd.f32 %v1019, %v1269
    %v1271 = vpop.f32.mrf.mxu0
    %v1272 = vadd.f32 %v1015, %v1271
    %v1273 = vpop.f32.mrf.mxu0
    %v1274 = vadd.f32 %v1019, %v1273
    %1275 = vmatprep.mubr.bf16.mxu0 0
    %1276 = vmatmul.mubr.bf16.gmra.mxu0 %v971
    %v1277 = vpop.f32.mrf.mxu0
    %v1278 = vadd.f32 %v1015, %v1277
    %v1279 = vpop.f32.mrf.mxu0
    %v1280 = vadd.f32 %v1019, %v1279
    %v1281 = vpop.f32.mrf.mxu0
    %v1282 = vadd.f32 %v1015, %v1281
    %v1283 = vpop.f32.mrf.mxu0
    %v1284 = vadd.f32 %v1019, %v1283
    %1285 = vdwg.mxu0
    %v1286 = vmul.f32 %v1215, %v1215
    %v1287 = vmul.f32 %v1217, %v1217
    %v1288 = vmul.f32 %v1268, %v1268
    %v1289 = vmul.f32 %v1270, %v1270
    %v1290 = vmul.f32 %v1219, %v1219
    %v1291 = vmul.f32 %v1221, %v1221
    %v1292 = vmul.f32 %v1272, %v1272
    %v1293 = vmul.f32 %v1274, %v1274
    %v1294 = vmul.f32 %v1225, %v1225
    %v1295 = vmul.f32 %v1227, %v1227
    %v1296 = vmul.f32 %v1278, %v1278
    %v1297 = vmul.f32 %v1280, %v1280
    %v1298 = vmul.f32 %v1229, %v1229
    %v1299 = vmul.f32 %v1231, %v1231
    %v1300 = vmul.f32 %v1282, %v1282
    %v1301 = vmul.f32 %v1284, %v1284
    %v1302 = vmul.f32 %v1215, %v1286
    %v1303 = vmul.f32 %v1217, %v1287
    %v1304 = vmul.f32 %v1268, %v1288
    %v1305 = vmul.f32 %v1270, %v1289
    %v1306 = vmul.f32 %v1219, %v1290
    %v1307 = vmul.f32 %v1221, %v1291
    %v1308 = vmul.f32 %v1272, %v1292
    %v1309 = vmul.f32 %v1274, %v1293
    %v1310 = vmul.f32 %v1225, %v1294
    %v1311 = vmul.f32 %v1227, %v1295
    %v1312 = vmul.f32 %v1278, %v1296
    %v1313 = vmul.f32 %v1280, %v1297
    %v1314 = vmul.f32 %v1229, %v1298
    %v1315 = vmul.f32 %v1231, %v1299
    %v1316 = vmul.f32 %v1282, %v1300
    %v1317 = vmul.f32 %v1284, %v1301
    %v1318 = vmul.f32 %v1302, 0.044715
    %v1319 = vmul.f32 %v1303, 0.044715
    %v1320 = vmul.f32 %v1304, 0.044715
    %v1321 = vmul.f32 %v1305, 0.044715
    %v1322 = vmul.f32 %v1306, 0.044715
    %v1323 = vmul.f32 %v1307, 0.044715
    %v1324 = vmul.f32 %v1308, 0.044715
    %v1325 = vmul.f32 %v1309, 0.044715
    %v1326 = vmul.f32 %v1310, 0.044715
    %v1327 = vmul.f32 %v1311, 0.044715
    %v1328 = vmul.f32 %v1312, 0.044715
    %v1329 = vmul.f32 %v1313, 0.044715
    %v1330 = vmul.f32 %v1314, 0.044715
    %v1331 = vmul.f32 %v1315, 0.044715
    %v1332 = vmul.f32 %v1316, 0.044715
    %v1333 = vmul.f32 %v1317, 0.044715
    %v1334 = vadd.f32 %v1215, %v1318
    %v1335 = vadd.f32 %v1217, %v1319
    %v1336 = vadd.f32 %v1268, %v1320
    %v1337 = vadd.f32 %v1270, %v1321
    %v1338 = vadd.f32 %v1219, %v1322
    %v1339 = vadd.f32 %v1221, %v1323
    %v1340 = vadd.f32 %v1272, %v1324
    %v1341 = vadd.f32 %v1274, %v1325
    %v1342 = vadd.f32 %v1225, %v1326
    %v1343 = vadd.f32 %v1227, %v1327
    %v1344 = vadd.f32 %v1278, %v1328
    %v1345 = vadd.f32 %v1280, %v1329
    %v1346 = vadd.f32 %v1229, %v1330
    %v1347 = vadd.f32 %v1231, %v1331
    %v1348 = vadd.f32 %v1282, %v1332
    %v1349 = vadd.f32 %v1284, %v1333
    %v1350 = vmul.f32 %v1334, 0.7978846
    %v1351 = vmul.f32 %v1335, 0.7978846
    %v1352 = vmul.f32 %v1336, 0.7978846
    %v1353 = vmul.f32 %v1337, 0.7978846
    %v1354 = vmul.f32 %v1338, 0.7978846
    %v1355 = vmul.f32 %v1339, 0.7978846
    %v1356 = vmul.f32 %v1340, 0.7978846
    %v1357 = vmul.f32 %v1341, 0.7978846
    %v1358 = vmul.f32 %v1342, 0.7978846
    %v1359 = vmul.f32 %v1343, 0.7978846
    %v1360 = vmul.f32 %v1344, 0.7978846
    %v1361 = vmul.f32 %v1345, 0.7978846
    %v1362 = vmul.f32 %v1346, 0.7978846
    %v1363 = vmul.f32 %v1347, 0.7978846
    %v1364 = vmul.f32 %v1348, 0.7978846
    %v1365 = vmul.f32 %v1349, 0.7978846
    %v1366 = vtanh.pop %v1350
    %v1367 = vtanh.pop %v1351
    %v1368 = vtanh.pop %v1352
    %v1369 = vtanh.pop %v1353
    %v1370 = vtanh.pop %v1354
    %v1371 = vtanh.pop %v1355
    %v1372 = vtanh.pop %v1356
    %v1373 = vtanh.pop %v1357
    %v1374 = vtanh.pop %v1358
    %v1375 = vtanh.pop %v1359
    %v1376 = vtanh.pop %v1360
    %v1377 = vtanh.pop %v1361
    %v1378 = vtanh.pop %v1362
    %v1379 = vtanh.pop %v1363
    %v1380 = vtanh.pop %v1364
    %v1381 = vtanh.pop %v1365
    %v1382 = vadd.f32 %v1366, 1.0
    %v1383 = vadd.f32 %v1367, 1.0
    %v1384 = vadd.f32 %v1368, 1.0
    %v1385 = vadd.f32 %v1369, 1.0
    %v1386 = vadd.f32 %v1370, 1.0
    %v1387 = vadd.f32 %v1371, 1.0
    %v1388 = vadd.f32 %v1372, 1.0
    %v1389 = vadd.f32 %v1373, 1.0
    %v1390 = vadd.f32 %v1374, 1.0
    %v1391 = vadd.f32 %v1375, 1.0
    %v1392 = vadd.f32 %v1376, 1.0
    %v1393 = vadd.f32 %v1377, 1.0
    %v1394 = vadd.f32 %v1378, 1.0
    %v1395 = vadd.f32 %v1379, 1.0
    %v1396 = vadd.f32 %v1380, 1.0
    %v1397 = vadd.f32 %v1381, 1.0
    %v1398 = vmul.f32 %v1382, 0.5
    %v1399 = vmul.f32 %v1383, 0.5
    %v1400 = vmul.f32 %v1384, 0.5
    %v1401 = vmul.f32 %v1385, 0.5
    %v1402 = vmul.f32 %v1386, 0.5
    %v1403 = vmul.f32 %v1387, 0.5
    %v1404 = vmul.f32 %v1388, 0.5
    %v1405 = vmul.f32 %v1389, 0.5
    %v1406 = vmul.f32 %v1390, 0.5
    %v1407 = vmul.f32 %v1391, 0.5
    %v1408 = vmul.f32 %v1392, 0.5
    %v1409 = vmul.f32 %v1393, 0.5
    %v1410 = vmul.f32 %v1394, 0.5
    %v1411 = vmul.f32 %v1395, 0.5
    %v1412 = vmul.f32 %v1396, 0.5
    %v1413 = vmul.f32 %v1397, 0.5
    %v1414 = vmul.f32 %v1215, %v1398
    %v1415 = vmul.f32 %v1217, %v1399
    %v1416 = vmul.f32 %v1268, %v1400
    %v1417 = vmul.f32 %v1270, %v1401
    %v1418 = vmul.f32 %v1219, %v1402
    %v1419 = vmul.f32 %v1221, %v1403
    %v1420 = vmul.f32 %v1272, %v1404
    %v1421 = vmul.f32 %v1274, %v1405
    %v1422 = vmul.f32 %v1225, %v1406
    %v1423 = vmul.f32 %v1227, %v1407
    %v1424 = vmul.f32 %v1278, %v1408
    %v1425 = vmul.f32 %v1280, %v1409
    %v1426 = vmul.f32 %v1229, %v1410
    %v1427 = vmul.f32 %v1231, %v1411
    %v1428 = vmul.f32 %v1282, %v1412
    %v1429 = vmul.f32 %v1284, %v1413
    %v1430 = vpack.c.bf16 %v1418, %v1414
    %v1431 = vpack.c.bf16 %v1419, %v1415
    %v1432 = vpack.c.bf16 %v1420, %v1416
    %v1433 = vpack.c.bf16 %v1421, %v1417
    %v1434 = vpack.c.bf16 %v1426, %v1422
    %v1435 = vpack.c.bf16 %v1427, %v1423
    %v1436 = vpack.c.bf16 %v1428, %v1424
    %v1437 = vpack.c.bf16 %v1429, %v1425
    %v1438 = vld [vmem:[#allocation9] sm:$0xf]
    %v1439 = vld [vmem:[#allocation9 + $0x4] sm:$0xf]
    %v1440 = vld [vmem:[#allocation9 + $0x8] sm:$0xf]
    %v1441 = vld [vmem:[#allocation9 + $0xc] sm:$0xf]
    %v1442 = vld [vmem:[#allocation9 + $0x10] sm:$0xf]
    %v1443 = vld [vmem:[#allocation9 + $0x14] sm:$0xf]
    %v1444 = vld [vmem:[#allocation9 + $0x18] sm:$0xf]
    %v1445 = vld [vmem:[#allocation9 + $0x1c] sm:$0xf]
    %v1446 = vld [vmem:[#allocation9 + $0x20] sm:$0xf]
    %v1447 = vld [vmem:[#allocation9 + $0x24] sm:$0xf]
    %v1448 = vld [vmem:[#allocation9 + $0x28] sm:$0xf]
    %v1449 = vld [vmem:[#allocation9 + $0x2c] sm:$0xf]
    %v1450 = vld [vmem:[#allocation9 + $0x30] sm:$0xf]
    %v1451 = vld [vmem:[#allocation9 + $0x34] sm:$0xf]
    %v1452 = vld [vmem:[#allocation9 + $0x38] sm:$0xf]
    %v1453 = vld [vmem:[#allocation9 + $0x3c] sm:$0xf]
    %v1454 = vld [vmem:[#allocation9 + $0x40] sm:$0xf]
    %v1455 = vld [vmem:[#allocation9 + $0x44] sm:$0xf]
    %v1456 = vld [vmem:[#allocation9 + $0x48] sm:$0xf]
    %v1457 = vld [vmem:[#allocation9 + $0x4c] sm:$0xf]
    %v1458 = vld [vmem:[#allocation9 + $0x50] sm:$0xf]
    %v1459 = vld [vmem:[#allocation9 + $0x54] sm:$0xf]
    %v1460 = vld [vmem:[#allocation9 + $0x58] sm:$0xf]
    %v1461 = vld [vmem:[#allocation9 + $0x5c] sm:$0xf]
    %v1462 = vld [vmem:[#allocation9 + $0x60] sm:$0xf]
    %v1463 = vld [vmem:[#allocation9 + $0x64] sm:$0xf]
    %v1464 = vld [vmem:[#allocation9 + $0x68] sm:$0xf]
    %v1465 = vld [vmem:[#allocation9 + $0x6c] sm:$0xf]
    %v1466 = vld [vmem:[#allocation9 + $0x70] sm:$0xf]
    %v1467 = vld [vmem:[#allocation9 + $0x74] sm:$0xf]
    %v1468 = vld [vmem:[#allocation9 + $0x78] sm:$0xf]
    %v1469 = vld [vmem:[#allocation9 + $0x7c] sm:$0xf]
    %v1470 = vld [vmem:[#allocation9 + $0x80] sm:$0xf]
    %v1471 = vld [vmem:[#allocation9 + $0x84] sm:$0xf]
    %v1472 = vld [vmem:[#allocation9 + $0x88] sm:$0xf]
    %v1473 = vld [vmem:[#allocation9 + $0x8c] sm:$0xf]
    %v1474 = vld [vmem:[#allocation9 + $0x90] sm:$0xf]
    %v1475 = vld [vmem:[#allocation9 + $0x94] sm:$0xf]
    %v1476 = vld [vmem:[#allocation9 + $0x98] sm:$0xf]
    %v1477 = vld [vmem:[#allocation9 + $0x9c] sm:$0xf]
    %v1478 = vld [vmem:[#allocation9 + $0xa0] sm:$0xf]
    %v1479 = vld [vmem:[#allocation9 + $0xa4] sm:$0xf]
    %v1480 = vld [vmem:[#allocation9 + $0xa8] sm:$0xf]
    %v1481 = vld [vmem:[#allocation9 + $0xac] sm:$0xf]
    %v1482 = vld [vmem:[#allocation9 + $0xb0] sm:$0xf]
    %v1483 = vld [vmem:[#allocation9 + $0xb4] sm:$0xf]
    %v1484 = vld [vmem:[#allocation9 + $0xb8] sm:$0xf]
    %v1485 = vld [vmem:[#allocation9 + $0xbc] sm:$0xf]
    %v1486 = vld [vmem:[#allocation9 + $0xc0] sm:$0xf]
    %v1487 = vld [vmem:[#allocation9 + $0xc4] sm:$0xf]
    %v1488 = vld [vmem:[#allocation9 + $0xc8] sm:$0xf]
    %v1489 = vld [vmem:[#allocation9 + $0xcc] sm:$0xf]
    %v1490 = vld [vmem:[#allocation9 + $0xd0] sm:$0xf]
    %v1491 = vld [vmem:[#allocation9 + $0xd4] sm:$0xf]
    %v1492 = vld [vmem:[#allocation9 + $0xd8] sm:$0xf]
    %v1493 = vld [vmem:[#allocation9 + $0xdc] sm:$0xf]
    %v1494 = vld [vmem:[#allocation9 + $0xe0] sm:$0xf]
    %v1495 = vld [vmem:[#allocation9 + $0xe4] sm:$0xf]
    %v1496 = vld [vmem:[#allocation9 + $0xe8] sm:$0xf]
    %v1497 = vld [vmem:[#allocation9 + $0xec] sm:$0xf]
    %v1498 = vld [vmem:[#allocation9 + $0xf0] sm:$0xf]
    %v1499 = vld [vmem:[#allocation9 + $0xf4] sm:$0xf]
    %v1500 = vld [vmem:[#allocation9 + $0xf8] sm:$0xf]
    %v1501 = vld [vmem:[#allocation9 + $0xfc] sm:$0xf]
    %v1502 = vlaneseq
    %v1503 = vshrl.u32 %v1502, 7
    %v1504 = vsub.s32 5, %v1503
    %v1505 = vrot.slane %v107, %v1504
    %v1570 = vunpack.c.l.b16 %v1438
    %v1571 = vunpack.c.l.b16 %v1439
    %v1572 = vunpack.c.l.b16 %v1440
    %v1573 = vunpack.c.l.b16 %v1441
    %v1574 = vunpack.c.l.b16 %v1442
    %v1575 = vunpack.c.l.b16 %v1443
    %v1576 = vunpack.c.l.b16 %v1444
    %v1577 = vunpack.c.l.b16 %v1445
    %v1578 = vunpack.c.l.b16 %v1446
    %v1579 = vunpack.c.l.b16 %v1447
    %v1580 = vunpack.c.l.b16 %v1448
    %v1581 = vunpack.c.l.b16 %v1449
    %v1582 = vunpack.c.l.b16 %v1450
    %v1583 = vunpack.c.l.b16 %v1451
    %v1584 = vunpack.c.l.b16 %v1452
    %v1585 = vunpack.c.l.b16 %v1453
    %v1586 = vunpack.c.l.b16 %v1454
    %v1587 = vunpack.c.l.b16 %v1455
    %v1588 = vunpack.c.l.b16 %v1456
    %v1589 = vunpack.c.l.b16 %v1457
    %v1590 = vunpack.c.l.b16 %v1458
    %v1591 = vunpack.c.l.b16 %v1459
    %v1592 = vunpack.c.l.b16 %v1460
    %v1593 = vunpack.c.l.b16 %v1461
    %v1594 = vunpack.c.l.b16 %v1462
    %v1595 = vunpack.c.l.b16 %v1463
    %v1596 = vunpack.c.l.b16 %v1464
    %v1597 = vunpack.c.l.b16 %v1465
    %v1598 = vunpack.c.l.b16 %v1466
    %v1599 = vunpack.c.l.b16 %v1467
    %v1600 = vunpack.c.l.b16 %v1468
    %v1601 = vunpack.c.l.b16 %v1469
    %v1602 = vunpack.c.l.b16 %v1470
    %v1603 = vunpack.c.l.b16 %v1471
    %v1604 = vunpack.c.l.b16 %v1472
    %v1605 = vunpack.c.l.b16 %v1473
    %v1606 = vunpack.c.l.b16 %v1474
    %v1607 = vunpack.c.l.b16 %v1475
    %v1608 = vunpack.c.l.b16 %v1476
    %v1609 = vunpack.c.l.b16 %v1477
    %v1610 = vunpack.c.l.b16 %v1478
    %v1611 = vunpack.c.l.b16 %v1479
    %v1612 = vunpack.c.l.b16 %v1480
    %v1613 = vunpack.c.l.b16 %v1481
    %v1614 = vunpack.c.l.b16 %v1482
    %v1615 = vunpack.c.l.b16 %v1483
    %v1616 = vunpack.c.l.b16 %v1484
    %v1617 = vunpack.c.l.b16 %v1485
    %v1618 = vunpack.c.l.b16 %v1486
    %v1619 = vunpack.c.l.b16 %v1487
    %v1620 = vunpack.c.l.b16 %v1488
    %v1621 = vunpack.c.l.b16 %v1489
    %v1622 = vunpack.c.l.b16 %v1490
    %v1623 = vunpack.c.l.b16 %v1491
    %v1624 = vunpack.c.l.b16 %v1492
    %v1625 = vunpack.c.l.b16 %v1493
    %v1626 = vunpack.c.l.b16 %v1494
    %v1627 = vunpack.c.l.b16 %v1495
    %v1628 = vunpack.c.l.b16 %v1496
    %v1629 = vunpack.c.l.b16 %v1497
    %v1630 = vunpack.c.l.b16 %v1498
    %v1631 = vunpack.c.l.b16 %v1499
    %v1632 = vunpack.c.l.b16 %v1500
    %v1633 = vunpack.c.l.b16 %v1501
    %v1634 = vpack.c.b16 %v1571, %v1570
    %v1635 = vpack.c.b16 %v1573, %v1572
    %v1636 = vpack.c.b16 %v1575, %v1574
    %v1637 = vpack.c.b16 %v1577, %v1576
    %v1638 = vpack.c.b16 %v1579, %v1578
    %v1639 = vpack.c.b16 %v1581, %v1580
    %v1640 = vpack.c.b16 %v1583, %v1582
    %v1641 = vpack.c.b16 %v1585, %v1584
    %v1642 = vpack.c.b16 %v1587, %v1586
    %v1643 = vpack.c.b16 %v1589, %v1588
    %v1644 = vpack.c.b16 %v1591, %v1590
    %v1645 = vpack.c.b16 %v1593, %v1592
    %v1646 = vpack.c.b16 %v1595, %v1594
    %v1647 = vpack.c.b16 %v1597, %v1596
    %v1648 = vpack.c.b16 %v1599, %v1598
    %v1649 = vpack.c.b16 %v1601, %v1600
    %v1650 = vpack.c.b16 %v1603, %v1602
    %v1651 = vpack.c.b16 %v1605, %v1604
    %v1652 = vpack.c.b16 %v1607, %v1606
    %v1653 = vpack.c.b16 %v1609, %v1608
    %v1654 = vpack.c.b16 %v1611, %v1610
    %v1655 = vpack.c.b16 %v1613, %v1612
    %v1656 = vpack.c.b16 %v1615, %v1614
    %v1657 = vpack.c.b16 %v1617, %v1616
    %v1658 = vpack.c.b16 %v1619, %v1618
    %v1659 = vpack.c.b16 %v1621, %v1620
    %v1660 = vpack.c.b16 %v1623, %v1622
    %v1661 = vpack.c.b16 %v1625, %v1624
    %v1662 = vpack.c.b16 %v1627, %v1626
    %v1663 = vpack.c.b16 %v1629, %v1628
    %v1664 = vpack.c.b16 %v1631, %v1630
    %v1665 = vpack.c.b16 %v1633, %v1632
    %1698 = vmatprep.subr.bf16.mxu0 0
    %1699 = vmatpush1.bf16.msra.mxu0 %v1641
    %1700 = vmatprep.subr.bf16.mxu0 0
    %1701 = vmatpush1.bf16.msra.mxu0 %v1640
    %1702 = vmatprep.subr.bf16.mxu0 0
    %1703 = vmatpush1.bf16.msra.mxu0 %v1639
    %1704 = vmatprep.subr.bf16.mxu0 0
    %1705 = vmatpush1.bf16.msra.mxu0 %v1638
    %1706 = vmatprep.subr.bf16.mxu0 0
    %1707 = vmatpush1.bf16.msra.mxu0 %v1637
    %1708 = vmatprep.subr.bf16.mxu0 0
    %1709 = vmatpush1.bf16.msra.mxu0 %v1636
    %1710 = vmatprep.subr.bf16.mxu0 0
    %1711 = vmatpush1.bf16.msra.mxu0 %v1635
    %1712 = vmatprep.subr.bf16.mxu0 0
    %1713 = vmatpush1.bf16.msra.mxu0 %v1634
    %1714 = vmatprep.subr.bf16.mxu0 0
    %1715 = vmatpush2.bf16.msra.mxu0 %v1649
    %1716 = vmatprep.subr.bf16.mxu0 0
    %1717 = vmatpush2.bf16.msra.mxu0 %v1648
    %1718 = vmatprep.subr.bf16.mxu0 0
    %1719 = vmatpush2.bf16.msra.mxu0 %v1647
    %1720 = vmatprep.subr.bf16.mxu0 0
    %1721 = vmatpush2.bf16.msra.mxu0 %v1646
    %1722 = vmatprep.subr.bf16.mxu0 0
    %1723 = vmatpush2.bf16.msra.mxu0 %v1645
    %1724 = vmatprep.subr.bf16.mxu0 0
    %1725 = vmatpush2.bf16.msra.mxu0 %v1644
    %1726 = vmatprep.subr.bf16.mxu0 0
    %1727 = vmatpush2.bf16.msra.mxu0 %v1643
    %1728 = vmatprep.subr.bf16.mxu0 0
    %1729 = vmatpush2.bf16.msra.mxu0 %v1642
    %1730 = vmatprep.mubr.bf16.mxu0 %v1431
    %1731 = vmatmul.mubr.bf16.gmra.mxu0 %v1430
    %v1732 = vpop.f32.mrf.mxu0
    %v1733 = vadd.f32 %v1505, %v1732
    %v1734 = vpop.f32.mrf.mxu0
    %v1735 = vpop.f32.mrf.mxu0
    %v1736 = vadd.f32 %v1505, %v1735
    %v1737 = vpop.f32.mrf.mxu0
    %1738 = vmatprep.mubr.bf16.mxu0 %v1435
    %1739 = vmatmul.mubr.bf16.gmra.mxu0 %v1434
    %v1740 = vpop.f32.mrf.mxu0
    %v1741 = vadd.f32 %v1505, %v1740
    %v1742 = vpop.f32.mrf.mxu0
    %v1743 = vpop.f32.mrf.mxu0
    %v1744 = vadd.f32 %v1505, %v1743
    %v1745 = vpop.f32.mrf.mxu0
    %1746 = vdwg.mxu0
    %1747 = vmatprep.subr.bf16.mxu0 0
    %1748 = vmatpush1.bf16.msra.mxu0 %v1657
    %1749 = vmatprep.subr.bf16.mxu0 0
    %1750 = vmatpush1.bf16.msra.mxu0 %v1656
    %1751 = vmatprep.subr.bf16.mxu0 0
    %1752 = vmatpush1.bf16.msra.mxu0 %v1655
    %1753 = vmatprep.subr.bf16.mxu0 0
    %1754 = vmatpush1.bf16.msra.mxu0 %v1654
    %1755 = vmatprep.subr.bf16.mxu0 0
    %1756 = vmatpush1.bf16.msra.mxu0 %v1653
    %1757 = vmatprep.subr.bf16.mxu0 0
    %1758 = vmatpush1.bf16.msra.mxu0 %v1652
    %1759 = vmatprep.subr.bf16.mxu0 0
    %1760 = vmatpush1.bf16.msra.mxu0 %v1651
    %1761 = vmatprep.subr.bf16.mxu0 0
    %1762 = vmatpush1.bf16.msra.mxu0 %v1650
    %1763 = vmatprep.subr.bf16.mxu0 0
    %1764 = vmatpush2.bf16.msra.mxu0 %v1665
    %1765 = vmatprep.subr.bf16.mxu0 0
    %1766 = vmatpush2.bf16.msra.mxu0 %v1664
    %1767 = vmatprep.subr.bf16.mxu0 0
    %1768 = vmatpush2.bf16.msra.mxu0 %v1663
    %1769 = vmatprep.subr.bf16.mxu0 0
    %1770 = vmatpush2.bf16.msra.mxu0 %v1662
    %1771 = vmatprep.subr.bf16.mxu0 0
    %1772 = vmatpush2.bf16.msra.mxu0 %v1661
    %1773 = vmatprep.subr.bf16.mxu0 0
    %1774 = vmatpush2.bf16.msra.mxu0 %v1660
    %1775 = vmatprep.subr.bf16.mxu0 0
    %1776 = vmatpush2.bf16.msra.mxu0 %v1659
    %1777 = vmatprep.subr.bf16.mxu0 0
    %1778 = vmatpush2.bf16.msra.mxu0 %v1658
    %1779 = vmatprep.mubr.bf16.mxu0 %v1433
    %1780 = vmatmul.mubr.bf16.gmra.mxu0 %v1432
    %v1781 = vpop.f32.mrf.mxu0
    %v1782 = vadd.f32 %v1733, %v1781
    %v1783 = vpop.f32.mrf.mxu0
    %v1784 = vpop.f32.mrf.mxu0
    %v1785 = vadd.f32 %v1736, %v1784
    %v1786 = vpop.f32.mrf.mxu0
    %1787 = vmatprep.mubr.bf16.mxu0 %v1437
    %1788 = vmatmul.mubr.bf16.gmra.mxu0 %v1436
    %v1789 = vpop.f32.mrf.mxu0
    %v1790 = vadd.f32 %v1741, %v1789
    %v1791 = vpop.f32.mrf.mxu0
    %v1792 = vpop.f32.mrf.mxu0
    %v1793 = vadd.f32 %v1744, %v1792
    %v1794 = vpop.f32.mrf.mxu0
    %1795 = vdwg.mxu0
    %v1796 = vadd.f32 %v906, %v1782
    %v1797 = vadd.f32 %v907, %v1785
    %v1798 = vadd.f32 %v908, %v1790
    %v1799 = vadd.f32 %v909, %v1793
    %s1800 = scalar_lea.vmem [#allocation2], 32
    %v1801 = vld [vmem:[%s1800] sm:$0xff]
    %v1802 = vld [vmem:[%s1800 + $0x8] sm:$0xff]
    %v1803 = vld [vmem:[%s1800 + $0x10] sm:$0xff]
    %v1804 = vld [vmem:[%s1800 + $0x18] sm:$0xff]
    %1805 = vadd.xlane.f32.xlu0 %v1796
    %v1806 = vpop.xlane.xlu0 %1805
    %1807 = vadd.xlane.f32.xlu0 %v1797
    %v1808 = vpop.xlane.xlu0 %1807
    %1809 = vadd.xlane.f32.xlu0 %v1798
    %v1810 = vpop.xlane.xlu0 %1809
    %1811 = vadd.xlane.f32.xlu0 %v1799
    %v1812 = vpop.xlane.xlu0 %1811
    %v1813 = vmul.f32 %v1806, %v119
    %v1814 = vmul.f32 %v1808, %v119
    %v1815 = vmul.f32 %v1810, %v119
    %v1816 = vmul.f32 %v1812, %v119
    %v1817 = vsub.f32 %v1796, %v1813
    %v1818 = vsub.f32 %v1797, %v1814
    %v1819 = vsub.f32 %v1798, %v1815
    %v1820 = vsub.f32 %v1799, %v1816
    %v1821 = vmul.f32 %v1817, %v1817
    %v1822 = vmul.f32 %v1818, %v1818
    %v1823 = vmul.f32 %v1819, %v1819
    %v1824 = vmul.f32 %v1820, %v1820
    %1825 = vadd.xlane.f32.xlu0 %v1821
    %v1826 = vpop.xlane.xlu0 %1825
    %1827 = vadd.xlane.f32.xlu0 %v1822
    %v1828 = vpop.xlane.xlu0 %1827
    %1829 = vadd.xlane.f32.xlu0 %v1823
    %v1830 = vpop.xlane.xlu0 %1829
    %1831 = vadd.xlane.f32.xlu0 %v1824
    %v1832 = vpop.xlane.xlu0 %1831
    %v1833 = vmul.f32 %v1826, %v119
    %v1834 = vmul.f32 %v1828, %v119
    %v1835 = vmul.f32 %v1830, %v119
    %v1836 = vmul.f32 %v1832, %v119
    %v1837 = vadd.f32 %v1833, 1e-05
    %v1838 = vadd.f32 %v1834, 1e-05
    %v1839 = vadd.f32 %v1835, 1e-05
    %v1840 = vadd.f32 %v1836, 1e-05
    %v1841 = vrsqrt.pop %v1837
    %v1842 = vrsqrt.pop %v1838
    %v1843 = vrsqrt.pop %v1839
    %v1844 = vrsqrt.pop %v1840
    %v1845 = vmul.f32 %v1817, %v1841
    %v1846 = vmul.f32 %v1818, %v1842
    %v1847 = vmul.f32 %v1819, %v1843
    %v1848 = vmul.f32 %v1820, %v1844
    %v1849 = vlaneseq
    %v1850 = vshrl.u32 %v1849, 7
    %v1851 = vsub.s32 0, %v1850
    %v1852 = vrot.slane %v1801, %v1851
    %v1853 = vmul.f32 %v1845, %v1852
    %v1854 = vmul.f32 %v1846, %v1852
    %v1855 = vmul.f32 %v1847, %v1852
    %v1856 = vmul.f32 %v1848, %v1852
    %v1857 = vlaneseq
    %v1858 = vshrl.u32 %v1857, 7
    %v1859 = vsub.s32 1, %v1858
    %v1860 = vrot.slane %v1801, %v1859
    %v1861 = vadd.f32 %v1853, %v1860
    %v1862 = vadd.f32 %v1854, %v1860
    %v1863 = vadd.f32 %v1855, %v1860
    %v1864 = vadd.f32 %v1856, %v1860
    %v1865 = vpack.c.bf16 %v1862, %v1861
    %v1866 = vpack.c.bf16 %v1864, %v1863
    %s1867 = scalar_lea.vmem [#allocation4], 192
    %v1868 = vld [vmem:[%s1867] sm:$0xff]
    %v1869 = vld [vmem:[%s1867 + $0x8] sm:$0xf]
    %v1870 = vld [vmem:[%s1867 + $0xc] sm:$0xff]
    %v1871 = vld [vmem:[%s1867 + $0x14] sm:$0xf]
    %v1872 = vld [vmem:[%s1867 + $0x18] sm:$0xff]
    %v1873 = vld [vmem:[%s1867 + $0x20] sm:$0xf]
    %v1874 = vld [vmem:[%s1867 + $0x24] sm:$0xff]
    %v1875 = vld [vmem:[%s1867 + $0x2c] sm:$0xf]
    %v1876 = vld [vmem:[%s1867 + $0x30] sm:$0xff]
    %v1877 = vld [vmem:[%s1867 + $0x38] sm:$0xf]
    %v1878 = vld [vmem:[%s1867 + $0x3c] sm:$0xff]
    %v1879 = vld [vmem:[%s1867 + $0x44] sm:$0xf]
    %v1880 = vld [vmem:[%s1867 + $0x48] sm:$0xff]
    %v1881 = vld [vmem:[%s1867 + $0x50] sm:$0xf]
    %v1882 = vld [vmem:[%s1867 + $0x54] sm:$0xff]
    %v1883 = vld [vmem:[%s1867 + $0x5c] sm:$0xf]
    %v1884 = vld [vmem:[%s1867 + $0x60] sm:$0xff]
    %v1885 = vld [vmem:[%s1867 + $0x68] sm:$0xf]
    %v1886 = vld [vmem:[%s1867 + $0x6c] sm:$0xff]
    %v1887 = vld [vmem:[%s1867 + $0x74] sm:$0xf]
    %v1888 = vld [vmem:[%s1867 + $0x78] sm:$0xff]
    %v1889 = vld [vmem:[%s1867 + $0x80] sm:$0xf]
    %v1890 = vld [vmem:[%s1867 + $0x84] sm:$0xff]
    %v1891 = vld [vmem:[%s1867 + $0x8c] sm:$0xf]
    %v1892 = vld [vmem:[%s1867 + $0x90] sm:$0xff]
    %v1893 = vld [vmem:[%s1867 + $0x98] sm:$0xf]
    %v1894 = vld [vmem:[%s1867 + $0x9c] sm:$0xff]
    %v1895 = vld [vmem:[%s1867 + $0xa4] sm:$0xf]
    %v1896 = vld [vmem:[%s1867 + $0xa8] sm:$0xff]
    %v1897 = vld [vmem:[%s1867 + $0xb0] sm:$0xf]
    %v1898 = vld [vmem:[%s1867 + $0xb4] sm:$0xff]
    %v1899 = vld [vmem:[%s1867 + $0xbc] sm:$0xf]
    %v1900 = vlaneseq
    %v1901 = vshrl.u32 %v1900, 7
    %v1902 = vsub.s32 6, %v1901
    %v1903 = vrot.slane %v1801, %v1902
    %v1904 = vlaneseq
    %v1905 = vshrl.u32 %v1904, 7
    %v1906 = vsub.s32 6, %v1905
    %v1907 = vrot.slane %v1802, %v1906
    %v1908 = vlaneseq
    %v1909 = vshrl.u32 %v1908, 7
    %v1910 = vsub.s32 6, %v1909
    %v1911 = vrot.slane %v1803, %v1910
    %v1944 = vunpack.c.l.b16 %v1868
    %v1945 = vunpack.c.h.b16 %v1868
    %v1946 = vunpack.c.l.b16 %v1869
    %v1947 = vunpack.c.l.b16 %v1870
    %v1948 = vunpack.c.h.b16 %v1870
    %v1949 = vunpack.c.l.b16 %v1871
    %v1950 = vunpack.c.l.b16 %v1872
    %v1951 = vunpack.c.h.b16 %v1872
    %v1952 = vunpack.c.l.b16 %v1873
    %v1953 = vunpack.c.l.b16 %v1874
    %v1954 = vunpack.c.h.b16 %v1874
    %v1955 = vunpack.c.l.b16 %v1875
    %v1956 = vunpack.c.l.b16 %v1876
    %v1957 = vunpack.c.h.b16 %v1876
    %v1958 = vunpack.c.l.b16 %v1877
    %v1959 = vunpack.c.l.b16 %v1878
    %v1960 = vunpack.c.h.b16 %v1878
    %v1961 = vunpack.c.l.b16 %v1879
    %v1962 = vunpack.c.l.b16 %v1880
    %v1963 = vunpack.c.h.b16 %v1880
    %v1964 = vunpack.c.l.b16 %v1881
    %v1965 = vunpack.c.l.b16 %v1882
    %v1966 = vunpack.c.h.b16 %v1882
    %v1967 = vunpack.c.l.b16 %v1883
    %v1968 = vunpack.c.l.b16 %v1884
    %v1969 = vunpack.c.h.b16 %v1884
    %v1970 = vunpack.c.l.b16 %v1885
    %v1971 = vunpack.c.l.b16 %v1886
    %v1972 = vunpack.c.h.b16 %v1886
    %v1973 = vunpack.c.l.b16 %v1887
    %v1974 = vunpack.c.l.b16 %v1888
    %v1975 = vunpack.c.h.b16 %v1888
    %v1976 = vunpack.c.l.b16 %v1889
    %v1977 = vunpack.c.l.b16 %v1890
    %v1978 = vunpack.c.h.b16 %v1890
    %v1979 = vunpack.c.l.b16 %v1891
    %v1980 = vunpack.c.l.b16 %v1892
    %v1981 = vunpack.c.h.b16 %v1892
    %v1982 = vunpack.c.l.b16 %v1893
    %v1983 = vunpack.c.l.b16 %v1894
    %v1984 = vunpack.c.h.b16 %v1894
    %v1985 = vunpack.c.l.b16 %v1895
    %v1986 = vunpack.c.l.b16 %v1896
    %v1987 = vunpack.c.h.b16 %v1896
    %v1988 = vunpack.c.l.b16 %v1897
    %v1989 = vunpack.c.l.b16 %v1898
    %v1990 = vunpack.c.h.b16 %v1898
    %v1991 = vunpack.c.l.b16 %v1899
    %v1992 = vpack.c.b16 %v1947, %v1944
    %v1993 = vpack.c.b16 %v1948, %v1945
    %v1994 = vpack.c.b16 %v1949, %v1946
    %v1995 = vpack.c.b16 %v1953, %v1950
    %v1996 = vpack.c.b16 %v1954, %v1951
    %v1997 = vpack.c.b16 %v1955, %v1952
    %v1998 = vpack.c.b16 %v1959, %v1956
    %v1999 = vpack.c.b16 %v1960, %v1957
    %v2000 = vpack.c.b16 %v1961, %v1958
    %v2001 = vpack.c.b16 %v1965, %v1962
    %v2002 = vpack.c.b16 %v1966, %v1963
    %v2003 = vpack.c.b16 %v1967, %v1964
    %v2004 = vpack.c.b16 %v1971, %v1968
    %v2005 = vpack.c.b16 %v1972, %v1969
    %v2006 = vpack.c.b16 %v1973, %v1970
    %v2007 = vpack.c.b16 %v1977, %v1974
    %v2008 = vpack.c.b16 %v1978, %v1975
    %v2009 = vpack.c.b16 %v1979, %v1976
    %v2010 = vpack.c.b16 %v1983, %v1980
    %v2011 = vpack.c.b16 %v1984, %v1981
    %v2012 = vpack.c.b16 %v1985, %v1982
    %v2013 = vpack.c.b16 %v1989, %v1986
    %v2014 = vpack.c.b16 %v1990, %v1987
    %v2015 = vpack.c.b16 %v1991, %v1988
    %2040 = vmatprep.subr.bf16.mxu0 %v2014
    %2041 = vmatpush1.bf16.msra.mxu0 %v2013
    %2042 = vmatprep.subr.bf16.mxu0 %v2011
    %2043 = vmatpush1.bf16.msra.mxu0 %v2010
    %2044 = vmatprep.subr.bf16.mxu0 %v2008
    %2045 = vmatpush1.bf16.msra.mxu0 %v2007
    %2046 = vmatprep.subr.bf16.mxu0 %v2005
    %2047 = vmatpush1.bf16.msra.mxu0 %v2004
    %2048 = vmatprep.subr.bf16.mxu0 %v2002
    %2049 = vmatpush1.bf16.msra.mxu0 %v2001
    %2050 = vmatprep.subr.bf16.mxu0 %v1999
    %2051 = vmatpush1.bf16.msra.mxu0 %v1998
    %2052 = vmatprep.subr.bf16.mxu0 %v1996
    %2053 = vmatpush1.bf16.msra.mxu0 %v1995
    %2054 = vmatprep.subr.bf16.mxu0 %v1993
    %2055 = vmatpush1.bf16.msra.mxu0 %v1992
    %2056 = vmatprep.subr.bf16.mxu0 0
    %2057 = vmatpush2.bf16.msra.mxu0 0
    %2058 = vmatprep.subr.bf16.mxu0 0
    %2059 = vmatpush2.bf16.msra.mxu0 0
    %2060 = vmatprep.subr.bf16.mxu0 0
    %2061 = vmatpush2.bf16.msra.mxu0 0
    %2062 = vmatprep.subr.bf16.mxu0 0
    %2063 = vmatpush2.bf16.msra.mxu0 0
    %2064 = vmatprep.subr.bf16.mxu0 0
    %2065 = vmatpush2.bf16.msra.mxu0 0
    %2066 = vmatprep.subr.bf16.mxu0 0
    %2067 = vmatpush2.bf16.msra.mxu0 0
    %2068 = vmatprep.subr.bf16.mxu0 0
    %2069 = vmatpush2.bf16.msra.mxu0 0
    %2070 = vmatprep.subr.bf16.mxu0 0
    %2071 = vmatpush2.bf16.msra.mxu0 0
    %2072 = vmatprep.mubr.bf16.mxu0 0
    %2073 = vmatmul.mubr.bf16.gmra.mxu0 %v1865
    %v2074 = vpop.f32.mrf.mxu0
    %v2075 = vadd.f32 %v1903, %v2074
    %v2076 = vpop.f32.mrf.mxu0
    %v2077 = vadd.f32 %v1907, %v2076
    %v2078 = vpop.f32.mrf.mxu0
    %v2079 = vadd.f32 %v1903, %v2078
    %v2080 = vpop.f32.mrf.mxu0
    %v2081 = vadd.f32 %v1907, %v2080
    %2082 = vmatprep.mubr.bf16.mxu0 0
    %2083 = vmatmul.mubr.bf16.gmra.mxu0 %v1866
    %v2084 = vpop.f32.mrf.mxu0
    %v2085 = vadd.f32 %v1903, %v2084
    %v2086 = vpop.f32.mrf.mxu0
    %v2087 = vadd.f32 %v1907, %v2086
    %v2088 = vpop.f32.mrf.mxu0
    %v2089 = vadd.f32 %v1903, %v2088
    %v2090 = vpop.f32.mrf.mxu0
    %v2091 = vadd.f32 %v1907, %v2090
    %2092 = vdwg.mxu0
    %2093 = vmatprep.subr.bf16.mxu0 0
    %2094 = vmatpush1.bf16.msra.mxu0 %v2015
    %2095 = vmatprep.subr.bf16.mxu0 0
    %2096 = vmatpush1.bf16.msra.mxu0 %v2012
    %2097 = vmatprep.subr.bf16.mxu0 0
    %2098 = vmatpush1.bf16.msra.mxu0 %v2009
    %2099 = vmatprep.subr.bf16.mxu0 0
    %2100 = vmatpush1.bf16.msra.mxu0 %v2006
    %2101 = vmatprep.subr.bf16.mxu0 0
    %2102 = vmatpush1.bf16.msra.mxu0 %v2003
    %2103 = vmatprep.subr.bf16.mxu0 0
    %2104 = vmatpush1.bf16.msra.mxu0 %v2000
    %2105 = vmatprep.subr.bf16.mxu0 0
    %2106 = vmatpush1.bf16.msra.mxu0 %v1997
    %2107 = vmatprep.subr.bf16.mxu0 0
    %2108 = vmatpush1.bf16.msra.mxu0 %v1994
    %2109 = vmatprep.subr.bf16.mxu0 0
    %2110 = vmatpush2.bf16.msra.mxu0 0
    %2111 = vmatprep.subr.bf16.mxu0 0
    %2112 = vmatpush2.bf16.msra.mxu0 0
    %2113 = vmatprep.subr.bf16.mxu0 0
    %2114 = vmatpush2.bf16.msra.mxu0 0
    %2115 = vmatprep.subr.bf16.mxu0 0
    %2116 = vmatpush2.bf16.msra.mxu0 0
    %2117 = vmatprep.subr.bf16.mxu0 0
    %2118 = vmatpush2.bf16.msra.mxu0 0
    %2119 = vmatprep.subr.bf16.mxu0 0
    %2120 = vmatpush2.bf16.msra.mxu0 0
    %2121 = vmatprep.subr.bf16.mxu0 0
    %2122 = vmatpush2.bf16.msra.mxu0 0
    %2123 = vmatprep.subr.bf16.mxu0 0
    %2124 = vmatpush2.bf16.msra.mxu0 0
    %2125 = vmatprep.mubr.bf16.mxu0 0
    %2126 = vmatmul.mubr.bf16.gmra.mxu0 %v1865
    %v2127 = vpop.f32.mrf.mxu0
    %v2128 = vadd.f32 %v1911, %v2127
    %v2129 = vpop.f32.mrf.mxu0
    %v2130 = vpop.f32.mrf.mxu0
    %v2131 = vadd.f32 %v1911, %v2130
    %v2132 = vpop.f32.mrf.mxu0
    %2133 = vmatprep.mubr.bf16.mxu0 0
    %2134 = vmatmul.mubr.bf16.gmra.mxu0 %v1866
    %v2135 = vpop.f32.mrf.mxu0
    %v2136 = vadd.f32 %v1911, %v2135
    %v2137 = vpop.f32.mrf.mxu0
    %v2138 = vpop.f32.mrf.mxu0
    %v2139 = vadd.f32 %v1911, %v2138
    %v2140 = vpop.f32.mrf.mxu0
    %2141 = vdwg.mxu0
    %2146 = vrot.lane.b32.xlu0 %v2075, 64
    %v2147 = vpop.permute.xlu0 %2146
    %2148 = vrot.lane.b32.xlu0 %v2079, 64
    %v2149 = vpop.permute.xlu0 %2148
    %2150 = vrot.lane.b32.xlu0 %v2085, 64
    %v2151 = vpop.permute.xlu0 %2150
    %2152 = vrot.lane.b32.xlu0 %v2089, 64
    %v2153 = vpop.permute.xlu0 %2152
    %2162 = vrot.lane.b32.xlu0 %v2077, 64
    %v2163 = vpop.permute.xlu0 %2162
    %2164 = vrot.lane.b32.xlu0 %v2081, 64
    %v2165 = vpop.permute.xlu0 %2164
    %2166 = vrot.lane.b32.xlu0 %v2087, 64
    %v2167 = vpop.permute.xlu0 %2166
    %2168 = vrot.lane.b32.xlu0 %v2091, 64
    %v2169 = vpop.permute.xlu0 %2168
    %2178 = vrot.lane.b32.xlu0 %v2128, 64
    %v2179 = vpop.permute.xlu0 %2178
    %2180 = vrot.lane.b32.xlu0 %v2131, 64
    %v2181 = vpop.permute.xlu0 %2180
    %2182 = vrot.lane.b32.xlu0 %v2136, 64
    %v2183 = vpop.permute.xlu0 %2182
    %2184 = vrot.lane.b32.xlu0 %v2139, 64
    %v2185 = vpop.permute.xlu0 %2184
    %v2190 = vpack.c.bf16 %v2079, %v2075
    %v2191 = vpack.c.bf16 %v2089, %v2085
    %v2192 = vpack.c.bf16 %v2149, %v2147
    %v2193 = vpack.c.bf16 %v2153, %v2151
    %v2194 = vpack.c.bf16 %v2081, %v2077
    %v2195 = vpack.c.bf16 %v2091, %v2087
    %v2196 = vpack.c.bf16 %v2165, %v2163
    %v2197 = vpack.c.bf16 %v2169, %v2167
    %v2199 = vsel %vm504, %v2190, 0
    %v2202 = vsel %vm504, %v2191, 0
    %v2205 = vsel %vm504, %v2192, 0
    %v2208 = vsel %vm504, %v2193, 0
    %v2211 = vsel %vm504, %v2194, 0
    %v2214 = vsel %vm504, %v2195, 0
    %v2217 = vsel %vm504, %v2196, 0
    %v2220 = vsel %vm504, %v2197, 0
    %2222 = vmatprep.subr.bf16.mxu0 0
    %2223 = vmatpush1.bf16.xpose.msra.mxu0 0
    %2224 = vmatprep.subr.bf16.mxu0 0
    %2225 = vmatpush1.bf16.xpose.msra.mxu0 0
    %2226 = vmatprep.subr.bf16.mxu0 0
    %2227 = vmatpush1.bf16.xpose.msra.mxu0 0
    %2228 = vmatprep.subr.bf16.mxu0 0
    %2229 = vmatpush1.bf16.xpose.msra.mxu0 0
    %2230 = vmatprep.subr.bf16.mxu0 0
    %2231 = vmatpush1.bf16.xpose.msra.mxu0 %v2220
    %2232 = vmatprep.subr.bf16.mxu0 0
    %2233 = vmatpush1.bf16.xpose.msra.mxu0 %v2217
    %2234 = vmatprep.subr.bf16.mxu0 0
    %2235 = vmatpush1.bf16.xpose.msra.mxu0 %v2214
    %2236 = vmatprep.subr.bf16.mxu0 0
    %2237 = vmatpush1.bf16.xpose.msra.mxu0 %v2211
    %2238 = vmatprep.subr.bf16.mxu0 0
    %2239 = vmatpush2.bf16.xpose.msra.mxu0 0
    %2240 = vmatprep.subr.bf16.mxu0 0
    %2241 = vmatpush2.bf16.xpose.msra.mxu0 0
    %2242 = vmatprep.subr.bf16.mxu0 0
    %2243 = vmatpush2.bf16.xpose.msra.mxu0 0
    %2244 = vmatprep.subr.bf16.mxu0 0
    %2245 = vmatpush2.bf16.xpose.msra.mxu0 0
    %2246 = vmatprep.subr.bf16.mxu0 0
    %2247 = vmatpush2.bf16.xpose.msra.mxu0 0
    %2248 = vmatprep.subr.bf16.mxu0 0
    %2249 = vmatpush2.bf16.xpose.msra.mxu0 0
    %2250 = vmatprep.subr.bf16.mxu0 0
    %2251 = vmatpush2.bf16.xpose.msra.mxu0 0
    %2252 = vmatprep.subr.bf16.mxu0 0
    %2253 = vmatpush2.bf16.xpose.msra.mxu0 0
    %2254 = vmatprep.mubr.bf16.mxu0 0
    %2255 = vmatmul.mubr.bf16.gmra.mxu0 %v2199
    %v2256 = vpop.f32.mrf.mxu0
    %v2257 = vadd.f32 %v99, %v2256
    %v2258 = vpop.f32.mrf.mxu0
    %v2259 = vpop.f32.mrf.mxu0
    %v2260 = vadd.f32 %v100, %v2259
    %v2261 = vpop.f32.mrf.mxu0
    %2262 = vmatprep.mubr.bf16.mxu0 0
    %2263 = vmatmul.mubr.bf16.gmra.mxu0 %v2202
    %v2264 = vpop.f32.mrf.mxu0
    %v2265 = vadd.f32 %v101, %v2264
    %v2266 = vpop.f32.mrf.mxu0
    %v2267 = vpop.f32.mrf.mxu0
    %v2268 = vadd.f32 %v102, %v2267
    %v2269 = vpop.f32.mrf.mxu0
    %2270 = vmatprep.mubr.bf16.mxu0 0
    %2271 = vmatmul.mubr.bf16.gmra.mxu0 %v2205
    %v2272 = vpop.f32.mrf.mxu0
    %v2273 = vadd.f32 %v103, %v2272
    %v2274 = vpop.f32.mrf.mxu0
    %v2275 = vpop.f32.mrf.mxu0
    %v2276 = vadd.f32 %v104, %v2275
    %v2277 = vpop.f32.mrf.mxu0
    %2278 = vmatprep.mubr.bf16.mxu0 0
    %2279 = vmatmul.mubr.bf16.gmra.mxu0 %v2208
    %v2280 = vpop.f32.mrf.mxu0
    %v2281 = vadd.f32 %v105, %v2280
    %v2282 = vpop.f32.mrf.mxu0
    %v2283 = vpop.f32.mrf.mxu0
    %v2284 = vadd.f32 %v106, %v2283
    %v2285 = vpop.f32.mrf.mxu0
    %2286 = vdwg.mxu0
    %v2287 = vsel %vm504, %v2257, -inf
    %2288 = vmax.xlane.f32.xlu0 %v2287
    %v2289 = vpop.xlane.xlu0 %2288
    %v2290 = vsel %vm504, %v2260, -inf
    %2291 = vmax.xlane.f32.xlu0 %v2290
    %v2292 = vpop.xlane.xlu0 %2291
    %v2293 = vsel %vm504, %v2265, -inf
    %2294 = vmax.xlane.f32.xlu0 %v2293
    %v2295 = vpop.xlane.xlu0 %2294
    %v2296 = vsel %vm504, %v2268, -inf
    %2297 = vmax.xlane.f32.xlu0 %v2296
    %v2298 = vpop.xlane.xlu0 %2297
    %v2299 = vsel %vm504, %v2273, -inf
    %2300 = vmax.xlane.f32.xlu0 %v2299
    %v2301 = vpop.xlane.xlu0 %2300
    %v2302 = vsel %vm504, %v2276, -inf
    %2303 = vmax.xlane.f32.xlu0 %v2302
    %v2304 = vpop.xlane.xlu0 %2303
    %v2305 = vsel %vm504, %v2281, -inf
    %2306 = vmax.xlane.f32.xlu0 %v2305
    %v2307 = vpop.xlane.xlu0 %2306
    %v2308 = vsel %vm504, %v2284, -inf
    %2309 = vmax.xlane.f32.xlu0 %v2308
    %v2310 = vpop.xlane.xlu0 %2309
    %v2311 = vsub.f32 %v2257, %v2289
    %v2312 = vsub.f32 %v2260, %v2292
    %v2313 = vsub.f32 %v2265, %v2295
    %v2314 = vsub.f32 %v2268, %v2298
    %v2315 = vsub.f32 %v2273, %v2301
    %v2316 = vsub.f32 %v2276, %v2304
    %v2317 = vsub.f32 %v2281, %v2307
    %v2318 = vsub.f32 %v2284, %v2310
    %v2319 = vmul.f32 %v2311, 1.442695
    %v2320 = vpow.pop %v2319
    %v2321 = vmul.f32 %v2312, 1.442695
    %v2322 = vpow.pop %v2321
    %v2323 = vmul.f32 %v2313, 1.442695
    %v2324 = vpow.pop %v2323
    %v2325 = vmul.f32 %v2314, 1.442695
    %v2326 = vpow.pop %v2325
    %v2327 = vmul.f32 %v2315, 1.442695
    %v2328 = vpow.pop %v2327
    %v2329 = vmul.f32 %v2316, 1.442695
    %v2330 = vpow.pop %v2329
    %v2331 = vmul.f32 %v2317, 1.442695
    %v2332 = vpow.pop %v2331
    %v2333 = vmul.f32 %v2318, 1.442695
    %v2334 = vpow.pop %v2333
    %v2335 = vsel %vm504, %v2320, 0.0
    %2336 = vadd.xlane.f32.xlu0 %v2335
    %v2337 = vpop.xlane.xlu0 %2336
    %v2338 = vsel %vm504, %v2322, 0.0
    %2339 = vadd.xlane.f32.xlu0 %v2338
    %v2340 = vpop.xlane.xlu0 %2339
    %v2341 = vsel %vm504, %v2324, 0.0
    %2342 = vadd.xlane.f32.xlu0 %v2341
    %v2343 = vpop.xlane.xlu0 %2342
    %v2344 = vsel %vm504, %v2326, 0.0
    %2345 = vadd.xlane.f32.xlu0 %v2344
    %v2346 = vpop.xlane.xlu0 %2345
    %v2347 = vsel %vm504, %v2328, 0.0
    %2348 = vadd.xlane.f32.xlu0 %v2347
    %v2349 = vpop.xlane.xlu0 %2348
    %v2350 = vsel %vm504, %v2330, 0.0
    %2351 = vadd.xlane.f32.xlu0 %v2350
    %v2352 = vpop.xlane.xlu0 %2351
    %v2353 = vsel %vm504, %v2332, 0.0
    %2354 = vadd.xlane.f32.xlu0 %v2353
    %v2355 = vpop.xlane.xlu0 %2354
    %v2356 = vsel %vm504, %v2334, 0.0
    %2357 = vadd.xlane.f32.xlu0 %v2356
    %v2358 = vpop.xlane.xlu0 %2357
    %v2359 = vrcp.pop %v2337
    %v2360 = vrcp.pop %v2340
    %v2361 = vrcp.pop %v2343
    %v2362 = vrcp.pop %v2346
    %v2363 = vrcp.pop %v2349
    %v2364 = vrcp.pop %v2352
    %v2365 = vrcp.pop %v2355
    %v2366 = vrcp.pop %v2358
    %v2367 = vmul.f32 %v2320, %v2359
    %v2368 = vmul.f32 %v2322, %v2360
    %v2369 = vmul.f32 %v2324, %v2361
    %v2370 = vmul.f32 %v2326, %v2362
    %v2371 = vmul.f32 %v2328, %v2363
    %v2372 = vmul.f32 %v2330, %v2364
    %v2373 = vmul.f32 %v2332, %v2365
    %v2374 = vmul.f32 %v2334, %v2366
    %v2375 = vpack.c.bf16 %v2368, %v2367
    %v2376 = vpack.c.bf16 %v2370, %v2369
    %v2377 = vpack.c.bf16 %v2372, %v2371
    %v2378 = vpack.c.bf16 %v2374, %v2373
    %v2379 = vpack.c.bf16 %v2131, %v2128
    %v2380 = vpack.c.bf16 %v2139, %v2136
    %v2381 = vpack.c.bf16 %v2181, %v2179
    %v2382 = vpack.c.bf16 %v2185, %v2183
    %v2384 = vsel %vm504, %v2375, 0
    %v2387 = vsel %vm504, %v2376, 0
    %v2390 = vsel %vm504, %v2377, 0
    %v2393 = vsel %vm504, %v2378, 0
    %2395 = vmatprep.subr.bf16.mxu0 0
    %2396 = vmatpush1.bf16.msra.mxu0 0
    %2397 = vmatprep.subr.bf16.mxu0 0
    %2398 = vmatpush1.bf16.msra.mxu0 0
    %2399 = vmatprep.subr.bf16.mxu0 0
    %2400 = vmatpush1.bf16.msra.mxu0 0
    %2401 = vmatprep.subr.bf16.mxu0 0
    %2402 = vmatpush1.bf16.msra.mxu0 0
    %2403 = vmatprep.subr.bf16.mxu0 0
    %2404 = vmatpush1.bf16.msra.mxu0 %v2382
    %2405 = vmatprep.subr.bf16.mxu0 0
    %2406 = vmatpush1.bf16.msra.mxu0 %v2381
    %2407 = vmatprep.subr.bf16.mxu0 0
    %2408 = vmatpush1.bf16.msra.mxu0 %v2380
    %2409 = vmatprep.subr.bf16.mxu0 0
    %2410 = vmatpush1.bf16.msra.mxu0 %v2379
    %2411 = vmatprep.subr.bf16.mxu0 0
    %2412 = vmatpush2.bf16.msra.mxu0 0
    %2413 = vmatprep.subr.bf16.mxu0 0
    %2414 = vmatpush2.bf16.msra.mxu0 0
    %2415 = vmatprep.subr.bf16.mxu0 0
    %2416 = vmatpush2.bf16.msra.mxu0 0
    %2417 = vmatprep.subr.bf16.mxu0 0
    %2418 = vmatpush2.bf16.msra.mxu0 0
    %2419 = vmatprep.subr.bf16.mxu0 0
    %2420 = vmatpush2.bf16.msra.mxu0 0
    %2421 = vmatprep.subr.bf16.mxu0 0
    %2422 = vmatpush2.bf16.msra.mxu0 0
    %2423 = vmatprep.subr.bf16.mxu0 0
    %2424 = vmatpush2.bf16.msra.mxu0 0
    %2425 = vmatprep.subr.bf16.mxu0 0
    %2426 = vmatpush2.bf16.msra.mxu0 0
    %2427 = vmatprep.mubr.bf16.mxu0 0
    %2428 = vmatmul.mubr.bf16.gmra.mxu0 %v2384
    %v2429 = vpop.f32.mrf.mxu0
    %v2430 = vadd.f32 0.0, %v2429
    %v2431 = vpop.f32.mrf.mxu0
    %v2432 = vpop.f32.mrf.mxu0
    %v2433 = vadd.f32 0.0, %v2432
    %v2434 = vpop.f32.mrf.mxu0
    %2435 = vmatprep.mubr.bf16.mxu0 0
    %2436 = vmatmul.mubr.bf16.gmra.mxu0 %v2387
    %v2437 = vpop.f32.mrf.mxu0
    %v2438 = vadd.f32 0.0, %v2437
    %v2439 = vpop.f32.mrf.mxu0
    %v2440 = vpop.f32.mrf.mxu0
    %v2441 = vadd.f32 0.0, %v2440
    %v2442 = vpop.f32.mrf.mxu0
    %2443 = vmatprep.mubr.bf16.mxu0 0
    %2444 = vmatmul.mubr.bf16.gmra.mxu0 %v2390
    %v2445 = vpop.f32.mrf.mxu0
    %v2446 = vadd.f32 0.0, %v2445
    %v2447 = vpop.f32.mrf.mxu0
    %v2448 = vpop.f32.mrf.mxu0
    %v2449 = vadd.f32 0.0, %v2448
    %v2450 = vpop.f32.mrf.mxu0
    %2451 = vmatprep.mubr.bf16.mxu0 0
    %2452 = vmatmul.mubr.bf16.gmra.mxu0 %v2393
    %v2453 = vpop.f32.mrf.mxu0
    %v2454 = vadd.f32 0.0, %v2453
    %v2455 = vpop.f32.mrf.mxu0
    %v2456 = vpop.f32.mrf.mxu0
    %v2457 = vadd.f32 0.0, %v2456
    %v2458 = vpop.f32.mrf.mxu0
    %2459 = vdwg.mxu0
    %2464 = vrot.lane.b32.xlu0 %v2446, 64
    %v2465 = vpop.permute.xlu0 %2464
    %2466 = vrot.lane.b32.xlu0 %v2449, 64
    %v2467 = vpop.permute.xlu0 %2466
    %2468 = vrot.lane.b32.xlu0 %v2454, 64
    %v2469 = vpop.permute.xlu0 %2468
    %2470 = vrot.lane.b32.xlu0 %v2457, 64
    %v2471 = vpop.permute.xlu0 %2470
    %v2476 = vsel %vm504, %v2430, %v2465
    %v2477 = vsel %vm504, %v2433, %v2467
    %v2478 = vsel %vm504, %v2438, %v2469
    %v2479 = vsel %vm504, %v2441, %v2471
    %v2480 = vpack.c.bf16 %v2477, %v2476
    %v2481 = vpack.c.bf16 %v2479, %v2478
    %s2482 = scalar_lea.vmem [#allocation6], 64
    %v2483 = vld [vmem:[%s2482] sm:$0xf]
    %v2484 = vld [vmem:[%s2482 + $0x4] sm:$0xf]
    %v2485 = vld [vmem:[%s2482 + $0x8] sm:$0xf]
    %v2486 = vld [vmem:[%s2482 + $0xc] sm:$0xf]
    %v2487 = vld [vmem:[%s2482 + $0x10] sm:$0xf]
    %v2488 = vld [vmem:[%s2482 + $0x14] sm:$0xf]
    %v2489 = vld [vmem:[%s2482 + $0x18] sm:$0xf]
    %v2490 = vld [vmem:[%s2482 + $0x1c] sm:$0xf]
    %v2491 = vld [vmem:[%s2482 + $0x20] sm:$0xf]
    %v2492 = vld [vmem:[%s2482 + $0x24] sm:$0xf]
    %v2493 = vld [vmem:[%s2482 + $0x28] sm:$0xf]
    %v2494 = vld [vmem:[%s2482 + $0x2c] sm:$0xf]
    %v2495 = vld [vmem:[%s2482 + $0x30] sm:$0xf]
    %v2496 = vld [vmem:[%s2482 + $0x34] sm:$0xf]
    %v2497 = vld [vmem:[%s2482 + $0x38] sm:$0xf]
    %v2498 = vld [vmem:[%s2482 + $0x3c] sm:$0xf]
    %v2499 = vlaneseq
    %v2500 = vshrl.u32 %v2499, 7
    %v2501 = vsub.s32 4, %v2500
    %v2502 = vrot.slane %v1801, %v2501
    %v2519 = vunpack.c.l.b16 %v2483
    %v2520 = vunpack.c.l.b16 %v2484
    %v2521 = vunpack.c.l.b16 %v2485
    %v2522 = vunpack.c.l.b16 %v2486
    %v2523 = vunpack.c.l.b16 %v2487
    %v2524 = vunpack.c.l.b16 %v2488
    %v2525 = vunpack.c.l.b16 %v2489
    %v2526 = vunpack.c.l.b16 %v2490
    %v2527 = vunpack.c.l.b16 %v2491
    %v2528 = vunpack.c.l.b16 %v2492
    %v2529 = vunpack.c.l.b16 %v2493
    %v2530 = vunpack.c.l.b16 %v2494
    %v2531 = vunpack.c.l.b16 %v2495
    %v2532 = vunpack.c.l.b16 %v2496
    %v2533 = vunpack.c.l.b16 %v2497
    %v2534 = vunpack.c.l.b16 %v2498
    %v2535 = vpack.c.b16 %v2520, %v2519
    %v2536 = vpack.c.b16 %v2522, %v2521
    %v2537 = vpack.c.b16 %v2524, %v2523
    %v2538 = vpack.c.b16 %v2526, %v2525
    %v2539 = vpack.c.b16 %v2528, %v2527
    %v2540 = vpack.c.b16 %v2530, %v2529
    %v2541 = vpack.c.b16 %v2532, %v2531
    %v2542 = vpack.c.b16 %v2534, %v2533
    %2551 = vmatprep.subr.bf16.mxu0 0
    %2552 = vmatpush1.bf16.msra.mxu0 %v2542
    %2553 = vmatprep.subr.bf16.mxu0 0
    %2554 = vmatpush1.bf16.msra.mxu0 %v2541
    %2555 = vmatprep.subr.bf16.mxu0 0
    %2556 = vmatpush1.bf16.msra.mxu0 %v2540
    %2557 = vmatprep.subr.bf16.mxu0 0
    %2558 = vmatpush1.bf16.msra.mxu0 %v2539
    %2559 = vmatprep.subr.bf16.mxu0 0
    %2560 = vmatpush1.bf16.msra.mxu0 %v2538
    %2561 = vmatprep.subr.bf16.mxu0 0
    %2562 = vmatpush1.bf16.msra.mxu0 %v2537
    %2563 = vmatprep.subr.bf16.mxu0 0
    %2564 = vmatpush1.bf16.msra.mxu0 %v2536
    %2565 = vmatprep.subr.bf16.mxu0 0
    %2566 = vmatpush1.bf16.msra.mxu0 %v2535
    %2567 = vmatprep.subr.bf16.mxu0 0
    %2568 = vmatpush2.bf16.msra.mxu0 0
    %2569 = vmatprep.subr.bf16.mxu0 0
    %2570 = vmatpush2.bf16.msra.mxu0 0
    %2571 = vmatprep.subr.bf16.mxu0 0
    %2572 = vmatpush2.bf16.msra.mxu0 0
    %2573 = vmatprep.subr.bf16.mxu0 0
    %2574 = vmatpush2.bf16.msra.mxu0 0
    %2575 = vmatprep.subr.bf16.mxu0 0
    %2576 = vmatpush2.bf16.msra.mxu0 0
    %2577 = vmatprep.subr.bf16.mxu0 0
    %2578 = vmatpush2.bf16.msra.mxu0 0
    %2579 = vmatprep.subr.bf16.mxu0 0
    %2580 = vmatpush2.bf16.msra.mxu0 0
    %2581 = vmatprep.subr.bf16.mxu0 0
    %2582 = vmatpush2.bf16.msra.mxu0 0
    %2583 = vmatprep.mubr.bf16.mxu0 0
    %2584 = vmatmul.mubr.bf16.gmra.mxu0 %v2480
    %v2585 = vpop.f32.mrf.mxu0
    %v2586 = vadd.f32 %v2502, %v2585
    %v2587 = vpop.f32.mrf.mxu0
    %v2588 = vpop.f32.mrf.mxu0
    %v2589 = vadd.f32 %v2502, %v2588
    %v2590 = vpop.f32.mrf.mxu0
    %2591 = vmatprep.mubr.bf16.mxu0 0
    %2592 = vmatmul.mubr.bf16.gmra.mxu0 %v2481
    %v2593 = vpop.f32.mrf.mxu0
    %v2594 = vadd.f32 %v2502, %v2593
    %v2595 = vpop.f32.mrf.mxu0
    %v2596 = vpop.f32.mrf.mxu0
    %v2597 = vadd.f32 %v2502, %v2596
    %v2598 = vpop.f32.mrf.mxu0
    %2599 = vdwg.mxu0
    %v2600 = vadd.f32 %v1796, %v2586
    %v2601 = vadd.f32 %v1797, %v2589
    %v2602 = vadd.f32 %v1798, %v2594
    %v2603 = vadd.f32 %v1799, %v2597
    %2604 = vadd.xlane.f32.xlu0 %v2600
    %v2605 = vpop.xlane.xlu0 %2604
    %2606 = vadd.xlane.f32.xlu0 %v2601
    %v2607 = vpop.xlane.xlu0 %2606
    %2608 = vadd.xlane.f32.xlu0 %v2602
    %v2609 = vpop.xlane.xlu0 %2608
    %2610 = vadd.xlane.f32.xlu0 %v2603
    %v2611 = vpop.xlane.xlu0 %2610
    %v2612 = vmul.f32 %v2605, %v119
    %v2613 = vmul.f32 %v2607, %v119
    %v2614 = vmul.f32 %v2609, %v119
    %v2615 = vmul.f32 %v2611, %v119
    %v2616 = vsub.f32 %v2600, %v2612
    %v2617 = vsub.f32 %v2601, %v2613
    %v2618 = vsub.f32 %v2602, %v2614
    %v2619 = vsub.f32 %v2603, %v2615
    %v2620 = vmul.f32 %v2616, %v2616
    %v2621 = vmul.f32 %v2617, %v2617
    %v2622 = vmul.f32 %v2618, %v2618
    %v2623 = vmul.f32 %v2619, %v2619
    %2624 = vadd.xlane.f32.xlu0 %v2620
    %v2625 = vpop.xlane.xlu0 %2624
    %2626 = vadd.xlane.f32.xlu0 %v2621
    %v2627 = vpop.xlane.xlu0 %2626
    %2628 = vadd.xlane.f32.xlu0 %v2622
    %v2629 = vpop.xlane.xlu0 %2628
    %2630 = vadd.xlane.f32.xlu0 %v2623
    %v2631 = vpop.xlane.xlu0 %2630
    %v2632 = vmul.f32 %v2625, %v119
    %v2633 = vmul.f32 %v2627, %v119
    %v2634 = vmul.f32 %v2629, %v119
    %v2635 = vmul.f32 %v2631, %v119
    %v2636 = vadd.f32 %v2632, 1e-05
    %v2637 = vadd.f32 %v2633, 1e-05
    %v2638 = vadd.f32 %v2634, 1e-05
    %v2639 = vadd.f32 %v2635, 1e-05
    %v2640 = vrsqrt.pop %v2636
    %v2641 = vrsqrt.pop %v2637
    %v2642 = vrsqrt.pop %v2638
    %v2643 = vrsqrt.pop %v2639
    %v2644 = vmul.f32 %v2616, %v2640
    %v2645 = vmul.f32 %v2617, %v2641
    %v2646 = vmul.f32 %v2618, %v2642
    %v2647 = vmul.f32 %v2619, %v2643
    %v2648 = vlaneseq
    %v2649 = vshrl.u32 %v2648, 7
    %v2650 = vsub.s32 2, %v2649
    %v2651 = vrot.slane %v1801, %v2650
    %v2652 = vmul.f32 %v2644, %v2651
    %v2653 = vmul.f32 %v2645, %v2651
    %v2654 = vmul.f32 %v2646, %v2651
    %v2655 = vmul.f32 %v2647, %v2651
    %v2656 = vlaneseq
    %v2657 = vshrl.u32 %v2656, 7
    %v2658 = vsub.s32 3, %v2657
    %v2659 = vrot.slane %v1801, %v2658
    %v2660 = vadd.f32 %v2652, %v2659
    %v2661 = vadd.f32 %v2653, %v2659
    %v2662 = vadd.f32 %v2654, %v2659
    %v2663 = vadd.f32 %v2655, %v2659
    %v2664 = vpack.c.bf16 %v2661, %v2660
    %v2665 = vpack.c.bf16 %v2663, %v2662
    %s2666 = scalar_lea.vmem [#allocation7], 256
    %v2667 = vld [vmem:[%s2666] sm:$0xff]
    %v2668 = vld [vmem:[%s2666 + $0x8] sm:$0xff]
    %v2669 = vld [vmem:[%s2666 + $0x10] sm:$0xff]
    %v2670 = vld [vmem:[%s2666 + $0x18] sm:$0xff]
    %v2671 = vld [vmem:[%s2666 + $0x20] sm:$0xff]
    %v2672 = vld [vmem:[%s2666 + $0x28] sm:$0xff]
    %v2673 = vld [vmem:[%s2666 + $0x30] sm:$0xff]
    %v2674 = vld [vmem:[%s2666 + $0x38] sm:$0xff]
    %v2675 = vld [vmem:[%s2666 + $0x40] sm:$0xff]
    %v2676 = vld [vmem:[%s2666 + $0x48] sm:$0xff]
    %v2677 = vld [vmem:[%s2666 + $0x50] sm:$0xff]
    %v2678 = vld [vmem:[%s2666 + $0x58] sm:$0xff]
    %v2679 = vld [vmem:[%s2666 + $0x60] sm:$0xff]
    %v2680 = vld [vmem:[%s2666 + $0x68] sm:$0xff]
    %v2681 = vld [vmem:[%s2666 + $0x70] sm:$0xff]
    %v2682 = vld [vmem:[%s2666 + $0x78] sm:$0xff]
    %v2683 = vld [vmem:[%s2666 + $0x80] sm:$0xff]
    %v2684 = vld [vmem:[%s2666 + $0x88] sm:$0xff]
    %v2685 = vld [vmem:[%s2666 + $0x90] sm:$0xff]
    %v2686 = vld [vmem:[%s2666 + $0x98] sm:$0xff]
    %v2687 = vld [vmem:[%s2666 + $0xa0] sm:$0xff]
    %v2688 = vld [vmem:[%s2666 + $0xa8] sm:$0xff]
    %v2689 = vld [vmem:[%s2666 + $0xb0] sm:$0xff]
    %v2690 = vld [vmem:[%s2666 + $0xb8] sm:$0xff]
    %v2691 = vld [vmem:[%s2666 + $0xc0] sm:$0xff]
    %v2692 = vld [vmem:[%s2666 + $0xc8] sm:$0xff]
    %v2693 = vld [vmem:[%s2666 + $0xd0] sm:$0xff]
    %v2694 = vld [vmem:[%s2666 + $0xd8] sm:$0xff]
    %v2695 = vld [vmem:[%s2666 + $0xe0] sm:$0xff]
    %v2696 = vld [vmem:[%s2666 + $0xe8] sm:$0xff]
    %v2697 = vld [vmem:[%s2666 + $0xf0] sm:$0xff]
    %v2698 = vld [vmem:[%s2666 + $0xf8] sm:$0xff]
    %v2699 = vlaneseq
    %v2700 = vshrl.u32 %v2699, 7
    %v2701 = vsub.s32 7, %v2700
    %v2702 = vrot.slane %v1801, %v2701
    %v2703 = vlaneseq
    %v2704 = vshrl.u32 %v2703, 7
    %v2705 = vsub.s32 7, %v2704
    %v2706 = vrot.slane %v1802, %v2705
    %v2707 = vlaneseq
    %v2708 = vshrl.u32 %v2707, 7
    %v2709 = vsub.s32 7, %v2708
    %v2710 = vrot.slane %v1803, %v2709
    %v2711 = vlaneseq
    %v2712 = vshrl.u32 %v2711, 7
    %v2713 = vsub.s32 7, %v2712
    %v2714 = vrot.slane %v1804, %v2713
    %v2747 = vunpack.c.l.b16 %v2667
    %v2748 = vunpack.c.h.b16 %v2667
    %v2749 = vunpack.c.l.b16 %v2668
    %v2750 = vunpack.c.h.b16 %v2668
    %v2751 = vunpack.c.l.b16 %v2669
    %v2752 = vunpack.c.h.b16 %v2669
    %v2753 = vunpack.c.l.b16 %v2670
    %v2754 = vunpack.c.h.b16 %v2670
    %v2755 = vunpack.c.l.b16 %v2671
    %v2756 = vunpack.c.h.b16 %v2671
    %v2757 = vunpack.c.l.b16 %v2672
    %v2758 = vunpack.c.h.b16 %v2672
    %v2759 = vunpack.c.l.b16 %v2673
    %v2760 = vunpack.c.h.b16 %v2673
    %v2761 = vunpack.c.l.b16 %v2674
    %v2762 = vunpack.c.h.b16 %v2674
    %v2763 = vunpack.c.l.b16 %v2675
    %v2764 = vunpack.c.h.b16 %v2675
    %v2765 = vunpack.c.l.b16 %v2676
    %v2766 = vunpack.c.h.b16 %v2676
    %v2767 = vunpack.c.l.b16 %v2677
    %v2768 = vunpack.c.h.b16 %v2677
    %v2769 = vunpack.c.l.b16 %v2678
    %v2770 = vunpack.c.h.b16 %v2678
    %v2771 = vunpack.c.l.b16 %v2679
    %v2772 = vunpack.c.h.b16 %v2679
    %v2773 = vunpack.c.l.b16 %v2680
    %v2774 = vunpack.c.h.b16 %v2680
    %v2775 = vunpack.c.l.b16 %v2681
    %v2776 = vunpack.c.h.b16 %v2681
    %v2777 = vunpack.c.l.b16 %v2682
    %v2778 = vunpack.c.h.b16 %v2682
    %v2779 = vunpack.c.l.b16 %v2683
    %v2780 = vunpack.c.h.b16 %v2683
    %v2781 = vunpack.c.l.b16 %v2684
    %v2782 = vunpack.c.h.b16 %v2684
    %v2783 = vunpack.c.l.b16 %v2685
    %v2784 = vunpack.c.h.b16 %v2685
    %v2785 = vunpack.c.l.b16 %v2686
    %v2786 = vunpack.c.h.b16 %v2686
    %v2787 = vunpack.c.l.b16 %v2687
    %v2788 = vunpack.c.h.b16 %v2687
    %v2789 = vunpack.c.l.b16 %v2688
    %v2790 = vunpack.c.h.b16 %v2688
    %v2791 = vunpack.c.l.b16 %v2689
    %v2792 = vunpack.c.h.b16 %v2689
    %v2793 = vunpack.c.l.b16 %v2690
    %v2794 = vunpack.c.h.b16 %v2690
    %v2795 = vunpack.c.l.b16 %v2691
    %v2796 = vunpack.c.h.b16 %v2691
    %v2797 = vunpack.c.l.b16 %v2692
    %v2798 = vunpack.c.h.b16 %v2692
    %v2799 = vunpack.c.l.b16 %v2693
    %v2800 = vunpack.c.h.b16 %v2693
    %v2801 = vunpack.c.l.b16 %v2694
    %v2802 = vunpack.c.h.b16 %v2694
    %v2803 = vunpack.c.l.b16 %v2695
    %v2804 = vunpack.c.h.b16 %v2695
    %v2805 = vunpack.c.l.b16 %v2696
    %v2806 = vunpack.c.h.b16 %v2696
    %v2807 = vunpack.c.l.b16 %v2697
    %v2808 = vunpack.c.h.b16 %v2697
    %v2809 = vunpack.c.l.b16 %v2698
    %v2810 = vunpack.c.h.b16 %v2698
    %v2811 = vpack.c.b16 %v2751, %v2747
    %v2812 = vpack.c.b16 %v2752, %v2748
    %v2813 = vpack.c.b16 %v2753, %v2749
    %v2814 = vpack.c.b16 %v2754, %v2750
    %v2815 = vpack.c.b16 %v2759, %v2755
    %v2816 = vpack.c.b16 %v2760, %v2756
    %v2817 = vpack.c.b16 %v2761, %v2757
    %v2818 = vpack.c.b16 %v2762, %v2758
    %v2819 = vpack.c.b16 %v2767, %v2763
    %v2820 = vpack.c.b16 %v2768, %v2764
    %v2821 = vpack.c.b16 %v2769, %v2765
    %v2822 = vpack.c.b16 %v2770, %v2766
    %v2823 = vpack.c.b16 %v2775, %v2771
    %v2824 = vpack.c.b16 %v2776, %v2772
    %v2825 = vpack.c.b16 %v2777, %v2773
    %v2826 = vpack.c.b16 %v2778, %v2774
    %v2827 = vpack.c.b16 %v2783, %v2779
    %v2828 = vpack.c.b16 %v2784, %v2780
    %v2829 = vpack.c.b16 %v2785, %v2781
    %v2830 = vpack.c.b16 %v2786, %v2782
    %v2831 = vpack.c.b16 %v2791, %v2787
    %v2832 = vpack.c.b16 %v2792, %v2788
    %v2833 = vpack.c.b16 %v2793, %v2789
    %v2834 = vpack.c.b16 %v2794, %v2790
    %v2835 = vpack.c.b16 %v2799, %v2795
    %v2836 = vpack.c.b16 %v2800, %v2796
    %v2837 = vpack.c.b16 %v2801, %v2797
    %v2838 = vpack.c.b16 %v2802, %v2798
    %v2839 = vpack.c.b16 %v2807, %v2803
    %v2840 = vpack.c.b16 %v2808, %v2804
    %v2841 = vpack.c.b16 %v2809, %v2805
    %v2842 = vpack.c.b16 %v2810, %v2806
    %2875 = vmatprep.subr.bf16.mxu0 %v2840
    %2876 = vmatpush1.bf16.msra.mxu0 %v2839
    %2877 = vmatprep.subr.bf16.mxu0 %v2836
    %2878 = vmatpush1.bf16.msra.mxu0 %v2835
    %2879 = vmatprep.subr.bf16.mxu0 %v2832
    %2880 = vmatpush1.bf16.msra.mxu0 %v2831
    %2881 = vmatprep.subr.bf16.mxu0 %v2828
    %2882 = vmatpush1.bf16.msra.mxu0 %v2827
    %2883 = vmatprep.subr.bf16.mxu0 %v2824
    %2884 = vmatpush1.bf16.msra.mxu0 %v2823
    %2885 = vmatprep.subr.bf16.mxu0 %v2820
    %2886 = vmatpush1.bf16.msra.mxu0 %v2819
    %2887 = vmatprep.subr.bf16.mxu0 %v2816
    %2888 = vmatpush1.bf16.msra.mxu0 %v2815
    %2889 = vmatprep.subr.bf16.mxu0 %v2812
    %2890 = vmatpush1.bf16.msra.mxu0 %v2811
    %2891 = vmatprep.subr.bf16.mxu0 0
    %2892 = vmatpush2.bf16.msra.mxu0 0
    %2893 = vmatprep.subr.bf16.mxu0 0
    %2894 = vmatpush2.bf16.msra.mxu0 0
    %2895 = vmatprep.subr.bf16.mxu0 0
    %2896 = vmatpush2.bf16.msra.mxu0 0
    %2897 = vmatprep.subr.bf16.mxu0 0
    %2898 = vmatpush2.bf16.msra.mxu0 0
    %2899 = vmatprep.subr.bf16.mxu0 0
    %2900 = vmatpush2.bf16.msra.mxu0 0
    %2901 = vmatprep.subr.bf16.mxu0 0
    %2902 = vmatpush2.bf16.msra.mxu0 0
    %2903 = vmatprep.subr.bf16.mxu0 0
    %2904 = vmatpush2.bf16.msra.mxu0 0
    %2905 = vmatprep.subr.bf16.mxu0 0
    %2906 = vmatpush2.bf16.msra.mxu0 0
    %2907 = vmatprep.mubr.bf16.mxu0 0
    %2908 = vmatmul.mubr.bf16.gmra.mxu0 %v2664
    %v2909 = vpop.f32.mrf.mxu0
    %v2910 = vadd.f32 %v2702, %v2909
    %v2911 = vpop.f32.mrf.mxu0
    %v2912 = vadd.f32 %v2706, %v2911
    %v2913 = vpop.f32.mrf.mxu0
    %v2914 = vadd.f32 %v2702, %v2913
    %v2915 = vpop.f32.mrf.mxu0
    %v2916 = vadd.f32 %v2706, %v2915
    %2917 = vmatprep.mubr.bf16.mxu0 0
    %2918 = vmatmul.mubr.bf16.gmra.mxu0 %v2665
    %v2919 = vpop.f32.mrf.mxu0
    %v2920 = vadd.f32 %v2702, %v2919
    %v2921 = vpop.f32.mrf.mxu0
    %v2922 = vadd.f32 %v2706, %v2921
    %v2923 = vpop.f32.mrf.mxu0
    %v2924 = vadd.f32 %v2702, %v2923
    %v2925 = vpop.f32.mrf.mxu0
    %v2926 = vadd.f32 %v2706, %v2925
    %2927 = vdwg.mxu0
    %2928 = vmatprep.subr.bf16.mxu0 %v2842
    %2929 = vmatpush1.bf16.msra.mxu0 %v2841
    %2930 = vmatprep.subr.bf16.mxu0 %v2838
    %2931 = vmatpush1.bf16.msra.mxu0 %v2837
    %2932 = vmatprep.subr.bf16.mxu0 %v2834
    %2933 = vmatpush1.bf16.msra.mxu0 %v2833
    %2934 = vmatprep.subr.bf16.mxu0 %v2830
    %2935 = vmatpush1.bf16.msra.mxu0 %v2829
    %2936 = vmatprep.subr.bf16.mxu0 %v2826
    %2937 = vmatpush1.bf16.msra.mxu0 %v2825
    %2938 = vmatprep.subr.bf16.mxu0 %v2822
    %2939 = vmatpush1.bf16.msra.mxu0 %v2821
    %2940 = vmatprep.subr.bf16.mxu0 %v2818
    %2941 = vmatpush1.bf16.msra.mxu0 %v2817
    %2942 = vmatprep.subr.bf16.mxu0 %v2814
    %2943 = vmatpush1.bf16.msra.mxu0 %v2813
    %2944 = vmatprep.subr.bf16.mxu0 0
    %2945 = vmatpush2.bf16.msra.mxu0 0
    %2946 = vmatprep.subr.bf16.mxu0 0
    %2947 = vmatpush2.bf16.msra.mxu0 0
    %2948 = vmatprep.subr.bf16.mxu0 0
    %2949 = vmatpush2.bf16.msra.mxu0 0
    %2950 = vmatprep.subr.bf16.mxu0 0
    %2951 = vmatpush2.bf16.msra.mxu0 0
    %2952 = vmatprep.subr.bf16.mxu0 0
    %2953 = vmatpush2.bf16.msra.mxu0 0
    %2954 = vmatprep.subr.bf16.mxu0 0
    %2955 = vmatpush2.bf16.msra.mxu0 0
    %2956 = vmatprep.subr.bf16.mxu0 0
    %2957 = vmatpush2.bf16.msra.mxu0 0
    %2958 = vmatprep.subr.bf16.mxu0 0
    %2959 = vmatpush2.bf16.msra.mxu0 0
    %2960 = vmatprep.mubr.bf16.mxu0 0
    %2961 = vmatmul.mubr.bf16.gmra.mxu0 %v2664
    %v2962 = vpop.f32.mrf.mxu0
    %v2963 = vadd.f32 %v2710, %v2962
    %v2964 = vpop.f32.mrf.mxu0
    %v2965 = vadd.f32 %v2714, %v2964
    %v2966 = vpop.f32.mrf.mxu0
    %v2967 = vadd.f32 %v2710, %v2966
    %v2968 = vpop.f32.mrf.mxu0
    %v2969 = vadd.f32 %v2714, %v2968
    %2970 = vmatprep.mubr.bf16.mxu0 0
    %2971 = vmatmul.mubr.bf16.gmra.mxu0 %v2665
    %v2972 = vpop.f32.mrf.mxu0
    %v2973 = vadd.f32 %v2710, %v2972
    %v2974 = vpop.f32.mrf.mxu0
    %v2975 = vadd.f32 %v2714, %v2974
    %v2976 = vpop.f32.mrf.mxu0
    %v2977 = vadd.f32 %v2710, %v2976
    %v2978 = vpop.f32.mrf.mxu0
    %v2979 = vadd.f32 %v2714, %v2978
    %2980 = vdwg.mxu0
    %v2981 = vmul.f32 %v2910, %v2910
    %v2982 = vmul.f32 %v2912, %v2912
    %v2983 = vmul.f32 %v2963, %v2963
    %v2984 = vmul.f32 %v2965, %v2965
    %v2985 = vmul.f32 %v2914, %v2914
    %v2986 = vmul.f32 %v2916, %v2916
    %v2987 = vmul.f32 %v2967, %v2967
    %v2988 = vmul.f32 %v2969, %v2969
    %v2989 = vmul.f32 %v2920, %v2920
    %v2990 = vmul.f32 %v2922, %v2922
    %v2991 = vmul.f32 %v2973, %v2973
    %v2992 = vmul.f32 %v2975, %v2975
    %v2993 = vmul.f32 %v2924, %v2924
    %v2994 = vmul.f32 %v2926, %v2926
    %v2995 = vmul.f32 %v2977, %v2977
    %v2996 = vmul.f32 %v2979, %v2979
    %v2997 = vmul.f32 %v2910, %v2981
    %v2998 = vmul.f32 %v2912, %v2982
    %v2999 = vmul.f32 %v2963, %v2983
    %v3000 = vmul.f32 %v2965, %v2984
    %v3001 = vmul.f32 %v2914, %v2985
    %v3002 = vmul.f32 %v2916, %v2986
    %v3003 = vmul.f32 %v2967, %v2987
    %v3004 = vmul.f32 %v2969, %v2988
    %v3005 = vmul.f32 %v2920, %v2989
    %v3006 = vmul.f32 %v2922, %v2990
    %v3007 = vmul.f32 %v2973, %v2991
    %v3008 = vmul.f32 %v2975, %v2992
    %v3009 = vmul.f32 %v2924, %v2993
    %v3010 = vmul.f32 %v2926, %v2994
    %v3011 = vmul.f32 %v2977, %v2995
    %v3012 = vmul.f32 %v2979, %v2996
    %v3013 = vmul.f32 %v2997, 0.044715
    %v3014 = vmul.f32 %v2998, 0.044715
    %v3015 = vmul.f32 %v2999, 0.044715
    %v3016 = vmul.f32 %v3000, 0.044715
    %v3017 = vmul.f32 %v3001, 0.044715
    %v3018 = vmul.f32 %v3002, 0.044715
    %v3019 = vmul.f32 %v3003, 0.044715
    %v3020 = vmul.f32 %v3004, 0.044715
    %v3021 = vmul.f32 %v3005, 0.044715
    %v3022 = vmul.f32 %v3006, 0.044715
    %v3023 = vmul.f32 %v3007, 0.044715
    %v3024 = vmul.f32 %v3008, 0.044715
    %v3025 = vmul.f32 %v3009, 0.044715
    %v3026 = vmul.f32 %v3010, 0.044715
    %v3027 = vmul.f32 %v3011, 0.044715
    %v3028 = vmul.f32 %v3012, 0.044715
    %v3029 = vadd.f32 %v2910, %v3013
    %v3030 = vadd.f32 %v2912, %v3014
    %v3031 = vadd.f32 %v2963, %v3015
    %v3032 = vadd.f32 %v2965, %v3016
    %v3033 = vadd.f32 %v2914, %v3017
    %v3034 = vadd.f32 %v2916, %v3018
    %v3035 = vadd.f32 %v2967, %v3019
    %v3036 = vadd.f32 %v2969, %v3020
    %v3037 = vadd.f32 %v2920, %v3021
    %v3038 = vadd.f32 %v2922, %v3022
    %v3039 = vadd.f32 %v2973, %v3023
    %v3040 = vadd.f32 %v2975, %v3024
    %v3041 = vadd.f32 %v2924, %v3025
    %v3042 = vadd.f32 %v2926, %v3026
    %v3043 = vadd.f32 %v2977, %v3027
    %v3044 = vadd.f32 %v2979, %v3028
    %v3045 = vmul.f32 %v3029, 0.7978846
    %v3046 = vmul.f32 %v3030, 0.7978846
    %v3047 = vmul.f32 %v3031, 0.7978846
    %v3048 = vmul.f32 %v3032, 0.7978846
    %v3049 = vmul.f32 %v3033, 0.7978846
    %v3050 = vmul.f32 %v3034, 0.7978846
    %v3051 = vmul.f32 %v3035, 0.7978846
    %v3052 = vmul.f32 %v3036, 0.7978846
    %v3053 = vmul.f32 %v3037, 0.7978846
    %v3054 = vmul.f32 %v3038, 0.7978846
    %v3055 = vmul.f32 %v3039, 0.7978846
    %v3056 = vmul.f32 %v3040, 0.7978846
    %v3057 = vmul.f32 %v3041, 0.7978846
    %v3058 = vmul.f32 %v3042, 0.7978846
    %v3059 = vmul.f32 %v3043, 0.7978846
    %v3060 = vmul.f32 %v3044, 0.7978846
    %v3061 = vtanh.pop %v3045
    %v3062 = vtanh.pop %v3046
    %v3063 = vtanh.pop %v3047
    %v3064 = vtanh.pop %v3048
    %v3065 = vtanh.pop %v3049
    %v3066 = vtanh.pop %v3050
    %v3067 = vtanh.pop %v3051
    %v3068 = vtanh.pop %v3052
    %v3069 = vtanh.pop %v3053
    %v3070 = vtanh.pop %v3054
    %v3071 = vtanh.pop %v3055
    %v3072 = vtanh.pop %v3056
    %v3073 = vtanh.pop %v3057
    %v3074 = vtanh.pop %v3058
    %v3075 = vtanh.pop %v3059
    %v3076 = vtanh.pop %v3060
    %v3077 = vadd.f32 %v3061, 1.0
    %v3078 = vadd.f32 %v3062, 1.0
    %v3079 = vadd.f32 %v3063, 1.0
    %v3080 = vadd.f32 %v3064, 1.0
    %v3081 = vadd.f32 %v3065, 1.0
    %v3082 = vadd.f32 %v3066, 1.0
    %v3083 = vadd.f32 %v3067, 1.0
    %v3084 = vadd.f32 %v3068, 1.0
    %v3085 = vadd.f32 %v3069, 1.0
    %v3086 = vadd.f32 %v3070, 1.0
    %v3087 = vadd.f32 %v3071, 1.0
    %v3088 = vadd.f32 %v3072, 1.0
    %v3089 = vadd.f32 %v3073, 1.0
    %v3090 = vadd.f32 %v3074, 1.0
    %v3091 = vadd.f32 %v3075, 1.0
    %v3092 = vadd.f32 %v3076, 1.0
    %v3093 = vmul.f32 %v3077, 0.5
    %v3094 = vmul.f32 %v3078, 0.5
    %v3095 = vmul.f32 %v3079, 0.5
    %v3096 = vmul.f32 %v3080, 0.5
    %v3097 = vmul.f32 %v3081, 0.5
    %v3098 = vmul.f32 %v3082, 0.5
    %v3099 = vmul.f32 %v3083, 0.5
    %v3100 = vmul.f32 %v3084, 0.5
    %v3101 = vmul.f32 %v3085, 0.5
    %v3102 = vmul.f32 %v3086, 0.5
    %v3103 = vmul.f32 %v3087, 0.5
    %v3104 = vmul.f32 %v3088, 0.5
    %v3105 = vmul.f32 %v3089, 0.5
    %v3106 = vmul.f32 %v3090, 0.5
    %v3107 = vmul.f32 %v3091, 0.5
    %v3108 = vmul.f32 %v3092, 0.5
    %v3109 = vmul.f32 %v2910, %v3093
    %v3110 = vmul.f32 %v2912, %v3094
    %v3111 = vmul.f32 %v2963, %v3095
    %v3112 = vmul.f32 %v2965, %v3096
    %v3113 = vmul.f32 %v2914, %v3097
    %v3114 = vmul.f32 %v2916, %v3098
    %v3115 = vmul.f32 %v2967, %v3099
    %v3116 = vmul.f32 %v2969, %v3100
    %v3117 = vmul.f32 %v2920, %v3101
    %v3118 = vmul.f32 %v2922, %v3102
    %v3119 = vmul.f32 %v2973, %v3103
    %v3120 = vmul.f32 %v2975, %v3104
    %v3121 = vmul.f32 %v2924, %v3105
    %v3122 = vmul.f32 %v2926, %v3106
    %v3123 = vmul.f32 %v2977, %v3107
    %v3124 = vmul.f32 %v2979, %v3108
    %v3125 = vpack.c.bf16 %v3113, %v3109
    %v3126 = vpack.c.bf16 %v3114, %v3110
    %v3127 = vpack.c.bf16 %v3115, %v3111
    %v3128 = vpack.c.bf16 %v3116, %v3112
    %v3129 = vpack.c.bf16 %v3121, %v3117
    %v3130 = vpack.c.bf16 %v3122, %v3118
    %v3131 = vpack.c.bf16 %v3123, %v3119
    %v3132 = vpack.c.bf16 %v3124, %v3120
    %s3133 = scalar_lea.vmem [#allocation9], 256
    %v3134 = vld [vmem:[%s3133] sm:$0xf]
    %v3135 = vld [vmem:[%s3133 + $0x4] sm:$0xf]
    %v3136 = vld [vmem:[%s3133 + $0x8] sm:$0xf]
    %v3137 = vld [vmem:[%s3133 + $0xc] sm:$0xf]
    %v3138 = vld [vmem:[%s3133 + $0x10] sm:$0xf]
    %v3139 = vld [vmem:[%s3133 + $0x14] sm:$0xf]
    %v3140 = vld [vmem:[%s3133 + $0x18] sm:$0xf]
    %v3141 = vld [vmem:[%s3133 + $0x1c] sm:$0xf]
    %v3142 = vld [vmem:[%s3133 + $0x20] sm:$0xf]
    %v3143 = vld [vmem:[%s3133 + $0x24] sm:$0xf]
    %v3144 = vld [vmem:[%s3133 + $0x28] sm:$0xf]
    %v3145 = vld [vmem:[%s3133 + $0x2c] sm:$0xf]
    %v3146 = vld [vmem:[%s3133 + $0x30] sm:$0xf]
    %v3147 = vld [vmem:[%s3133 + $0x34] sm:$0xf]
    %v3148 = vld [vmem:[%s3133 + $0x38] sm:$0xf]
    %v3149 = vld [vmem:[%s3133 + $0x3c] sm:$0xf]
    %v3150 = vld [vmem:[%s3133 + $0x40] sm:$0xf]
    %v3151 = vld [vmem:[%s3133 + $0x44] sm:$0xf]
    %v3152 = vld [vmem:[%s3133 + $0x48] sm:$0xf]
    %v3153 = vld [vmem:[%s3133 + $0x4c] sm:$0xf]
    %v3154 = vld [vmem:[%s3133 + $0x50] sm:$0xf]
    %v3155 = vld [vmem:[%s3133 + $0x54] sm:$0xf]
    %v3156 = vld [vmem:[%s3133 + $0x58] sm:$0xf]
    %v3157 = vld [vmem:[%s3133 + $0x5c] sm:$0xf]
    %v3158 = vld [vmem:[%s3133 + $0x60] sm:$0xf]
    %v3159 = vld [vmem:[%s3133 + $0x64] sm:$0xf]
    %v3160 = vld [vmem:[%s3133 + $0x68] sm:$0xf]
    %v3161 = vld [vmem:[%s3133 + $0x6c] sm:$0xf]
    %v3162 = vld [vmem:[%s3133 + $0x70] sm:$0xf]
    %v3163 = vld [vmem:[%s3133 + $0x74] sm:$0xf]
    %v3164 = vld [vmem:[%s3133 + $0x78] sm:$0xf]
    %v3165 = vld [vmem:[%s3133 + $0x7c] sm:$0xf]
    %v3166 = vld [vmem:[%s3133 + $0x80] sm:$0xf]
    %v3167 = vld [vmem:[%s3133 + $0x84] sm:$0xf]
    %v3168 = vld [vmem:[%s3133 + $0x88] sm:$0xf]
    %v3169 = vld [vmem:[%s3133 + $0x8c] sm:$0xf]
    %v3170 = vld [vmem:[%s3133 + $0x90] sm:$0xf]
    %v3171 = vld [vmem:[%s3133 + $0x94] sm:$0xf]
    %v3172 = vld [vmem:[%s3133 + $0x98] sm:$0xf]
    %v3173 = vld [vmem:[%s3133 + $0x9c] sm:$0xf]
    %v3174 = vld [vmem:[%s3133 + $0xa0] sm:$0xf]
    %v3175 = vld [vmem:[%s3133 + $0xa4] sm:$0xf]
    %v3176 = vld [vmem:[%s3133 + $0xa8] sm:$0xf]
    %v3177 = vld [vmem:[%s3133 + $0xac] sm:$0xf]
    %v3178 = vld [vmem:[%s3133 + $0xb0] sm:$0xf]
    %v3179 = vld [vmem:[%s3133 + $0xb4] sm:$0xf]
    %v3180 = vld [vmem:[%s3133 + $0xb8] sm:$0xf]
    %v3181 = vld [vmem:[%s3133 + $0xbc] sm:$0xf]
    %v3182 = vld [vmem:[%s3133 + $0xc0] sm:$0xf]
    %v3183 = vld [vmem:[%s3133 + $0xc4] sm:$0xf]
    %v3184 = vld [vmem:[%s3133 + $0xc8] sm:$0xf]
    %v3185 = vld [vmem:[%s3133 + $0xcc] sm:$0xf]
    %v3186 = vld [vmem:[%s3133 + $0xd0] sm:$0xf]
    %v3187 = vld [vmem:[%s3133 + $0xd4] sm:$0xf]
    %v3188 = vld [vmem:[%s3133 + $0xd8] sm:$0xf]
    %v3189 = vld [vmem:[%s3133 + $0xdc] sm:$0xf]
    %v3190 = vld [vmem:[%s3133 + $0xe0] sm:$0xf]
    %v3191 = vld [vmem:[%s3133 + $0xe4] sm:$0xf]
    %v3192 = vld [vmem:[%s3133 + $0xe8] sm:$0xf]
    %v3193 = vld [vmem:[%s3133 + $0xec] sm:$0xf]
    %v3194 = vld [vmem:[%s3133 + $0xf0] sm:$0xf]
    %v3195 = vld [vmem:[%s3133 + $0xf4] sm:$0xf]
    %v3196 = vld [vmem:[%s3133 + $0xf8] sm:$0xf]
    %v3197 = vld [vmem:[%s3133 + $0xfc] sm:$0xf]
    %v3198 = vlaneseq
    %v3199 = vshrl.u32 %v3198, 7
    %v3200 = vsub.s32 5, %v3199
    %v3201 = vrot.slane %v1801, %v3200
    %v3266 = vunpack.c.l.b16 %v3134
    %v3267 = vunpack.c.l.b16 %v3135
    %v3268 = vunpack.c.l.b16 %v3136
    %v3269 = vunpack.c.l.b16 %v3137
    %v3270 = vunpack.c.l.b16 %v3138
    %v3271 = vunpack.c.l.b16 %v3139
    %v3272 = vunpack.c.l.b16 %v3140
    %v3273 = vunpack.c.l.b16 %v3141
    %v3274 = vunpack.c.l.b16 %v3142
    %v3275 = vunpack.c.l.b16 %v3143
    %v3276 = vunpack.c.l.b16 %v3144
    %v3277 = vunpack.c.l.b16 %v3145
    %v3278 = vunpack.c.l.b16 %v3146
    %v3279 = vunpack.c.l.b16 %v3147
    %v3280 = vunpack.c.l.b16 %v3148
    %v3281 = vunpack.c.l.b16 %v3149
    %v3282 = vunpack.c.l.b16 %v3150
    %v3283 = vunpack.c.l.b16 %v3151
    %v3284 = vunpack.c.l.b16 %v3152
    %v3285 = vunpack.c.l.b16 %v3153
    %v3286 = vunpack.c.l.b16 %v3154
    %v3287 = vunpack.c.l.b16 %v3155
    %v3288 = vunpack.c.l.b16 %v3156
    %v3289 = vunpack.c.l.b16 %v3157
    %v3290 = vunpack.c.l.b16 %v3158
    %v3291 = vunpack.c.l.b16 %v3159
    %v3292 = vunpack.c.l.b16 %v3160
    %v3293 = vunpack.c.l.b16 %v3161
    %v3294 = vunpack.c.l.b16 %v3162
    %v3295 = vunpack.c.l.b16 %v3163
    %v3296 = vunpack.c.l.b16 %v3164
    %v3297 = vunpack.c.l.b16 %v3165
    %v3298 = vunpack.c.l.b16 %v3166
    %v3299 = vunpack.c.l.b16 %v3167
    %v3300 = vunpack.c.l.b16 %v3168
    %v3301 = vunpack.c.l.b16 %v3169
    %v3302 = vunpack.c.l.b16 %v3170
    %v3303 = vunpack.c.l.b16 %v3171
    %v3304 = vunpack.c.l.b16 %v3172
    %v3305 = vunpack.c.l.b16 %v3173
    %v3306 = vunpack.c.l.b16 %v3174
    %v3307 = vunpack.c.l.b16 %v3175
    %v3308 = vunpack.c.l.b16 %v3176
    %v3309 = vunpack.c.l.b16 %v3177
    %v3310 = vunpack.c.l.b16 %v3178
    %v3311 = vunpack.c.l.b16 %v3179
    %v3312 = vunpack.c.l.b16 %v3180
    %v3313 = vunpack.c.l.b16 %v3181
    %v3314 = vunpack.c.l.b16 %v3182
    %v3315 = vunpack.c.l.b16 %v3183
    %v3316 = vunpack.c.l.b16 %v3184
    %v3317 = vunpack.c.l.b16 %v3185
    %v3318 = vunpack.c.l.b16 %v3186
    %v3319 = vunpack.c.l.b16 %v3187
    %v3320 = vunpack.c.l.b16 %v3188
    %v3321 = vunpack.c.l.b16 %v3189
    %v3322 = vunpack.c.l.b16 %v3190
    %v3323 = vunpack.c.l.b16 %v3191
    %v3324 = vunpack.c.l.b16 %v3192
    %v3325 = vunpack.c.l.b16 %v3193
    %v3326 = vunpack.c.l.b16 %v3194
    %v3327 = vunpack.c.l.b16 %v3195
    %v3328 = vunpack.c.l.b16 %v3196
    %v3329 = vunpack.c.l.b16 %v3197
    %v3330 = vpack.c.b16 %v3267, %v3266
    %v3331 = vpack.c.b16 %v3269, %v3268
    %v3332 = vpack.c.b16 %v3271, %v3270
    %v3333 = vpack.c.b16 %v3273, %v3272
    %v3334 = vpack.c.b16 %v3275, %v3274
    %v3335 = vpack.c.b16 %v3277, %v3276
    %v3336 = vpack.c.b16 %v3279, %v3278
    %v3337 = vpack.c.b16 %v3281, %v3280
    %v3338 = vpack.c.b16 %v3283, %v3282
    %v3339 = vpack.c.b16 %v3285, %v3284
    %v3340 = vpack.c.b16 %v3287, %v3286
    %v3341 = vpack.c.b16 %v3289, %v3288
    %v3342 = vpack.c.b16 %v3291, %v3290
    %v3343 = vpack.c.b16 %v3293, %v3292
    %v3344 = vpack.c.b16 %v3295, %v3294
    %v3345 = vpack.c.b16 %v3297, %v3296
    %v3346 = vpack.c.b16 %v3299, %v3298
    %v3347 = vpack.c.b16 %v3301, %v3300
    %v3348 = vpack.c.b16 %v3303, %v3302
    %v3349 = vpack.c.b16 %v3305, %v3304
    %v3350 = vpack.c.b16 %v3307, %v3306
    %v3351 = vpack.c.b16 %v3309, %v3308
    %v3352 = vpack.c.b16 %v3311, %v3310
    %v3353 = vpack.c.b16 %v3313, %v3312
    %v3354 = vpack.c.b16 %v3315, %v3314
    %v3355 = vpack.c.b16 %v3317, %v3316
    %v3356 = vpack.c.b16 %v3319, %v3318
    %v3357 = vpack.c.b16 %v3321, %v3320
    %v3358 = vpack.c.b16 %v3323, %v3322
    %v3359 = vpack.c.b16 %v3325, %v3324
    %v3360 = vpack.c.b16 %v3327, %v3326
    %v3361 = vpack.c.b16 %v3329, %v3328
    %3394 = vmatprep.subr.bf16.mxu0 0
    %3395 = vmatpush1.bf16.msra.mxu0 %v3337
    %3396 = vmatprep.subr.bf16.mxu0 0
    %3397 = vmatpush1.bf16.msra.mxu0 %v3336
    %3398 = vmatprep.subr.bf16.mxu0 0
    %3399 = vmatpush1.bf16.msra.mxu0 %v3335
    %3400 = vmatprep.subr.bf16.mxu0 0
    %3401 = vmatpush1.bf16.msra.mxu0 %v3334
    %3402 = vmatprep.subr.bf16.mxu0 0
    %3403 = vmatpush1.bf16.msra.mxu0 %v3333
    %3404 = vmatprep.subr.bf16.mxu0 0
    %3405 = vmatpush1.bf16.msra.mxu0 %v3332
    %3406 = vmatprep.subr.bf16.mxu0 0
    %3407 = vmatpush1.bf16.msra.mxu0 %v3331
    %3408 = vmatprep.subr.bf16.mxu0 0
    %3409 = vmatpush1.bf16.msra.mxu0 %v3330
    %3410 = vmatprep.subr.bf16.mxu0 0
    %3411 = vmatpush2.bf16.msra.mxu0 %v3345
    %3412 = vmatprep.subr.bf16.mxu0 0
    %3413 = vmatpush2.bf16.msra.mxu0 %v3344
    %3414 = vmatprep.subr.bf16.mxu0 0
    %3415 = vmatpush2.bf16.msra.mxu0 %v3343
    %3416 = vmatprep.subr.bf16.mxu0 0
    %3417 = vmatpush2.bf16.msra.mxu0 %v3342
    %3418 = vmatprep.subr.bf16.mxu0 0
    %3419 = vmatpush2.bf16.msra.mxu0 %v3341
    %3420 = vmatprep.subr.bf16.mxu0 0
    %3421 = vmatpush2.bf16.msra.mxu0 %v3340
    %3422 = vmatprep.subr.bf16.mxu0 0
    %3423 = vmatpush2.bf16.msra.mxu0 %v3339
    %3424 = vmatprep.subr.bf16.mxu0 0
    %3425 = vmatpush2.bf16.msra.mxu0 %v3338
    %3426 = vmatprep.mubr.bf16.mxu0 %v3126
    %3427 = vmatmul.mubr.bf16.gmra.mxu0 %v3125
    %v3428 = vpop.f32.mrf.mxu0
    %v3429 = vadd.f32 %v3201, %v3428
    %v3430 = vpop.f32.mrf.mxu0
    %v3431 = vpop.f32.mrf.mxu0
    %v3432 = vadd.f32 %v3201, %v3431
    %v3433 = vpop.f32.mrf.mxu0
    %3434 = vmatprep.mubr.bf16.mxu0 %v3130
    %3435 = vmatmul.mubr.bf16.gmra.mxu0 %v3129
    %v3436 = vpop.f32.mrf.mxu0
    %v3437 = vadd.f32 %v3201, %v3436
    %v3438 = vpop.f32.mrf.mxu0
    %v3439 = vpop.f32.mrf.mxu0
    %v3440 = vadd.f32 %v3201, %v3439
    %v3441 = vpop.f32.mrf.mxu0
    %3442 = vdwg.mxu0
    %3443 = vmatprep.subr.bf16.mxu0 0
    %3444 = vmatpush1.bf16.msra.mxu0 %v3353
    %3445 = vmatprep.subr.bf16.mxu0 0
    %3446 = vmatpush1.bf16.msra.mxu0 %v3352
    %3447 = vmatprep.subr.bf16.mxu0 0
    %3448 = vmatpush1.bf16.msra.mxu0 %v3351
    %3449 = vmatprep.subr.bf16.mxu0 0
    %3450 = vmatpush1.bf16.msra.mxu0 %v3350
    %3451 = vmatprep.subr.bf16.mxu0 0
    %3452 = vmatpush1.bf16.msra.mxu0 %v3349
    %3453 = vmatprep.subr.bf16.mxu0 0
    %3454 = vmatpush1.bf16.msra.mxu0 %v3348
    %3455 = vmatprep.subr.bf16.mxu0 0
    %3456 = vmatpush1.bf16.msra.mxu0 %v3347
    %3457 = vmatprep.subr.bf16.mxu0 0
    %3458 = vmatpush1.bf16.msra.mxu0 %v3346
    %3459 = vmatprep.subr.bf16.mxu0 0
    %3460 = vmatpush2.bf16.msra.mxu0 %v3361
    %3461 = vmatprep.subr.bf16.mxu0 0
    %3462 = vmatpush2.bf16.msra.mxu0 %v3360
    %3463 = vmatprep.subr.bf16.mxu0 0
    %3464 = vmatpush2.bf16.msra.mxu0 %v3359
    %3465 = vmatprep.subr.bf16.mxu0 0
    %3466 = vmatpush2.bf16.msra.mxu0 %v3358
    %3467 = vmatprep.subr.bf16.mxu0 0
    %3468 = vmatpush2.bf16.msra.mxu0 %v3357
    %3469 = vmatprep.subr.bf16.mxu0 0
    %3470 = vmatpush2.bf16.msra.mxu0 %v3356
    %3471 = vmatprep.subr.bf16.mxu0 0
    %3472 = vmatpush2.bf16.msra.mxu0 %v3355
    %3473 = vmatprep.subr.bf16.mxu0 0
    %3474 = vmatpush2.bf16.msra.mxu0 %v3354
    %3475 = vmatprep.mubr.bf16.mxu0 %v3128
    %3476 = vmatmul.mubr.bf16.gmra.mxu0 %v3127
    %v3477 = vpop.f32.mrf.mxu0
    %v3478 = vadd.f32 %v3429, %v3477
    %v3479 = vpop.f32.mrf.mxu0
    %v3480 = vpop.f32.mrf.mxu0
    %v3481 = vadd.f32 %v3432, %v3480
    %v3482 = vpop.f32.mrf.mxu0
    %3483 = vmatprep.mubr.bf16.mxu0 %v3132
    %3484 = vmatmul.mubr.bf16.gmra.mxu0 %v3131
    %v3485 = vpop.f32.mrf.mxu0
    %v3486 = vadd.f32 %v3437, %v3485
    %v3487 = vpop.f32.mrf.mxu0
    %v3488 = vpop.f32.mrf.mxu0
    %v3489 = vadd.f32 %v3440, %v3488
    %v3490 = vpop.f32.mrf.mxu0
    %3491 = vdwg.mxu0
    %v3492 = vadd.f32 %v2600, %v3478
    %v3493 = vadd.f32 %v2601, %v3481
    %v3494 = vadd.f32 %v2602, %v3486
    %v3495 = vadd.f32 %v2603, %v3489
    %s3496 = scalar_lea.vmem [#allocation2], 64
    %v3497 = vld [vmem:[%s3496] sm:$0xff]
    %3498 = vadd.xlane.f32.xlu0 %v3492
    %v3499 = vpop.xlane.xlu0 %3498
    %3500 = vadd.xlane.f32.xlu0 %v3493
    %v3501 = vpop.xlane.xlu0 %3500
    %3502 = vadd.xlane.f32.xlu0 %v3494
    %v3503 = vpop.xlane.xlu0 %3502
    %3504 = vadd.xlane.f32.xlu0 %v3495
    %v3505 = vpop.xlane.xlu0 %3504
    %v3506 = vmul.f32 %v3499, %v119
    %v3507 = vmul.f32 %v3501, %v119
    %v3508 = vmul.f32 %v3503, %v119
    %v3509 = vmul.f32 %v3505, %v119
    %v3510 = vsub.f32 %v3492, %v3506
    %v3511 = vsub.f32 %v3493, %v3507
    %v3512 = vsub.f32 %v3494, %v3508
    %v3513 = vsub.f32 %v3495, %v3509
    %v3514 = vmul.f32 %v3510, %v3510
    %v3515 = vmul.f32 %v3511, %v3511
    %v3516 = vmul.f32 %v3512, %v3512
    %v3517 = vmul.f32 %v3513, %v3513
    %3518 = vadd.xlane.f32.xlu0 %v3514
    %v3519 = vpop.xlane.xlu0 %3518
    %3520 = vadd.xlane.f32.xlu0 %v3515
    %v3521 = vpop.xlane.xlu0 %3520
    %3522 = vadd.xlane.f32.xlu0 %v3516
    %v3523 = vpop.xlane.xlu0 %3522
    %3524 = vadd.xlane.f32.xlu0 %v3517
    %v3525 = vpop.xlane.xlu0 %3524
    %v3526 = vmul.f32 %v3519, %v119
    %v3527 = vmul.f32 %v3521, %v119
    %v3528 = vmul.f32 %v3523, %v119
    %v3529 = vmul.f32 %v3525, %v119
    %v3530 = vadd.f32 %v3526, 1e-05
    %v3531 = vadd.f32 %v3527, 1e-05
    %v3532 = vadd.f32 %v3528, 1e-05
    %v3533 = vadd.f32 %v3529, 1e-05
    %v3534 = vrsqrt.pop %v3530
    %v3535 = vrsqrt.pop %v3531
    %v3536 = vrsqrt.pop %v3532
    %v3537 = vrsqrt.pop %v3533
    %v3538 = vmul.f32 %v3510, %v3534
    %v3539 = vmul.f32 %v3511, %v3535
    %v3540 = vmul.f32 %v3512, %v3536
    %v3541 = vmul.f32 %v3513, %v3537
    %v3542 = vlaneseq
    %v3543 = vshrl.u32 %v3542, 7
    %v3544 = vsub.s32 0, %v3543
    %v3545 = vrot.slane %v3497, %v3544
    %v3546 = vmul.f32 %v3538, %v3545
    %v3547 = vmul.f32 %v3539, %v3545
    %v3548 = vmul.f32 %v3540, %v3545
    %v3549 = vmul.f32 %v3541, %v3545
    %v3550 = vlaneseq
    %v3551 = vshrl.u32 %v3550, 7
    %v3552 = vsub.s32 1, %v3551
    %v3553 = vrot.slane %v3497, %v3552
    %v3554 = vadd.f32 %v3546, %v3553
    %v3555 = vadd.f32 %v3547, %v3553
    %v3556 = vadd.f32 %v3548, %v3553
    %v3557 = vadd.f32 %v3549, %v3553
    %v3558 = vpack.c.bf16 %v3555, %v3554
    %v3559 = vpack.c.bf16 %v3557, %v3556
    %s3560 = scalar_lea.vmem [#allocation6], 128
    %v3561 = vld [vmem:[%s3560] sm:$0xf]
    %v3562 = vld [vmem:[%s3560 + $0x4] sm:$0xf]
    %v3563 = vld [vmem:[%s3560 + $0x8] sm:$0xf]
    %v3564 = vld [vmem:[%s3560 + $0xc] sm:$0xf]
    %v3565 = vld [vmem:[%s3560 + $0x10] sm:$0xf]
    %v3566 = vld [vmem:[%s3560 + $0x14] sm:$0xf]
    %v3567 = vld [vmem:[%s3560 + $0x18] sm:$0xf]
    %v3568 = vld [vmem:[%s3560 + $0x1c] sm:$0xf]
    %v3569 = vld [vmem:[%s3560 + $0x20] sm:$0xf]
    %v3570 = vld [vmem:[%s3560 + $0x24] sm:$0xf]
    %v3571 = vld [vmem:[%s3560 + $0x28] sm:$0xf]
    %v3572 = vld [vmem:[%s3560 + $0x2c] sm:$0xf]
    %v3573 = vld [vmem:[%s3560 + $0x30] sm:$0xf]
    %v3574 = vld [vmem:[%s3560 + $0x34] sm:$0xf]
    %v3575 = vld [vmem:[%s3560 + $0x38] sm:$0xf]
    %v3576 = vld [vmem:[%s3560 + $0x3c] sm:$0xf]
    %v3577 = vlaneseq
    %v3578 = vshrl.u32 %v3577, 7
    %v3579 = vsub.s32 2, %v3578
    %v3580 = vrot.slane %v3497, %v3579
    %v3597 = vunpack.c.l.b16 %v3561
    %v3598 = vunpack.c.l.b16 %v3562
    %v3599 = vunpack.c.l.b16 %v3563
    %v3600 = vunpack.c.l.b16 %v3564
    %v3601 = vunpack.c.l.b16 %v3565
    %v3602 = vunpack.c.l.b16 %v3566
    %v3603 = vunpack.c.l.b16 %v3567
    %v3604 = vunpack.c.l.b16 %v3568
    %v3605 = vunpack.c.l.b16 %v3569
    %v3606 = vunpack.c.l.b16 %v3570
    %v3607 = vunpack.c.l.b16 %v3571
    %v3608 = vunpack.c.l.b16 %v3572
    %v3609 = vunpack.c.l.b16 %v3573
    %v3610 = vunpack.c.l.b16 %v3574
    %v3611 = vunpack.c.l.b16 %v3575
    %v3612 = vunpack.c.l.b16 %v3576
    %v3613 = vpack.c.b16 %v3598, %v3597
    %v3614 = vpack.c.b16 %v3600, %v3599
    %v3615 = vpack.c.b16 %v3602, %v3601
    %v3616 = vpack.c.b16 %v3604, %v3603
    %v3617 = vpack.c.b16 %v3606, %v3605
    %v3618 = vpack.c.b16 %v3608, %v3607
    %v3619 = vpack.c.b16 %v3610, %v3609
    %v3620 = vpack.c.b16 %v3612, %v3611
    %3629 = vmatprep.subr.bf16.mxu0 0
    %3630 = vmatpush1.bf16.msra.mxu0 %v3620
    %3631 = vmatprep.subr.bf16.mxu0 0
    %3632 = vmatpush1.bf16.msra.mxu0 %v3619
    %3633 = vmatprep.subr.bf16.mxu0 0
    %3634 = vmatpush1.bf16.msra.mxu0 %v3618
    %3635 = vmatprep.subr.bf16.mxu0 0
    %3636 = vmatpush1.bf16.msra.mxu0 %v3617
    %3637 = vmatprep.subr.bf16.mxu0 0
    %3638 = vmatpush1.bf16.msra.mxu0 %v3616
    %3639 = vmatprep.subr.bf16.mxu0 0
    %3640 = vmatpush1.bf16.msra.mxu0 %v3615
    %3641 = vmatprep.subr.bf16.mxu0 0
    %3642 = vmatpush1.bf16.msra.mxu0 %v3614
    %3643 = vmatprep.subr.bf16.mxu0 0
    %3644 = vmatpush1.bf16.msra.mxu0 %v3613
    %3645 = vmatprep.subr.bf16.mxu0 0
    %3646 = vmatpush2.bf16.msra.mxu0 0
    %3647 = vmatprep.subr.bf16.mxu0 0
    %3648 = vmatpush2.bf16.msra.mxu0 0
    %3649 = vmatprep.subr.bf16.mxu0 0
    %3650 = vmatpush2.bf16.msra.mxu0 0
    %3651 = vmatprep.subr.bf16.mxu0 0
    %3652 = vmatpush2.bf16.msra.mxu0 0
    %3653 = vmatprep.subr.bf16.mxu0 0
    %3654 = vmatpush2.bf16.msra.mxu0 0
    %3655 = vmatprep.subr.bf16.mxu0 0
    %3656 = vmatpush2.bf16.msra.mxu0 0
    %3657 = vmatprep.subr.bf16.mxu0 0
    %3658 = vmatpush2.bf16.msra.mxu0 0
    %3659 = vmatprep.subr.bf16.mxu0 0
    %3660 = vmatpush2.bf16.msra.mxu0 0
    %3661 = vmatprep.mubr.bf16.mxu0 0
    %3662 = vmatmul.mubr.bf16.gmra.mxu0 %v3558
    %v3663 = vpop.f32.mrf.mxu0
    %v3664 = vadd.f32 %v3580, %v3663
    %v3665 = vpop.f32.mrf.mxu0
    %v3666 = vpop.f32.mrf.mxu0
    %v3667 = vadd.f32 %v3580, %v3666
    %v3668 = vpop.f32.mrf.mxu0
    %3669 = vmatprep.mubr.bf16.mxu0 0
    %3670 = vmatmul.mubr.bf16.gmra.mxu0 %v3559
    %v3671 = vpop.f32.mrf.mxu0
    %v3672 = vadd.f32 %v3580, %v3671
    %v3673 = vpop.f32.mrf.mxu0
    %v3674 = vpop.f32.mrf.mxu0
    %v3675 = vadd.f32 %v3580, %v3674
    %v3676 = vpop.f32.mrf.mxu0
    %3677 = vdwg.mxu0
    %3678 = vst [vmem:[%s7] sm:$0xff] %v3664
    %3679 = vst [vmem:[%s7 + $0x8] sm:$0xff] %v3667
    %3680 = vst [vmem:[%s7 + $0x10] sm:$0xff] %v3672
    %3681 = vst [vmem:[%s7 + $0x18] sm:$0xff] %v3675
    // Predicated region
    $region50: #{paraphrase_gpt_forward.1} parent=1 // pred_check
      _
    $region51: #{paraphrase_gpt_forward.1} parent=1 // pred_check_branch
      %3683 = sbr.rel (0) target = $region53
    $region52: #{paraphrase_gpt_forward.1} parent=1 // pred_region
      _
    $region53: #{paraphrase_gpt_forward.1} parent=1 // pred_fallthru
      _
    // Predicated region
    $region54: #{paraphrase_gpt_forward.1} parent=1 // pred_check
      _
    $region55: #{paraphrase_gpt_forward.1} parent=1 // pred_check_branch
      %3685 = sbr.rel (0) target = $region57
    $region56: #{paraphrase_gpt_forward.1} parent=1 // pred_region
      _
    $region57: #{paraphrase_gpt_forward.1} parent=1 // pred_fallthru
      _
    %3686 = vsyncpa [#allocation3], 1
    %3687 = vsyncpa [#allocation5], 1
    %3688 = vsyncpa [#allocation8], 1

</llo_original>
